<compile_context>
chip_gen: v6e
topology: v6e:2x2x1
jax: 0.10.0
libtpu: 0.0.40
codegen_flags: <defaults>
</compile_context>

<pallas_src>
import jax
import jax.numpy as jnp
from jax import lax
from jax.experimental import pallas as pl
from jax.experimental.pallas import tpu as pltpu

BN_EPS = 1e-5
LANE = 128

_CompilerParams = getattr(pltpu, "CompilerParams", None) or getattr(
    pltpu, "TPUCompilerParams")


def _round_up(x, m):
    return (x + m - 1) // m * m


def _vmem_cap_bytes():
    try:
        return int(pltpu.get_tpu_info().vmem_capacity_bytes)
    except Exception:
        return 64 * 1024 * 1024          # smallest per-core VMEM (v7x)


def _cparams(sem, need_bytes=0):
    limit = max(32 * 1024 * 1024, int(need_bytes * 1.3))
    limit = int(min(limit, int(_vmem_cap_bytes() * 0.9)))
    return _CompilerParams(dimension_semantics=sem, vmem_limit_bytes=limit)


def _choose_th(ho, wo, target_rows=2048):
    """Largest divisor of Ho giving ~target_rows output rows per block."""
    th = max(1, min(ho, target_rows // max(wo, 1)))
    while ho % th:
        th -= 1
    return th


# ------------------------------ Pallas kernels ------------------------------

def _block1_kernel(x_ref, w_ref, ba_ref, h1_ref, pool_ref, st_ref):
    """2x2/stride-2 conv as GEMM + PReLU + BN partials, fused with MaxPool2d(2).

    x_ref:  (1, TH, 2, Wo, 2*Cin) f32   (free reshape of the NHWC input)
    w_ref:  (2, 2*Cin, C)               (kh-major, (kw, ci) rows)
    ba_ref: (2, C)  row0 = conv bias, row1 = PReLU alpha (broadcast)
    """
    th, wo, cin2 = x_ref.shape[1], x_ref.shape[3], x_ref.shape[4]
    cin = cin2 // 2
    c = h1_ref.shape[3]
    cdt = w_ref.dtype
    xb = x_ref[0]                                   # (TH, 2, Wo, 2Cin)
    top = xb[:, 0].reshape(th * wo, cin2)           # even input rows, col pairs packed
    bot = xb[:, 1].reshape(th * wo, cin2)           # odd input rows
    acc = jnp.dot(top.astype(cdt), w_ref[0], preferred_element_type=jnp.float32)
    acc = acc + jnp.dot(bot.astype(cdt), w_ref[1], preferred_element_type=jnp.float32)
    acc = acc + ba_ref[0]
    act = jnp.where(acc >= 0, acc, ba_ref[1] * acc)             # PReLU, f32
    h1_ref[0] = act.reshape(th, wo, c).astype(h1_ref.dtype)     # lane-dense store
    pooled = jnp.maximum(jnp.maximum(top[:, :cin], top[:, cin:]),
                         jnp.maximum(bot[:, :cin], bot[:, cin:]))   # 2x2 max (VPU)
    pool_ref[0] = pooled.reshape(th, wo, cin).astype(pool_ref.dtype)
    ssum = jnp.sum(act, axis=0, keepdims=True)
    ssq = jnp.sum(act * act, axis=0, keepdims=True)
    st_ref[0, 0] = jnp.concatenate(
        [ssum, ssq, jnp.zeros((6, c), jnp.float32)], axis=0)


def _block2_kernel(x_ref, ss_ref, w_ref, ba_ref, h2_ref, st_ref, pad_ref):
    """BN1 prologue + 3x3/pad=1 conv (9 contiguous-slice GEMMs) + PReLU + stats.

    The zero-padded image is stored row-major in the 2-D scratch `pad_ref`
    ((H+2)*(W+2)+2 rows).  Output row a = h*(W+2)+w of the GEMM accumulator
    needs padded rows a + di*(W+2) + dj  -> every tap is a contiguous slice, so
    there is no per-tap relayout; columns w >= W of each row group are junk and
    are sliced away before the store / stats.
    """
    h, w, c = x_ref.shape[1], x_ref.shape[2], x_ref.shape[3]
    wp = w + 2
    cdt = pad_ref.dtype
    xn = (x_ref[0].astype(jnp.float32) * ss_ref[0] + ss_ref[1]).astype(cdt)
    zcol = jnp.zeros((h, 1, c), cdt)
    xp = jnp.concatenate([zcol, xn, zcol], axis=1)          # (H, W+2, C)
    # zero only the halo; interior written exactly once
    pad_ref[0:wp, :] = jnp.zeros((wp, c), cdt)
    pad_ref[(h + 1) * wp:(h + 2) * wp + 2, :] = jnp.zeros((wp + 2, c), cdt)
    pad_ref[wp:(h + 1) * wp, :] = xp.reshape(h * wp, c)

    l = h * wp
    acc = jnp.zeros((l, c), jnp.float32)
    for t in range(9):                                      # static, unrolled
        off = (t // 3) * wp + (t % 3)
        acc = acc + jnp.dot(pad_ref[off:off + l, :], w_ref[t],
                            preferred_element_type=jnp.float32)
    acc = acc + ba_ref[0]
    act = jnp.where(acc >= 0, acc, ba_ref[1] * acc)
    act = act.reshape(h, wp, c)[:, :w, :]                   # drop junk columns
    h2_ref[0] = act.astype(h2_ref.dtype)
    ssum = jnp.sum(act, axis=(0, 1))[None, :]
    ssq = jnp.sum(act * act, axis=(0, 1))[None, :]
    st_ref[0, 0] = jnp.concatenate(
        [ssum, ssq, jnp.zeros((6, c), jnp.float32)], axis=0)


def _block3_kernel(x_ref, ss_ref, w_ref, ba_ref, h3_ref, st_ref):
    """BN2 prologue + 1x1 conv as GEMM + PReLU + BN partials."""
    th, wo, c = x_ref.shape[1], x_ref.shape[2], x_ref.shape[3]
    cdt = w_ref.dtype
    xn = (x_ref[0].astype(jnp.float32) * ss_ref[0] + ss_ref[1]).astype(cdt)
    acc = jnp.dot(xn.reshape(th * wo, c), w_ref[...],
                  preferred_element_type=jnp.float32)
    acc = acc + ba_ref[0]
    act = jnp.where(acc >= 0, acc, ba_ref[1] * acc)
    h3_ref[0] = act.reshape(th, wo, c).astype(h3_ref.dtype)
    ssum = jnp.sum(act, axis=0, keepdims=True)
    ssq = jnp.sum(act * act, axis=0, keepdims=True)
    st_ref[0, 0] = jnp.concatenate(
        [ssum, ssq, jnp.zeros((6, c), jnp.float32)], axis=0)


def _finalize_kernel(h3_ref, ss_ref, pool_ref, wsc_ref, bsc_ref, out_ref):
    """BN3 of main path + (pooled -> 1x1 conv) shortcut + residual add."""
    th, wo = h3_ref.shape[1], h3_ref.shape[2]
    cin = pool_ref.shape[3]
    co = out_ref.shape[3]
    main = h3_ref[0].astype(jnp.float32) * ss_ref[0] + ss_ref[1]    # (TH, Wo, Cpad)
    p2 = pool_ref[0].astype(wsc_ref.dtype).reshape(th * wo, cin)
    sc = jnp.dot(p2, wsc_ref[...], preferred_element_type=jnp.float32)
    out_ref[0] = (main[:, :, :co] + sc.reshape(th, wo, co)
                  + bsc_ref[0]).astype(out_ref.dtype)


# ------------------------------ Pallas wrappers ------------------------------

def _block1_call(x5, w1, ba1, th):
    n, ho, wo, cin2 = x5.shape[0], x5.shape[1], x5.shape[3], x5.shape[4]
    cin = cin2 // 2
    c = w1.shape[2]
    cdt = w1.dtype
    ns = ho // th
    isz = cdt.itemsize
    need = (2 * (2 * th * wo * cin2 * 4 + th * wo * c * isz + th * wo * cin * isz)
            + w1.size * isz + ba1.size * 4 + 2 * 8 * c * 4)
    return pl.pallas_call(
        _block1_kernel,
        grid=(n, ns),
        out_shape=(jax.ShapeDtypeStruct((n, ho, wo, c), cdt),
                   jax.ShapeDtypeStruct((n, ho, wo, cin), cdt),
                   jax.ShapeDtypeStruct((n, ns, 8, c), jnp.float32)),
        in_specs=[pl.BlockSpec((1, th, 2, wo, cin2), lambda i, r: (i, r, 0, 0, 0)),
                  pl.BlockSpec((2, cin2, c), lambda i, r: (0, 0, 0)),
                  pl.BlockSpec((2, c), lambda i, r: (0, 0))],
        out_specs=(pl.BlockSpec((1, th, wo, c), lambda i, r: (i, r, 0, 0)),
                   pl.BlockSpec((1, th, wo, cin), lambda i, r: (i, r, 0, 0)),
                   pl.BlockSpec((1, 1, 8, c), lambda i, r: (i, r, 0, 0))),
        compiler_params=_cparams(("parallel", "parallel"), need),
    )(x5, w1, ba1)


def _block2_call(h1, ss1, w2, ba2):
    n, h, w, c = h1.shape
    cdt = w2.dtype
    isz = cdt.itemsize
    padr = (h + 2) * (w + 2) + 2
    l = h * (w + 2)
    img = h * w * c * isz
    need = 4 * img + padr * c * isz + l * c * 4 + w2.size * isz + 6 * c * 4
    use_single = need > 24 * 1024 * 1024 and hasattr(pl, "Buffered")
    bkw = {"pipeline_mode": pl.Buffered(1)} if use_single else {}
    return pl.pallas_call(
        _block2_kernel,
        grid=(n,),
        out_shape=(jax.ShapeDtypeStruct((n, h, w, c), cdt),
                   jax.ShapeDtypeStruct((n, 1, 8, c), jnp.float32)),
        in_specs=[pl.BlockSpec((1, h, w, c), lambda i: (i, 0, 0, 0), **bkw),
                  pl.BlockSpec((2, c), lambda i: (0, 0)),
                  pl.BlockSpec((9, c, c), lambda i: (0, 0, 0)),
                  pl.BlockSpec((2, c), lambda i: (0, 0))],
        out_specs=(pl.BlockSpec((1, h, w, c), lambda i: (i, 0, 0, 0), **bkw),
                   pl.BlockSpec((1, 1, 8, c), lambda i: (i, 0, 0, 0))),
        scratch_shapes=[pltpu.VMEM((padr, c), cdt)],
        compiler_params=_cparams(("parallel",), need),
    )(h1, ss1, w2, ba2)


def _block3_call(h2, ss2, w3, ba3, th):
    n, ho, wo, c = h2.shape
    cdt = w3.dtype
    ns = ho // th
    isz = cdt.itemsize
    need = 4 * th * wo * c * isz + w3.size * isz + th * wo * c * 4 + 2 * 8 * c * 4
    return pl.pallas_call(
        _block3_kernel,
        grid=(n, ns),
        out_shape=(jax.ShapeDtypeStruct((n, ho, wo, c), cdt),
                   jax.ShapeDtypeStruct((n, ns, 8, c), jnp.float32)),
        in_specs=[pl.BlockSpec((1, th, wo, c), lambda i, r: (i, r, 0, 0)),
                  pl.BlockSpec((2, c), lambda i, r: (0, 0)),
                  pl.BlockSpec((c, c), lambda i, r: (0, 0)),
                  pl.BlockSpec((2, c), lambda i, r: (0, 0))],
        out_specs=(pl.BlockSpec((1, th, wo, c), lambda i, r: (i, r, 0, 0)),
                   pl.BlockSpec((1, 1, 8, c), lambda i, r: (i, r, 0, 0))),
        compiler_params=_cparams(("parallel", "parallel"), need),
    )(h2, ss2, w3, ba3)


def _finalize_call(h3, ss3, pooled, wsc, bsc, th):
    n, ho, wo, c = h3.shape
    cin = pooled.shape[3]
    co = wsc.shape[1]
    ns = ho // th
    need = 2 * th * wo * (c * h3.dtype.itemsize + cin * pooled.dtype.itemsize
                          + co * 4) + wsc.size * 4 + th * wo * c * 4
    return pl.pallas_call(
        _finalize_kernel,
        grid=(n, ns),
        out_shape=jax.ShapeDtypeStruct((n, ho, wo, co), jnp.float32),
        in_specs=[pl.BlockSpec((1, th, wo, c), lambda i, r: (i, r, 0, 0)),
                  pl.BlockSpec((2, c), lambda i, r: (0, 0)),
                  pl.BlockSpec((1, th, wo, cin), lambda i, r: (i, r, 0, 0)),
                  pl.BlockSpec((cin, co), lambda i, r: (0, 0)),
                  pl.BlockSpec((1, co), lambda i, r: (0, 0))],
        out_specs=pl.BlockSpec((1, th, wo, co), lambda i, r: (i, r, 0, 0)),
        compiler_params=_cparams(("parallel", "parallel"), need),
    )(h3, ss3, pooled, wsc, bsc)


# --------------------------------- JAX glue ----------------------------------

def _bn_scale_shift(stats, count, gamma, beta):
    """Reduce per-tile partials -> (2, C) = [scale, shift] for train-mode BN."""
    s = stats[:, :, 0, :].sum(axis=(0, 1))
    q = stats[:, :, 1, :].sum(axis=(0, 1))
    mean = s / count
    var = jnp.maximum(q / count - mean * mean, 0.0)   # biased var (PyTorch train norm)
    scale = gamma * jax.lax.rsqrt(var + BN_EPS)
    shift = beta - mean * scale
    return jnp.stack([scale, shift], axis=0)


def init_params(key, input_c, output_c):
    ks = jax.random.split(key, 8)

    def conv_w(k, co, ci, kh, kw):
        fan_in = ci * kh * kw
        return jax.random.normal(k, (co, ci, kh, kw), jnp.float32) / jnp.sqrt(fan_in)

    p = {
        "w1": conv_w(ks[0], output_c, input_c, 2, 2),
        "b1": 0.01 * jax.random.normal(ks[1], (output_c,), jnp.float32),
        "w2": conv_w(ks[2], output_c, output_c, 3, 3),
        "b2": 0.01 * jax.random.normal(ks[3], (output_c,), jnp.float32),
        "w3": conv_w(ks[4], output_c, output_c, 1, 1),
        "b3": 0.01 * jax.random.normal(ks[5], (output_c,), jnp.float32),
        "w_sc": conv_w(ks[6], output_c, input_c, 1, 1),
        "b_sc": 0.01 * jax.random.normal(ks[7], (output_c,), jnp.float32),
    }
    for i in (1, 2, 3):
        p[f"prelu{i}"] = jnp.full((1,), 0.25, jnp.float32)   # nn.PReLU() default
        p[f"gamma{i}"] = jnp.ones((output_c,), jnp.float32)
        p[f"beta{i}"] = jnp.zeros((output_c,), jnp.float32)
    return p


def prepare_params(p, compute_dtype=jnp.bfloat16):
    """PyTorch-layout params -> padded GEMM layouts (outside the hot path)."""
    cout, cin = p["w1"].shape[0], p["w1"].shape[1]
    cpad = _round_up(cout, LANE)
    cdt = compute_dtype

    def pad_c(v):
        return jnp.pad(v, (0, cpad - cout))

    def ba(bias, alpha):
        return jnp.stack([pad_c(bias),
                          jnp.broadcast_to(alpha[0], (cpad,))], axis=0).astype(jnp.float32)

    gp = {}
    # block1: (Cout,Cin,2,2) -> (kh, kw, ci, co) -> (2, 2*Cin, Cpad)
    w1 = p["w1"].transpose(2, 3, 1, 0).reshape(2, 2 * cin, cout)
    gp["w1"] = jnp.pad(w1, ((0, 0), (0, 0), (0, cpad - cout))).astype(cdt)
    gp["ba1"] = ba(p["b1"], p["prelu1"])
    # block2: (Cout,Cout,3,3) -> (9, ci, co), t = 3*di + dj
    w2 = p["w2"].transpose(2, 3, 1, 0).reshape(9, cout, cout)
    gp["w2"] = jnp.pad(w2, ((0, 0), (0, cpad - cout), (0, cpad - cout))).astype(cdt)
    gp["ba2"] = ba(p["b2"], p["prelu2"])
    # block3: 1x1 conv -> (ci, co)
    gp["w3"] = jnp.pad(p["w3"][:, :, 0, 0].T,
                       ((0, cpad - cout), (0, cpad - cout))).astype(cdt)
    gp["ba3"] = ba(p["b3"], p["prelu3"])
    # shortcut 1x1 conv: unpadded (Cin, Cout)
    gp["wsc"] = p["w_sc"][:, :, 0, 0].T.astype(cdt)
    gp["bsc"] = p["b_sc"][None, :].astype(jnp.float32)
    for i in (1, 2, 3):
        gp[f"gamma{i}"] = pad_c(p[f"gamma{i}"])     # padded channels -> scale/shift 0
        gp[f"beta{i}"] = pad_c(p[f"beta{i}"])
    return gp


def bottleneck_downsampling(x_nchw, gp):
    n, cin, h, w = x_nchw.shape
    if h % 2 or w % 2:
        raise ValueError("downsampling Bottleneck requires even H and W")
    ho, wo = h // 2, w // 2
    m = float(n * ho * wo)
    th = _choose_th(ho, wo)

    # single module-boundary transpose; the 5-D window view is a free reshape
    x_nhwc = jnp.transpose(x_nchw, (0, 2, 3, 1))
    x5 = x_nhwc.reshape(n, ho, 2, wo, 2 * cin)

    # block1 (+ fused 2x2 maxpool of the shortcut path)
    h1, pooled, st1 = _block1_call(x5, gp["w1"], gp["ba1"], th)
    ss1 = _bn_scale_shift(st1, m, gp["gamma1"], gp["beta1"])

    # block2 (3x3, pad=1), BN1 fused into the prologue
    h2, st2 = _block2_call(h1, ss1, gp["w2"], gp["ba2"])
    ss2 = _bn_scale_shift(st2, m, gp["gamma2"], gp["beta2"])

    # block3 (1x1), BN2 fused into the prologue
    h3, st3 = _block3_call(h2, ss2, gp["w3"], gp["ba3"], th)
    ss3 = _bn_scale_shift(st3, m, gp["gamma3"], gp["beta3"])

    # dropout (p=0) is identity; BN3 + shortcut conv + residual add fused here
    out_nhwc = _finalize_call(h3, ss3, pooled, gp["wsc"], gp["bsc"], th)
    return jnp.transpose(out_nhwc, (0, 3, 1, 2))


# ----------------------------- pure-JAX reference -----------------------------

def _reference_forward(x, p):
    def conv(x_, w_, b_, stride=1, pad=0):
        y = lax.conv_general_dilated(
            x_, w_, (stride, stride), [(pad, pad), (pad, pad)],
            dimension_numbers=("NCHW", "OIHW", "NCHW"))
        return y + b_[None, :, None, None]

    def prelu(x_, a):
        return jnp.where(x_ >= 0, x_, a * x_)

    def bn(x_, g, b_):
        mean = x_.mean(axis=(0, 2, 3), keepdims=True)
        var = x_.var(axis=(0, 2, 3), keepdims=True)
        xh = (x_ - mean) * jax.lax.rsqrt(var + BN_EPS)
        return xh * g[None, :, None, None] + b_[None, :, None, None]

    h = bn(prelu(conv(x, p["w1"], p["b1"], stride=2), p["prelu1"][0]),
           p["gamma1"], p["beta1"])
    h = bn(prelu(conv(h, p["w2"], p["b2"], pad=1), p["prelu2"][0]),
           p["gamma2"], p["beta2"])
    h = bn(prelu(conv(h, p["w3"], p["b3"]), p["prelu3"][0]),
           p["gamma3"], p["beta3"])
    y = lax.reduce_window(x, -jnp.inf, lax.max, (1, 1, 2, 2), (1, 1, 2, 2), "VALID")
    y = conv(y, p["w_sc"], p["b_sc"])
    return h + y


if __name__ == "__main__":
    input_c, output_c = 4, 8
    key = jax.random.PRNGKey(0)
    kx, kp = jax.random.split(key)
    x = jax.random.normal(kx, (2, input_c, 16, 16), jnp.float32)
    params = init_params(kp, input_c, output_c)
    ref = _reference_forward(x, params)

    fwd = jax.jit(bottleneck_downsampling)

    # exact-parity check with f32 MXU operands
    out_f32 = fwd(x, prepare_params(params, compute_dtype=jnp.float32))
    jax.block_until_ready(out_f32)
    assert out_f32.shape == (2, output_c, 8, 8)
    err32 = float(jnp.max(jnp.abs(out_f32 - ref)))
    assert err32 < 1e-3, f"f32 mismatch vs reference: max abs err = {err32}"

    # default bf16-MXU path; looser tolerance due to bf16 operand/intermediate rounding
    out_bf16 = fwd(x, prepare_params(params, compute_dtype=jnp.bfloat16))
    jax.block_until_ready(out_bf16)
    errbf = float(jnp.max(jnp.abs(out_bf16 - ref)))
    assert errbf < 2.5e-1, f"bf16 mismatch vs reference: max abs err = {errbf}"

    print("KERNEL_OK")
</pallas_src>

<mosaic_0001>
module attributes {stable_mosaic.version = 11 : i64} {
  func.func @_block1_kernel(%arg0: i32, %arg1: i32, %arg2: memref<1x8x2x8x8xf32, #tpu.memory_space<vmem>>, %arg3: memref<2x8x128xf32, #tpu.memory_space<vmem>>, %arg4: memref<2x128xf32, #tpu.memory_space<vmem>>, %arg5: memref<1x8x8x128xf32, #tpu.memory_space<vmem>>, %arg6: memref<1x8x8x4xf32, #tpu.memory_space<vmem>>, %arg7: memref<1x1x8x128xf32, #tpu.memory_space<vmem>>) attributes {dimension_semantics = [#tpu.dimension_semantics<parallel>, #tpu.dimension_semantics<parallel>], iteration_bounds = array<i64: 2, 1>, scalar_prefetch = 0 : i64, scratch_operands = 0 : i64, tpu.core_type = #tpu.core_type<tc>, window_params = [{transform_indices = @transform_0, window_bounds = array<i64: 1, 8, 2, 8, 8>}, {pipeline_mode = #tpu.pipeline_mode<synchronous>, transform_indices = @transform_1, window_bounds = array<i64: 2, 8, 128>}, {pipeline_mode = #tpu.pipeline_mode<synchronous>, transform_indices = @transform_2, window_bounds = array<i64: 2, 128>}, {transform_indices = @transform_3, window_bounds = array<i64: 1, 8, 8, 128>}, {transform_indices = @transform_4, window_bounds = array<i64: 1, 8, 8, 4>}, {transform_indices = @transform_5, window_bounds = array<i64: 1, 1, 8, 128>}]} {
    %c0 = arith.constant 0 : index
    %c0_0 = arith.constant 0 : index
    %c0_1 = arith.constant 0 : index
    %c0_2 = arith.constant 0 : index
    %c0_3 = arith.constant 0 : index
    %0 = vector.load %arg2[%c0, %c0_0, %c0_1, %c0_2, %c0_3] : memref<1x8x2x8x8xf32, #tpu.memory_space<vmem>>, vector<1x8x2x8x8xf32>
    %1 = vector.shape_cast %0 : vector<1x8x2x8x8xf32> to vector<8x2x8x8xf32>
    %2 = vector.extract_strided_slice %1 {offsets = [0, 0, 0, 0], sizes = [8, 1, 8, 8], strides = [1, 1, 1, 1]} : vector<8x2x8x8xf32> to vector<8x1x8x8xf32>
    %3 = vector.shape_cast %2 : vector<8x1x8x8xf32> to vector<8x8x8xf32>
    %4 = vector.shape_cast %3 : vector<8x8x8xf32> to vector<64x8xf32>
    %5 = vector.extract_strided_slice %1 {offsets = [0, 1, 0, 0], sizes = [8, 1, 8, 8], strides = [1, 1, 1, 1]} : vector<8x2x8x8xf32> to vector<8x1x8x8xf32>
    %6 = vector.shape_cast %5 : vector<8x1x8x8xf32> to vector<8x8x8xf32>
    %7 = vector.shape_cast %6 : vector<8x8x8xf32> to vector<64x8xf32>
    %c0_4 = arith.constant 0 : index
    %c0_5 = arith.constant 0 : index
    %c0_6 = arith.constant 0 : index
    %8 = vector.load %arg3[%c0_4, %c0_5, %c0_6] : memref<2x8x128xf32, #tpu.memory_space<vmem>>, vector<1x8x128xf32>
    %9 = vector.shape_cast %8 : vector<1x8x128xf32> to vector<8x128xf32>
    %cst = arith.constant dense<0.000000e+00> : vector<64x128xf32>
    %10 = tpu.matmul %4, %9, %cst {dimension_numbers = #tpu.dot_dimension_numbers<[1], [0], [0], [1], [0, 0, 1, 1], [], []>} : vector<64x8xf32>, vector<8x128xf32>, vector<64x128xf32> -> vector<64x128xf32>
    %c1 = arith.constant 1 : index
    %c0_7 = arith.constant 0 : index
    %c0_8 = arith.constant 0 : index
    %11 = vector.load %arg3[%c1, %c0_7, %c0_8] : memref<2x8x128xf32, #tpu.memory_space<vmem>>, vector<1x8x128xf32>
    %12 = vector.shape_cast %11 : vector<1x8x128xf32> to vector<8x128xf32>
    %cst_9 = arith.constant dense<0.000000e+00> : vector<64x128xf32>
    %13 = tpu.matmul %7, %12, %cst_9 {dimension_numbers = #tpu.dot_dimension_numbers<[1], [0], [0], [1], [0, 0, 1, 1], [], []>} : vector<64x8xf32>, vector<8x128xf32>, vector<64x128xf32> -> vector<64x128xf32>
    %14 = arith.addf %10, %13 : vector<64x128xf32>
    %c0_10 = arith.constant 0 : index
    %c0_11 = arith.constant 0 : index
    %15 = vector.load %arg4[%c0_10, %c0_11] : memref<2x128xf32, #tpu.memory_space<vmem>>, vector<1x128xf32>
    %16 = vector.shape_cast %15 : vector<1x128xf32> to vector<128xf32>
    %17 = vector.shape_cast %16 : vector<128xf32> to vector<1x128xf32>
    %18 = vector.broadcast %17 : vector<1x128xf32> to vector<64x128xf32>
    %19 = arith.addf %14, %18 : vector<64x128xf32>
    %cst_12 = arith.constant 0.000000e+00 : f32
    %20 = vector.broadcast %cst_12 : f32 to vector<64x128xf32>
    %21 = arith.cmpf oge, %19, %20 : vector<64x128xf32>
    %c1_13 = arith.constant 1 : index
    %c0_14 = arith.constant 0 : index
    %22 = vector.load %arg4[%c1_13, %c0_14] : memref<2x128xf32, #tpu.memory_space<vmem>>, vector<1x128xf32>
    %23 = vector.shape_cast %22 : vector<1x128xf32> to vector<128xf32>
    %24 = vector.shape_cast %23 : vector<128xf32> to vector<1x128xf32>
    %25 = vector.broadcast %24 : vector<1x128xf32> to vector<64x128xf32>
    %26 = arith.mulf %25, %19 : vector<64x128xf32>
    %27 = arith.select %21, %19, %26 : vector<64x128xi1>, vector<64x128xf32>
    %28 = vector.shape_cast %27 : vector<64x128xf32> to vector<8x8x128xf32>
    %c0_15 = arith.constant 0 : index
    %c0_16 = arith.constant 0 : index
    %c0_17 = arith.constant 0 : index
    %c0_18 = arith.constant 0 : index
    %29 = vector.load %arg5[%c0_15, %c0_16, %c0_17, %c0_18] : memref<1x8x8x128xf32, #tpu.memory_space<vmem>>, vector<1x8x8x128xf32>
    %30 = vector.shape_cast %29 : vector<1x8x8x128xf32> to vector<8x8x128xf32>
    %31 = vector.shape_cast %28 : vector<8x8x128xf32> to vector<1x8x8x128xf32>
    tpu.vector_store %arg5[%c0_15, %c0_16, %c0_17, %c0_18], %31 {strides = array<i32>} : memref<1x8x8x128xf32, #tpu.memory_space<vmem>>, vector<1x8x8x128xf32>,
    %32 = vector.extract_strided_slice %4 {offsets = [0, 0], sizes = [64, 4], strides = [1, 1]} : vector<64x8xf32> to vector<64x4xf32>
    %33 = vector.extract_strided_slice %4 {offsets = [0, 4], sizes = [64, 4], strides = [1, 1]} : vector<64x8xf32> to vector<64x4xf32>
    %34 = arith.maximumf %32, %33 : vector<64x4xf32>
    %35 = vector.extract_strided_slice %7 {offsets = [0, 0], sizes = [64, 4], strides = [1, 1]} : vector<64x8xf32> to vector<64x4xf32>
    %36 = vector.extract_strided_slice %7 {offsets = [0, 4], sizes = [64, 4], strides = [1, 1]} : vector<64x8xf32> to vector<64x4xf32>
    %37 = arith.maximumf %35, %36 : vector<64x4xf32>
    %38 = arith.maximumf %34, %37 : vector<64x4xf32>
    %39 = vector.shape_cast %38 : vector<64x4xf32> to vector<8x8x4xf32>
    %c0_19 = arith.constant 0 : index
    %c0_20 = arith.constant 0 : index
    %c0_21 = arith.constant 0 : index
    %c0_22 = arith.constant 0 : index
    %40 = vector.load %arg6[%c0_19, %c0_20, %c0_21, %c0_22] : memref<1x8x8x4xf32, #tpu.memory_space<vmem>>, vector<1x8x8x4xf32>
    %41 = vector.shape_cast %40 : vector<1x8x8x4xf32> to vector<8x8x4xf32>
    %42 = vector.shape_cast %39 : vector<8x8x4xf32> to vector<1x8x8x4xf32>
    tpu.vector_store %arg6[%c0_19, %c0_20, %c0_21, %c0_22], %42 {strides = array<i32>} : memref<1x8x8x4xf32, #tpu.memory_space<vmem>>, vector<1x8x8x4xf32>,
    %cst_23 = arith.constant dense<0.000000e+00> : vector<128xf32>
    %43 = vector.multi_reduction <add>, %27, %cst_23 [0] : vector<64x128xf32> to vector<128xf32>
    %44 = vector.shape_cast %43 : vector<128xf32> to vector<1x128xf32>
    %45 = arith.mulf %27, %27 : vector<64x128xf32>
    %cst_24 = arith.constant dense<0.000000e+00> : vector<128xf32>
    %46 = vector.multi_reduction <add>, %45, %cst_24 [0] : vector<64x128xf32> to vector<128xf32>
    %47 = vector.shape_cast %46 : vector<128xf32> to vector<1x128xf32>
    %cst_25 = arith.constant 0.000000e+00 : f32
    %48 = vector.broadcast %cst_25 : f32 to vector<6x128xf32>
    %49 = tpu.concatenate %44, %47, %48 in 0 : vector<1x128xf32>, vector<1x128xf32>, vector<6x128xf32> -> vector<8x128xf32>
    %c0_26 = arith.constant 0 : index
    %c0_27 = arith.constant 0 : index
    %c0_28 = arith.constant 0 : index
    %c0_29 = arith.constant 0 : index
    %50 = vector.load %arg7[%c0_26, %c0_27, %c0_28, %c0_29] : memref<1x1x8x128xf32, #tpu.memory_space<vmem>>, vector<1x1x8x128xf32>
    %51 = vector.shape_cast %50 : vector<1x1x8x128xf32> to vector<8x128xf32>
    %52 = vector.shape_cast %49 : vector<8x128xf32> to vector<1x1x8x128xf32>
    tpu.vector_store %arg7[%c0_26, %c0_27, %c0_28, %c0_29], %52 {strides = array<i32>} : memref<1x1x8x128xf32, #tpu.memory_space<vmem>>, vector<1x1x8x128xf32>,
    return
  }
  func.func @transform_0(%arg0: i32, %arg1: i32) -> (i32, i32, i32, i32, i32) {
    %c0_i32 = arith.constant 0 : i32
    %c0_i32_0 = arith.constant 0 : i32
    %c0_i32_1 = arith.constant 0 : i32
    %c0_i32_2 = arith.constant 0 : i32
    return %arg0, %arg1, %c0_i32, %c0_i32_0, %c0_i32_1 : i32, i32, i32, i32, i32
  }
  func.func @transform_1(%arg0: i32, %arg1: i32) -> (i32, i32, i32) {
    %c0_i32 = arith.constant 0 : i32
    %c0_i32_0 = arith.constant 0 : i32
    %c0_i32_1 = arith.constant 0 : i32
    %c0_i32_2 = arith.constant 0 : i32
    return %c0_i32, %c0_i32_0, %c0_i32_1 : i32, i32, i32
  }
  func.func @transform_2(%arg0: i32, %arg1: i32) -> (i32, i32) {
    %c0_i32 = arith.constant 0 : i32
    %c0_i32_0 = arith.constant 0 : i32
    %c0_i32_1 = arith.constant 0 : i32
    return %c0_i32, %c0_i32_0 : i32, i32
  }
  func.func @transform_3(%arg0: i32, %arg1: i32) -> (i32, i32, i32, i32) {
    %c0_i32 = arith.constant 0 : i32
    %c0_i32_0 = arith.constant 0 : i32
    %c0_i32_1 = arith.constant 0 : i32
    return %arg0, %arg1, %c0_i32, %c0_i32_0 : i32, i32, i32, i32
  }
  func.func @transform_4(%arg0: i32, %arg1: i32) -> (i32, i32, i32, i32) {
    %c0_i32 = arith.constant 0 : i32
    %c0_i32_0 = arith.constant 0 : i32
    %c0_i32_1 = arith.constant 0 : i32
    return %arg0, %arg1, %c0_i32, %c0_i32_0 : i32, i32, i32, i32
  }
  func.func @transform_5(%arg0: i32, %arg1: i32) -> (i32, i32, i32, i32) {
    %c0_i32 = arith.constant 0 : i32
    %c0_i32_0 = arith.constant 0 : i32
    %c0_i32_1 = arith.constant 0 : i32
    return %arg0, %arg1, %c0_i32, %c0_i32_0 : i32, i32, i32, i32
  }
}

module attributes {stable_mosaic.version = 11 : i64} {
  func.func @_block2_kernel(%arg0: i32, %arg1: memref<1x8x8x128xf32, #tpu.memory_space<vmem>>, %arg2: memref<2x128xf32, #tpu.memory_space<vmem>>, %arg3: memref<9x128x128xf32, #tpu.memory_space<vmem>>, %arg4: memref<2x128xf32, #tpu.memory_space<vmem>>, %arg5: memref<1x8x8x128xf32, #tpu.memory_space<vmem>>, %arg6: memref<1x1x8x128xf32, #tpu.memory_space<vmem>>, %arg7: memref<102x128xf32, #tpu.memory_space<vmem>>) attributes {dimension_semantics = [#tpu.dimension_semantics<parallel>], iteration_bounds = array<i64: 2>, scalar_prefetch = 0 : i64, scratch_operands = 1 : i64, tpu.core_type = #tpu.core_type<tc>, window_params = [{transform_indices = @transform_0, window_bounds = array<i64: 1, 8, 8, 128>}, {pipeline_mode = #tpu.pipeline_mode<synchronous>, transform_indices = @transform_1, window_bounds = array<i64: 2, 128>}, {pipeline_mode = #tpu.pipeline_mode<synchronous>, transform_indices = @transform_2, window_bounds = array<i64: 9, 128, 128>}, {pipeline_mode = #tpu.pipeline_mode<synchronous>, transform_indices = @transform_3, window_bounds = array<i64: 2, 128>}, {transform_indices = @transform_4, window_bounds = array<i64: 1, 8, 8, 128>}, {transform_indices = @transform_5, window_bounds = array<i64: 1, 1, 8, 128>}]} {
    %c0 = arith.constant 0 : index
    %c0_0 = arith.constant 0 : index
    %c0_1 = arith.constant 0 : index
    %c0_2 = arith.constant 0 : index
    %0 = vector.load %arg1[%c0, %c0_0, %c0_1, %c0_2] : memref<1x8x8x128xf32, #tpu.memory_space<vmem>>, vector<1x8x8x128xf32>
    %1 = vector.shape_cast %0 : vector<1x8x8x128xf32> to vector<8x8x128xf32>
    %c0_3 = arith.constant 0 : index
    %c0_4 = arith.constant 0 : index
    %2 = vector.load %arg2[%c0_3, %c0_4] : memref<2x128xf32, #tpu.memory_space<vmem>>, vector<1x128xf32>
    %3 = vector.shape_cast %2 : vector<1x128xf32> to vector<128xf32>
    %4 = vector.shape_cast %3 : vector<128xf32> to vector<1x1x128xf32>
    %5 = vector.broadcast %4 : vector<1x1x128xf32> to vector<8x8x128xf32>
    %6 = arith.mulf %1, %5 : vector<8x8x128xf32>
    %c1 = arith.constant 1 : index
    %c0_5 = arith.constant 0 : index
    %7 = vector.load %arg2[%c1, %c0_5] : memref<2x128xf32, #tpu.memory_space<vmem>>, vector<1x128xf32>
    %8 = vector.shape_cast %7 : vector<1x128xf32> to vector<128xf32>
    %9 = vector.shape_cast %8 : vector<128xf32> to vector<1x1x128xf32>
    %10 = vector.broadcast %9 : vector<1x1x128xf32> to vector<8x8x128xf32>
    %11 = arith.addf %6, %10 : vector<8x8x128xf32>
    %cst = arith.constant 0.000000e+00 : f32
    %12 = vector.broadcast %cst : f32 to vector<8x1x128xf32>
    %13 = tpu.concatenate %12, %11, %12 in 1 : vector<8x1x128xf32>, vector<8x8x128xf32>, vector<8x1x128xf32> -> vector<8x10x128xf32>
    %cst_6 = arith.constant 0.000000e+00 : f32
    %14 = vector.broadcast %cst_6 : f32 to vector<10x128xf32>
    %c0_7 = arith.constant 0 : index
    %c0_8 = arith.constant 0 : index
    %15 = vector.load %arg7[%c0_7, %c0_8] : memref<102x128xf32, #tpu.memory_space<vmem>>, vector<10x128xf32>
    tpu.vector_store %arg7[%c0_7, %c0_8], %14 {strides = array<i32>} : memref<102x128xf32, #tpu.memory_space<vmem>>, vector<10x128xf32>,
    %cst_9 = arith.constant 0.000000e+00 : f32
    %16 = vector.broadcast %cst_9 : f32 to vector<12x128xf32>
    %c90 = arith.constant 90 : index
    %c0_10 = arith.constant 0 : index
    %17 = vector.load %arg7[%c90, %c0_10] : memref<102x128xf32, #tpu.memory_space<vmem>>, vector<12x128xf32>
    tpu.vector_store %arg7[%c90, %c0_10], %16 {strides = array<i32>} : memref<102x128xf32, #tpu.memory_space<vmem>>, vector<12x128xf32>,
    %18 = vector.shape_cast %13 : vector<8x10x128xf32> to vector<80x128xf32>
    %c10 = arith.constant 10 : index
    %c0_11 = arith.constant 0 : index
    %19 = vector.load %arg7[%c10, %c0_11] : memref<102x128xf32, #tpu.memory_space<vmem>>, vector<80x128xf32>
    tpu.vector_store %arg7[%c10, %c0_11], %18 {strides = array<i32>} : memref<102x128xf32, #tpu.memory_space<vmem>>, vector<80x128xf32>,
    %cst_12 = arith.constant 0.000000e+00 : f32
    %20 = vector.broadcast %cst_12 : f32 to vector<80x128xf32>
    %c0_13 = arith.constant 0 : index
    %c0_14 = arith.constant 0 : index
    %21 = vector.load %arg7[%c0_13, %c0_14] : memref<102x128xf32, #tpu.memory_space<vmem>>, vector<80x128xf32>
    %c0_15 = arith.constant 0 : index
    %c0_16 = arith.constant 0 : index
    %c0_17 = arith.constant 0 : index
    %22 = vector.load %arg3[%c0_15, %c0_16, %c0_17] : memref<9x128x128xf32, #tpu.memory_space<vmem>>, vector<1x128x128xf32>
    %23 = vector.shape_cast %22 : vector<1x128x128xf32> to vector<128x128xf32>
    %cst_18 = arith.constant dense<0.000000e+00> : vector<80x128xf32>
    %24 = tpu.matmul %21, %23, %cst_18 {dimension_numbers = #tpu.dot_dimension_numbers<[1], [0], [0], [1], [0, 0, 1, 1], [], []>} : vector<80x128xf32>, vector<128x128xf32>, vector<80x128xf32> -> vector<80x128xf32>
    %25 = arith.addf %20, %24 : vector<80x128xf32>
    %c1_19 = arith.constant 1 : index
    %c0_20 = arith.constant 0 : index
    %26 = vector.load %arg7[%c1_19, %c0_20] : memref<102x128xf32, #tpu.memory_space<vmem>>, vector<80x128xf32>
    %c1_21 = arith.constant 1 : index
    %c0_22 = arith.constant 0 : index
    %c0_23 = arith.constant 0 : index
    %27 = vector.load %arg3[%c1_21, %c0_22, %c0_23] : memref<9x128x128xf32, #tpu.memory_space<vmem>>, vector<1x128x128xf32>
    %28 = vector.shape_cast %27 : vector<1x128x128xf32> to vector<128x128xf32>
    %cst_24 = arith.constant dense<0.000000e+00> : vector<80x128xf32>
    %29 = tpu.matmul %26, %28, %cst_24 {dimension_numbers = #tpu.dot_dimension_numbers<[1], [0], [0], [1], [0, 0, 1, 1], [], []>} : vector<80x128xf32>, vector<128x128xf32>, vector<80x128xf32> -> vector<80x128xf32>
    %30 = arith.addf %25, %29 : vector<80x128xf32>
    %c2 = arith.constant 2 : index
    %c0_25 = arith.constant 0 : index
    %31 = vector.load %arg7[%c2, %c0_25] : memref<102x128xf32, #tpu.memory_space<vmem>>, vector<80x128xf32>
    %c2_26 = arith.constant 2 : index
    %c0_27 = arith.constant 0 : index
    %c0_28 = arith.constant 0 : index
    %32 = vector.load %arg3[%c2_26, %c0_27, %c0_28] : memref<9x128x128xf32, #tpu.memory_space<vmem>>, vector<1x128x128xf32>
    %33 = vector.shape_cast %32 : vector<1x128x128xf32> to vector<128x128xf32>
    %cst_29 = arith.constant dense<0.000000e+00> : vector<80x128xf32>
    %34 = tpu.matmul %31, %33, %cst_29 {dimension_numbers = #tpu.dot_dimension_numbers<[1], [0], [0], [1], [0, 0, 1, 1], [], []>} : vector<80x128xf32>, vector<128x128xf32>, vector<80x128xf32> -> vector<80x128xf32>
    %35 = arith.addf %30, %34 : vector<80x128xf32>
    %c10_30 = arith.constant 10 : index
    %c0_31 = arith.constant 0 : index
    %36 = vector.load %arg7[%c10_30, %c0_31] : memref<102x128xf32, #tpu.memory_space<vmem>>, vector<80x128xf32>
    %c3 = arith.constant 3 : index
    %c0_32 = arith.constant 0 : index
    %c0_33 = arith.constant 0 : index
    %37 = vector.load %arg3[%c3, %c0_32, %c0_33] : memref<9x128x128xf32, #tpu.memory_space<vmem>>, vector<1x128x128xf32>
    %38 = vector.shape_cast %37 : vector<1x128x128xf32> to vector<128x128xf32>
    %cst_34 = arith.constant dense<0.000000e+00> : vector<80x128xf32>
    %39 = tpu.matmul %36, %38, %cst_34 {dimension_numbers = #tpu.dot_dimension_numbers<[1], [0], [0], [1], [0, 0, 1, 1], [], []>} : vector<80x128xf32>, vector<128x128xf32>, vector<80x128xf32> -> vector<80x128xf32>
    %40 = arith.addf %35, %39 : vector<80x128xf32>
    %c11 = arith.constant 11 : index
    %c0_35 = arith.constant 0 : index
    %41 = vector.load %arg7[%c11, %c0_35] : memref<102x128xf32, #tpu.memory_space<vmem>>, vector<80x128xf32>
    %c4 = arith.constant 4 : index
    %c0_36 = arith.constant 0 : index
    %c0_37 = arith.constant 0 : index
    %42 = vector.load %arg3[%c4, %c0_36, %c0_37] : memref<9x128x128xf32, #tpu.memory_space<vmem>>, vector<1x128x128xf32>
    %43 = vector.shape_cast %42 : vector<1x128x128xf32> to vector<128x128xf32>
    %cst_38 = arith.constant dense<0.000000e+00> : vector<80x128xf32>
    %44 = tpu.matmul %41, %43, %cst_38 {dimension_numbers = #tpu.dot_dimension_numbers<[1], [0], [0], [1], [0, 0, 1, 1], [], []>} : vector<80x128xf32>, vector<128x128xf32>, vector<80x128xf32> -> vector<80x128xf32>
    %45 = arith.addf %40, %44 : vector<80x128xf32>
    %c12 = arith.constant 12 : index
    %c0_39 = arith.constant 0 : index
    %46 = vector.load %arg7[%c12, %c0_39] : memref<102x128xf32, #tpu.memory_space<vmem>>, vector<80x128xf32>
    %c5 = arith.constant 5 : index
    %c0_40 = arith.constant 0 : index
    %c0_41 = arith.constant 0 : index
    %47 = vector.load %arg3[%c5, %c0_40, %c0_41] : memref<9x128x128xf32, #tpu.memory_space<vmem>>, vector<1x128x128xf32>
    %48 = vector.shape_cast %47 : vector<1x128x128xf32> to vector<128x128xf32>
    %cst_42 = arith.constant dense<0.000000e+00> : vector<80x128xf32>
    %49 = tpu.matmul %46, %48, %cst_42 {dimension_numbers = #tpu.dot_dimension_numbers<[1], [0], [0], [1], [0, 0, 1, 1], [], []>} : vector<80x128xf32>, vector<128x128xf32>, vector<80x128xf32> -> vector<80x128xf32>
    %50 = arith.addf %45, %49 : vector<80x128xf32>
    %c20 = arith.constant 20 : index
    %c0_43 = arith.constant 0 : index
    %51 = vector.load %arg7[%c20, %c0_43] : memref<102x128xf32, #tpu.memory_space<vmem>>, vector<80x128xf32>
    %c6 = arith.constant 6 : index
    %c0_44 = arith.constant 0 : index
    %c0_45 = arith.constant 0 : index
    %52 = vector.load %arg3[%c6, %c0_44, %c0_45] : memref<9x128x128xf32, #tpu.memory_space<vmem>>, vector<1x128x128xf32>
    %53 = vector.shape_cast %52 : vector<1x128x128xf32> to vector<128x128xf32>
    %cst_46 = arith.constant dense<0.000000e+00> : vector<80x128xf32>
    %54 = tpu.matmul %51, %53, %cst_46 {dimension_numbers = #tpu.dot_dimension_numbers<[1], [0], [0], [1], [0, 0, 1, 1], [], []>} : vector<80x128xf32>, vector<128x128xf32>, vector<80x128xf32> -> vector<80x128xf32>
    %55 = arith.addf %50, %54 : vector<80x128xf32>
    %c21 = arith.constant 21 : index
    %c0_47 = arith.constant 0 : index
    %56 = vector.load %arg7[%c21, %c0_47] : memref<102x128xf32, #tpu.memory_space<vmem>>, vector<80x128xf32>
    %c7 = arith.constant 7 : index
    %c0_48 = arith.constant 0 : index
    %c0_49 = arith.constant 0 : index
    %57 = vector.load %arg3[%c7, %c0_48, %c0_49] : memref<9x128x128xf32, #tpu.memory_space<vmem>>, vector<1x128x128xf32>
    %58 = vector.shape_cast %57 : vector<1x128x128xf32> to vector<128x128xf32>
    %cst_50 = arith.constant dense<0.000000e+00> : vector<80x128xf32>
    %59 = tpu.matmul %56, %58, %cst_50 {dimension_numbers = #tpu.dot_dimension_numbers<[1], [0], [0], [1], [0, 0, 1, 1], [], []>} : vector<80x128xf32>, vector<128x128xf32>, vector<80x128xf32> -> vector<80x128xf32>
    %60 = arith.addf %55, %59 : vector<80x128xf32>
    %c22 = arith.constant 22 : index
    %c0_51 = arith.constant 0 : index
    %61 = vector.load %arg7[%c22, %c0_51] : memref<102x128xf32, #tpu.memory_space<vmem>>, vector<80x128xf32>
    %c8 = arith.constant 8 : index
    %c0_52 = arith.constant 0 : index
    %c0_53 = arith.constant 0 : index
    %62 = vector.load %arg3[%c8, %c0_52, %c0_53] : memref<9x128x128xf32, #tpu.memory_space<vmem>>, vector<1x128x128xf32>
    %63 = vector.shape_cast %62 : vector<1x128x128xf32> to vector<128x128xf32>
    %cst_54 = arith.constant dense<0.000000e+00> : vector<80x128xf32>
    %64 = tpu.matmul %61, %63, %cst_54 {dimension_numbers = #tpu.dot_dimension_numbers<[1], [0], [0], [1], [0, 0, 1, 1], [], []>} : vector<80x128xf32>, vector<128x128xf32>, vector<80x128xf32> -> vector<80x128xf32>
    %65 = arith.addf %60, %64 : vector<80x128xf32>
    %c0_55 = arith.constant 0 : index
    %c0_56 = arith.constant 0 : index
    %66 = vector.load %arg4[%c0_55, %c0_56] : memref<2x128xf32, #tpu.memory_space<vmem>>, vector<1x128xf32>
    %67 = vector.shape_cast %66 : vector<1x128xf32> to vector<128xf32>
    %68 = vector.shape_cast %67 : vector<128xf32> to vector<1x128xf32>
    %69 = vector.broadcast %68 : vector<1x128xf32> to vector<80x128xf32>
    %70 = arith.addf %65, %69 : vector<80x128xf32>
    %cst_57 = arith.constant 0.000000e+00 : f32
    %71 = vector.broadcast %cst_57 : f32 to vector<80x128xf32>
    %72 = arith.cmpf oge, %70, %71 : vector<80x128xf32>
    %c1_58 = arith.constant 1 : index
    %c0_59 = arith.constant 0 : index
    %73 = vector.load %arg4[%c1_58, %c0_59] : memref<2x128xf32, #tpu.memory_space<vmem>>, vector<1x128xf32>
    %74 = vector.shape_cast %73 : vector<1x128xf32> to vector<128xf32>
    %75 = vector.shape_cast %74 : vector<128xf32> to vector<1x128xf32>
    %76 = vector.broadcast %75 : vector<1x128xf32> to vector<80x128xf32>
    %77 = arith.mulf %76, %70 : vector<80x128xf32>
    %78 = arith.select %72, %70, %77 : vector<80x128xi1>, vector<80x128xf32>
    %79 = vector.shape_cast %78 : vector<80x128xf32> to vector<8x10x128xf32>
    %80 = vector.extract_strided_slice %79 {offsets = [0, 0, 0], sizes = [8, 8, 128], strides = [1, 1, 1]} : vector<8x10x128xf32> to vector<8x8x128xf32>
    %c0_60 = arith.constant 0 : index
    %c0_61 = arith.constant 0 : index
    %c0_62 = arith.constant 0 : index
    %c0_63 = arith.constant 0 : index
    %81 = vector.load %arg5[%c0_60, %c0_61, %c0_62, %c0_63] : memref<1x8x8x128xf32, #tpu.memory_space<vmem>>, vector<1x8x8x128xf32>
    %82 = vector.shape_cast %81 : vector<1x8x8x128xf32> to vector<8x8x128xf32>
    %83 = vector.shape_cast %80 : vector<8x8x128xf32> to vector<1x8x8x128xf32>
    tpu.vector_store %arg5[%c0_60, %c0_61, %c0_62, %c0_63], %83 {strides = array<i32>} : memref<1x8x8x128xf32, #tpu.memory_space<vmem>>, vector<1x8x8x128xf32>,
    %cst_64 = arith.constant dense<0.000000e+00> : vector<128xf32>
    %84 = vector.multi_reduction <add>, %80, %cst_64 [0, 1] : vector<8x8x128xf32> to vector<128xf32>
    %85 = vector.shape_cast %84 : vector<128xf32> to vector<1x128xf32>
    %86 = arith.mulf %80, %80 : vector<8x8x128xf32>
    %cst_65 = arith.constant dense<0.000000e+00> : vector<128xf32>
    %87 = vector.multi_reduction <add>, %86, %cst_65 [0, 1] : vector<8x8x128xf32> to vector<128xf32>
    %88 = vector.shape_cast %87 : vector<128xf32> to vector<1x128xf32>
    %cst_66 = arith.constant 0.000000e+00 : f32
    %89 = vector.broadcast %cst_66 : f32 to vector<6x128xf32>
    %90 = tpu.concatenate %85, %88, %89 in 0 : vector<1x128xf32>, vector<1x128xf32>, vector<6x128xf32> -> vector<8x128xf32>
    %c0_67 = arith.constant 0 : index
    %c0_68 = arith.constant 0 : index
    %c0_69 = arith.constant 0 : index
    %c0_70 = arith.constant 0 : index
    %91 = vector.load %arg6[%c0_67, %c0_68, %c0_69, %c0_70] : memref<1x1x8x128xf32, #tpu.memory_space<vmem>>, vector<1x1x8x128xf32>
    %92 = vector.shape_cast %91 : vector<1x1x8x128xf32> to vector<8x128xf32>
    %93 = vector.shape_cast %90 : vector<8x128xf32> to vector<1x1x8x128xf32>
    tpu.vector_store %arg6[%c0_67, %c0_68, %c0_69, %c0_70], %93 {strides = array<i32>} : memref<1x1x8x128xf32, #tpu.memory_space<vmem>>, vector<1x1x8x128xf32>,
    return
  }
  func.func @transform_0(%arg0: i32) -> (i32, i32, i32, i32) {
    %c0_i32 = arith.constant 0 : i32
    %c0_i32_0 = arith.constant 0 : i32
    %c0_i32_1 = arith.constant 0 : i32
    %c0_i32_2 = arith.constant 0 : i32
    return %arg0, %c0_i32, %c0_i32_0, %c0_i32_1 : i32, i32, i32, i32
  }
  func.func @transform_1(%arg0: i32) -> (i32, i32) {
    %c0_i32 = arith.constant 0 : i32
    %c0_i32_0 = arith.constant 0 : i32
    %c0_i32_1 = arith.constant 0 : i32
    return %c0_i32, %c0_i32_0 : i32, i32
  }
  func.func @transform_2(%arg0: i32) -> (i32, i32, i32) {
    %c0_i32 = arith.constant 0 : i32
    %c0_i32_0 = arith.constant 0 : i32
    %c0_i32_1 = arith.constant 0 : i32
    %c0_i32_2 = arith.constant 0 : i32
    return %c0_i32, %c0_i32_0, %c0_i32_1 : i32, i32, i32
  }
  func.func @transform_3(%arg0: i32) -> (i32, i32) {
    %c0_i32 = arith.constant 0 : i32
    %c0_i32_0 = arith.constant 0 : i32
    %c0_i32_1 = arith.constant 0 : i32
    return %c0_i32, %c0_i32_0 : i32, i32
  }
  func.func @transform_4(%arg0: i32) -> (i32, i32, i32, i32) {
    %c0_i32 = arith.constant 0 : i32
    %c0_i32_0 = arith.constant 0 : i32
    %c0_i32_1 = arith.constant 0 : i32
    %c0_i32_2 = arith.constant 0 : i32
    return %arg0, %c0_i32, %c0_i32_0, %c0_i32_1 : i32, i32, i32, i32
  }
  func.func @transform_5(%arg0: i32) -> (i32, i32, i32, i32) {
    %c0_i32 = arith.constant 0 : i32
    %c0_i32_0 = arith.constant 0 : i32
    %c0_i32_1 = arith.constant 0 : i32
    %c0_i32_2 = arith.constant 0 : i32
    return %arg0, %c0_i32, %c0_i32_0, %c0_i32_1 : i32, i32, i32, i32
  }
}

module attributes {stable_mosaic.version = 11 : i64} {
  func.func @_block3_kernel(%arg0: i32, %arg1: i32, %arg2: memref<1x8x8x128xf32, #tpu.memory_space<vmem>>, %arg3: memref<2x128xf32, #tpu.memory_space<vmem>>, %arg4: memref<128x128xf32, #tpu.memory_space<vmem>>, %arg5: memref<2x128xf32, #tpu.memory_space<vmem>>, %arg6: memref<1x8x8x128xf32, #tpu.memory_space<vmem>>, %arg7: memref<1x1x8x128xf32, #tpu.memory_space<vmem>>) attributes {dimension_semantics = [#tpu.dimension_semantics<parallel>, #tpu.dimension_semantics<parallel>], iteration_bounds = array<i64: 2, 1>, scalar_prefetch = 0 : i64, scratch_operands = 0 : i64, tpu.core_type = #tpu.core_type<tc>, window_params = [{transform_indices = @transform_0, window_bounds = array<i64: 1, 8, 8, 128>}, {pipeline_mode = #tpu.pipeline_mode<synchronous>, transform_indices = @transform_1, window_bounds = array<i64: 2, 128>}, {pipeline_mode = #tpu.pipeline_mode<synchronous>, transform_indices = @transform_2, window_bounds = array<i64: 128, 128>}, {pipeline_mode = #tpu.pipeline_mode<synchronous>, transform_indices = @transform_3, window_bounds = array<i64: 2, 128>}, {transform_indices = @transform_4, window_bounds = array<i64: 1, 8, 8, 128>}, {transform_indices = @transform_5, window_bounds = array<i64: 1, 1, 8, 128>}]} {
    %c0 = arith.constant 0 : index
    %c0_0 = arith.constant 0 : index
    %c0_1 = arith.constant 0 : index
    %c0_2 = arith.constant 0 : index
    %0 = vector.load %arg2[%c0, %c0_0, %c0_1, %c0_2] : memref<1x8x8x128xf32, #tpu.memory_space<vmem>>, vector<1x8x8x128xf32>
    %1 = vector.shape_cast %0 : vector<1x8x8x128xf32> to vector<8x8x128xf32>
    %c0_3 = arith.constant 0 : index
    %c0_4 = arith.constant 0 : index
    %2 = vector.load %arg3[%c0_3, %c0_4] : memref<2x128xf32, #tpu.memory_space<vmem>>, vector<1x128xf32>
    %3 = vector.shape_cast %2 : vector<1x128xf32> to vector<128xf32>
    %4 = vector.shape_cast %3 : vector<128xf32> to vector<1x1x128xf32>
    %5 = vector.broadcast %4 : vector<1x1x128xf32> to vector<8x8x128xf32>
    %6 = arith.mulf %1, %5 : vector<8x8x128xf32>
    %c1 = arith.constant 1 : index
    %c0_5 = arith.constant 0 : index
    %7 = vector.load %arg3[%c1, %c0_5] : memref<2x128xf32, #tpu.memory_space<vmem>>, vector<1x128xf32>
    %8 = vector.shape_cast %7 : vector<1x128xf32> to vector<128xf32>
    %9 = vector.shape_cast %8 : vector<128xf32> to vector<1x1x128xf32>
    %10 = vector.broadcast %9 : vector<1x1x128xf32> to vector<8x8x128xf32>
    %11 = arith.addf %6, %10 : vector<8x8x128xf32>
    %12 = vector.shape_cast %11 : vector<8x8x128xf32> to vector<64x128xf32>
    %c0_6 = arith.constant 0 : index
    %c0_7 = arith.constant 0 : index
    %13 = vector.load %arg4[%c0_6, %c0_7] : memref<128x128xf32, #tpu.memory_space<vmem>>, vector<128x128xf32>
    %cst = arith.constant dense<0.000000e+00> : vector<64x128xf32>
    %14 = tpu.matmul %12, %13, %cst {dimension_numbers = #tpu.dot_dimension_numbers<[1], [0], [0], [1], [0, 0, 1, 1], [], []>} : vector<64x128xf32>, vector<128x128xf32>, vector<64x128xf32> -> vector<64x128xf32>
    %c0_8 = arith.constant 0 : index
    %c0_9 = arith.constant 0 : index
    %15 = vector.load %arg5[%c0_8, %c0_9] : memref<2x128xf32, #tpu.memory_space<vmem>>, vector<1x128xf32>
    %16 = vector.shape_cast %15 : vector<1x128xf32> to vector<128xf32>
    %17 = vector.shape_cast %16 : vector<128xf32> to vector<1x128xf32>
    %18 = vector.broadcast %17 : vector<1x128xf32> to vector<64x128xf32>
    %19 = arith.addf %14, %18 : vector<64x128xf32>
    %cst_10 = arith.constant 0.000000e+00 : f32
    %20 = vector.broadcast %cst_10 : f32 to vector<64x128xf32>
    %21 = arith.cmpf oge, %19, %20 : vector<64x128xf32>
    %c1_11 = arith.constant 1 : index
    %c0_12 = arith.constant 0 : index
    %22 = vector.load %arg5[%c1_11, %c0_12] : memref<2x128xf32, #tpu.memory_space<vmem>>, vector<1x128xf32>
    %23 = vector.shape_cast %22 : vector<1x128xf32> to vector<128xf32>
    %24 = vector.shape_cast %23 : vector<128xf32> to vector<1x128xf32>
    %25 = vector.broadcast %24 : vector<1x128xf32> to vector<64x128xf32>
    %26 = arith.mulf %25, %19 : vector<64x128xf32>
    %27 = arith.select %21, %19, %26 : vector<64x128xi1>, vector<64x128xf32>
    %28 = vector.shape_cast %27 : vector<64x128xf32> to vector<8x8x128xf32>
    %c0_13 = arith.constant 0 : index
    %c0_14 = arith.constant 0 : index
    %c0_15 = arith.constant 0 : index
    %c0_16 = arith.constant 0 : index
    %29 = vector.load %arg6[%c0_13, %c0_14, %c0_15, %c0_16] : memref<1x8x8x128xf32, #tpu.memory_space<vmem>>, vector<1x8x8x128xf32>
    %30 = vector.shape_cast %29 : vector<1x8x8x128xf32> to vector<8x8x128xf32>
    %31 = vector.shape_cast %28 : vector<8x8x128xf32> to vector<1x8x8x128xf32>
    tpu.vector_store %arg6[%c0_13, %c0_14, %c0_15, %c0_16], %31 {strides = array<i32>} : memref<1x8x8x128xf32, #tpu.memory_space<vmem>>, vector<1x8x8x128xf32>,
    %cst_17 = arith.constant dense<0.000000e+00> : vector<128xf32>
    %32 = vector.multi_reduction <add>, %27, %cst_17 [0] : vector<64x128xf32> to vector<128xf32>
    %33 = vector.shape_cast %32 : vector<128xf32> to vector<1x128xf32>
    %34 = arith.mulf %27, %27 : vector<64x128xf32>
    %cst_18 = arith.constant dense<0.000000e+00> : vector<128xf32>
    %35 = vector.multi_reduction <add>, %34, %cst_18 [0] : vector<64x128xf32> to vector<128xf32>
    %36 = vector.shape_cast %35 : vector<128xf32> to vector<1x128xf32>
    %cst_19 = arith.constant 0.000000e+00 : f32
    %37 = vector.broadcast %cst_19 : f32 to vector<6x128xf32>
    %38 = tpu.concatenate %33, %36, %37 in 0 : vector<1x128xf32>, vector<1x128xf32>, vector<6x128xf32> -> vector<8x128xf32>
    %c0_20 = arith.constant 0 : index
    %c0_21 = arith.constant 0 : index
    %c0_22 = arith.constant 0 : index
    %c0_23 = arith.constant 0 : index
    %39 = vector.load %arg7[%c0_20, %c0_21, %c0_22, %c0_23] : memref<1x1x8x128xf32, #tpu.memory_space<vmem>>, vector<1x1x8x128xf32>
    %40 = vector.shape_cast %39 : vector<1x1x8x128xf32> to vector<8x128xf32>
    %41 = vector.shape_cast %38 : vector<8x128xf32> to vector<1x1x8x128xf32>
    tpu.vector_store %arg7[%c0_20, %c0_21, %c0_22, %c0_23], %41 {strides = array<i32>} : memref<1x1x8x128xf32, #tpu.memory_space<vmem>>, vector<1x1x8x128xf32>,
    return
  }
  func.func @transform_0(%arg0: i32, %arg1: i32) -> (i32, i32, i32, i32) {
    %c0_i32 = arith.constant 0 : i32
    %c0_i32_0 = arith.constant 0 : i32
    %c0_i32_1 = arith.constant 0 : i32
    return %arg0, %arg1, %c0_i32, %c0_i32_0 : i32, i32, i32, i32
  }
  func.func @transform_1(%arg0: i32, %arg1: i32) -> (i32, i32) {
    %c0_i32 = arith.constant 0 : i32
    %c0_i32_0 = arith.constant 0 : i32
    %c0_i32_1 = arith.constant 0 : i32
    return %c0_i32, %c0_i32_0 : i32, i32
  }
  func.func @transform_2(%arg0: i32, %arg1: i32) -> (i32, i32) {
    %c0_i32 = arith.constant 0 : i32
    %c0_i32_0 = arith.constant 0 : i32
    %c0_i32_1 = arith.constant 0 : i32
    return %c0_i32, %c0_i32_0 : i32, i32
  }
  func.func @transform_3(%arg0: i32, %arg1: i32) -> (i32, i32) {
    %c0_i32 = arith.constant 0 : i32
    %c0_i32_0 = arith.constant 0 : i32
    %c0_i32_1 = arith.constant 0 : i32
    return %c0_i32, %c0_i32_0 : i32, i32
  }
  func.func @transform_4(%arg0: i32, %arg1: i32) -> (i32, i32, i32, i32) {
    %c0_i32 = arith.constant 0 : i32
    %c0_i32_0 = arith.constant 0 : i32
    %c0_i32_1 = arith.constant 0 : i32
    return %arg0, %arg1, %c0_i32, %c0_i32_0 : i32, i32, i32, i32
  }
  func.func @transform_5(%arg0: i32, %arg1: i32) -> (i32, i32, i32, i32) {
    %c0_i32 = arith.constant 0 : i32
    %c0_i32_0 = arith.constant 0 : i32
    %c0_i32_1 = arith.constant 0 : i32
    return %arg0, %arg1, %c0_i32, %c0_i32_0 : i32, i32, i32, i32
  }
}

module attributes {stable_mosaic.version = 11 : i64} {
  func.func @_finalize_kernel(%arg0: i32, %arg1: i32, %arg2: memref<1x8x8x128xf32, #tpu.memory_space<vmem>>, %arg3: memref<2x128xf32, #tpu.memory_space<vmem>>, %arg4: memref<1x8x8x4xf32, #tpu.memory_space<vmem>>, %arg5: memref<4x8xf32, #tpu.memory_space<vmem>>, %arg6: memref<1x8xf32, #tpu.memory_space<vmem>>, %arg7: memref<1x8x8x8xf32, #tpu.memory_space<vmem>>) attributes {dimension_semantics = [#tpu.dimension_semantics<parallel>, #tpu.dimension_semantics<parallel>], iteration_bounds = array<i64: 2, 1>, scalar_prefetch = 0 : i64, scratch_operands = 0 : i64, tpu.core_type = #tpu.core_type<tc>, window_params = [{transform_indices = @transform_0, window_bounds = array<i64: 1, 8, 8, 128>}, {pipeline_mode = #tpu.pipeline_mode<synchronous>, transform_indices = @transform_1, window_bounds = array<i64: 2, 128>}, {transform_indices = @transform_2, window_bounds = array<i64: 1, 8, 8, 4>}, {pipeline_mode = #tpu.pipeline_mode<synchronous>, transform_indices = @transform_3, window_bounds = array<i64: 4, 8>}, {pipeline_mode = #tpu.pipeline_mode<synchronous>, transform_indices = @transform_4, window_bounds = array<i64: 1, 8>}, {transform_indices = @transform_5, window_bounds = array<i64: 1, 8, 8, 8>}]} {
    %c0 = arith.constant 0 : index
    %c0_0 = arith.constant 0 : index
    %c0_1 = arith.constant 0 : index
    %c0_2 = arith.constant 0 : index
    %0 = vector.load %arg2[%c0, %c0_0, %c0_1, %c0_2] : memref<1x8x8x128xf32, #tpu.memory_space<vmem>>, vector<1x8x8x128xf32>
    %1 = vector.shape_cast %0 : vector<1x8x8x128xf32> to vector<8x8x128xf32>
    %c0_3 = arith.constant 0 : index
    %c0_4 = arith.constant 0 : index
    %2 = vector.load %arg3[%c0_3, %c0_4] : memref<2x128xf32, #tpu.memory_space<vmem>>, vector<1x128xf32>
    %3 = vector.shape_cast %2 : vector<1x128xf32> to vector<128xf32>
    %4 = vector.shape_cast %3 : vector<128xf32> to vector<1x1x128xf32>
    %5 = vector.broadcast %4 : vector<1x1x128xf32> to vector<8x8x128xf32>
    %6 = arith.mulf %1, %5 : vector<8x8x128xf32>
    %c1 = arith.constant 1 : index
    %c0_5 = arith.constant 0 : index
    %7 = vector.load %arg3[%c1, %c0_5] : memref<2x128xf32, #tpu.memory_space<vmem>>, vector<1x128xf32>
    %8 = vector.shape_cast %7 : vector<1x128xf32> to vector<128xf32>
    %9 = vector.shape_cast %8 : vector<128xf32> to vector<1x1x128xf32>
    %10 = vector.broadcast %9 : vector<1x1x128xf32> to vector<8x8x128xf32>
    %11 = arith.addf %6, %10 : vector<8x8x128xf32>
    %c0_6 = arith.constant 0 : index
    %c0_7 = arith.constant 0 : index
    %c0_8 = arith.constant 0 : index
    %c0_9 = arith.constant 0 : index
    %12 = vector.load %arg4[%c0_6, %c0_7, %c0_8, %c0_9] : memref<1x8x8x4xf32, #tpu.memory_space<vmem>>, vector<1x8x8x4xf32>
    %13 = vector.shape_cast %12 : vector<1x8x8x4xf32> to vector<8x8x4xf32>
    %14 = vector.shape_cast %13 : vector<8x8x4xf32> to vector<64x4xf32>
    %c0_10 = arith.constant 0 : index
    %c0_11 = arith.constant 0 : index
    %15 = vector.load %arg5[%c0_10, %c0_11] : memref<4x8xf32, #tpu.memory_space<vmem>>, vector<4x8xf32>
    %cst = arith.constant dense<0.000000e+00> : vector<64x8xf32>
    %16 = tpu.matmul %14, %15, %cst {dimension_numbers = #tpu.dot_dimension_numbers<[1], [0], [0], [1], [0, 0, 1, 1], [], []>} : vector<64x4xf32>, vector<4x8xf32>, vector<64x8xf32> -> vector<64x8xf32>
    %17 = vector.extract_strided_slice %11 {offsets = [0, 0, 0], sizes = [8, 8, 8], strides = [1, 1, 1]} : vector<8x8x128xf32> to vector<8x8x8xf32>
    %18 = vector.shape_cast %16 : vector<64x8xf32> to vector<8x8x8xf32>
    %19 = arith.addf %17, %18 : vector<8x8x8xf32>
    %c0_12 = arith.constant 0 : index
    %c0_13 = arith.constant 0 : index
    %20 = vector.load %arg6[%c0_12, %c0_13] : memref<1x8xf32, #tpu.memory_space<vmem>>, vector<1x8xf32>
    %21 = vector.shape_cast %20 : vector<1x8xf32> to vector<8xf32>
    %22 = vector.shape_cast %21 : vector<8xf32> to vector<1x1x8xf32>
    %23 = vector.broadcast %22 : vector<1x1x8xf32> to vector<8x8x8xf32>
    %24 = arith.addf %19, %23 : vector<8x8x8xf32>
    %c0_14 = arith.constant 0 : index
    %c0_15 = arith.constant 0 : index
    %c0_16 = arith.constant 0 : index
    %c0_17 = arith.constant 0 : index
    %25 = vector.load %arg7[%c0_14, %c0_15, %c0_16, %c0_17] : memref<1x8x8x8xf32, #tpu.memory_space<vmem>>, vector<1x8x8x8xf32>
    %26 = vector.shape_cast %25 : vector<1x8x8x8xf32> to vector<8x8x8xf32>
    %27 = vector.shape_cast %24 : vector<8x8x8xf32> to vector<1x8x8x8xf32>
    tpu.vector_store %arg7[%c0_14, %c0_15, %c0_16, %c0_17], %27 {strides = array<i32>} : memref<1x8x8x8xf32, #tpu.memory_space<vmem>>, vector<1x8x8x8xf32>,
    return
  }
  func.func @transform_0(%arg0: i32, %arg1: i32) -> (i32, i32, i32, i32) {
    %c0_i32 = arith.constant 0 : i32
    %c0_i32_0 = arith.constant 0 : i32
    %c0_i32_1 = arith.constant 0 : i32
    return %arg0, %arg1, %c0_i32, %c0_i32_0 : i32, i32, i32, i32
  }
  func.func @transform_1(%arg0: i32, %arg1: i32) -> (i32, i32) {
    %c0_i32 = arith.constant 0 : i32
    %c0_i32_0 = arith.constant 0 : i32
    %c0_i32_1 = arith.constant 0 : i32
    return %c0_i32, %c0_i32_0 : i32, i32
  }
  func.func @transform_2(%arg0: i32, %arg1: i32) -> (i32, i32, i32, i32) {
    %c0_i32 = arith.constant 0 : i32
    %c0_i32_0 = arith.constant 0 : i32
    %c0_i32_1 = arith.constant 0 : i32
    return %arg0, %arg1, %c0_i32, %c0_i32_0 : i32, i32, i32, i32
  }
  func.func @transform_3(%arg0: i32, %arg1: i32) -> (i32, i32) {
    %c0_i32 = arith.constant 0 : i32
    %c0_i32_0 = arith.constant 0 : i32
    %c0_i32_1 = arith.constant 0 : i32
    return %c0_i32, %c0_i32_0 : i32, i32
  }
  func.func @transform_4(%arg0: i32, %arg1: i32) -> (i32, i32) {
    %c0_i32 = arith.constant 0 : i32
    %c0_i32_0 = arith.constant 0 : i32
    %c0_i32_1 = arith.constant 0 : i32
    return %c0_i32, %c0_i32_0 : i32, i32
  }
  func.func @transform_5(%arg0: i32, %arg1: i32) -> (i32, i32, i32, i32) {
    %c0_i32 = arith.constant 0 : i32
    %c0_i32_0 = arith.constant 0 : i32
    %c0_i32_1 = arith.constant 0 : i32
    return %arg0, %arg1, %c0_i32, %c0_i32_0 : i32, i32, i32, i32
  }
}

</mosaic_0001>

<llo_original>
// kernel: bottleneck_downsampling.4
$region0: #{bottleneck_downsampling.4}
  #allocation0 [shape = 'u32[]', space=smem, size = 0x4, offset = 0x4, fixed_abs, tag = 'smem constant byte address 0x4 - core index']
  #allocation1 [shape = 'u32[144,128]{1,0:T(1,128)}', space=vmem, size = 0x12000, scoped, tag = 'internal scratch']
  %s0 = inlined_call_operand.vmem [shape: f32[2,8,2,8,8], index: 0, kind: input, shape index: {}]
  %s1 = inlined_call_operand.vmem [shape: f32[2,8,128], index: 1, kind: input, shape index: {}]
  %s2 = inlined_call_operand.vmem [shape: f32[2,128], index: 2, kind: input, shape index: {}]
  %s3 = inlined_call_operand.vmem [shape: f32[2,8,8,128], index: 3, kind: output, shape index: {0}]
  %s4 = inlined_call_operand.vmem [shape: f32[2,8,8,4], index: 4, kind: output, shape index: {1}]
  %s5 = inlined_call_operand.vmem [shape: f32[2,1,8,128], index: 5, kind: output, shape index: {2}]
  %6 = xla_tuple %s3, %s4, %s5
  %s7 = sld [smem:[#allocation0]]
  $region61: #{bottleneck_downsampling.4} parent=0
    _
  %s9 = ssub.s32 1, %s7
  %s10 = scalar_select 0, %s9, %s7
  loop: start=0, step=1, limit=4
  $region2: #{bottleneck_downsampling.4} parent=0 // loop_pre_header
    _
  $region3: #{bottleneck_downsampling.4} parent=0 // loop_header
    %s12 = sphi 0, %s16
    %p13 = scmp.ge.s32.totalorder %s12, 4
    %s19 = sphi 0, %s31
    %s20 = sphi 0, %s27
    %s21 = sphi 0, %s19
    %s22 = sphi 0, %s20
    %s23 = sphi 0, %s21
    %s24 = sphi 0, %s22
    %s36 = sphi 0, %s38
    %s39 = sphi 0, %s36
    %s40 = sphi 0, %s39
    %s56 = sphi 0, %s40
    %s60 = sphi 0, %s60
    %s62 = sphi 0, %s60
    %s63 = sphi 0, %s62
    %s77 = sphi 0, %s63
    %s81 = sphi 0, %s81
    %s83 = sphi 0, %s81
    %s84 = sphi 0, %s83
    %s98 = sphi 0, %s84
    %s106 = sphi 0, %s108
    %s109 = sphi 0, %s106
    %s110 = sphi 0, %s109
    %s126 = sphi 0, %s110
    %s134 = sphi 0, %s136
    %s137 = sphi 0, %s134
    %s138 = sphi 0, %s137
    %s154 = sphi 0, %s138
    %s162 = sphi 0, %s164
    %s165 = sphi 0, %s162
    %s166 = sphi 0, %s165
    %s182 = sphi 0, %s166
  $region4: #{bottleneck_downsampling.4} parent=0 // loop_header_branch
    %15 = sbr.rel (%p13) target = $region8
  $region5: #{bottleneck_downsampling.4} parent=0 // loop_body
    %s17 = ssub.s32 %s12, 1
    %s18 = ssub.s32 %s12, 2
    %s25 = sadd.s32 1, %s20
    %p26 = scmp.ge.s32.totalorder %s25, 1
    %s27 = scalar_select %p26, 0, %s25
    %s28 = sadd.s32 1, %s19
    %s29 = scalar_select %p26, %s28, %s19
    %p30 = scmp.ge.s32.totalorder %s29, 2
    %s31 = scalar_select %p30, 0, %s29
    %s32 = ssub.s32 %s19, %s31
    %s33 = ssub.s32 %s20, %s27
    %s34 = sor.u32 %s32, %s33
    %p35 = scmp.eq.s32.totalorder %s34, 0
    %s37 = sadd.s32 %s36, 1
    %s38 = scalar_select %p35, %s36, %s37
    %p41 = pneg %p35
    %p42 = scmp.eq.s32.totalorder %s12, 1
    %p43 = por %p41, %p42
    %p44 = scmp.ne.s32.totalorder %s36, %s39
    %p45 = scmp.eq.s32.totalorder %s12, 0
    %p46 = por %p44, %p45
    %p47 = scmp.ne.s32.totalorder %s36, %s39
    %p48 = scmp.eq.s32.totalorder %s17, 1
    %p49 = por %p47, %p48
    %p50 = scmp.ne.s32.totalorder %s39, %s40
    %p51 = scmp.eq.s32.totalorder %s17, 0
    %p52 = por %p50, %p51
    %p53 = scmp.ne.s32.totalorder %s39, %s40
    %p54 = scmp.eq.s32.totalorder %s18, 1
    %p55 = por %p53, %p54
    %p57 = scmp.ne.s32.totalorder %s40, %s56
    %p58 = scmp.eq.s32.totalorder %s18, 0
    %p59 = por %p57, %p58
    %s61 = sadd.s32 %s60, 1
    %p64 = scmp.eq.s32.totalorder %s12, 1
    %p65 = scmp.ne.s32.totalorder %s60, %s62
    %p66 = scmp.eq.s32.totalorder %s12, 0
    %p67 = por %p65, %p66
    %p68 = scmp.ne.s32.totalorder %s60, %s62
    %p69 = scmp.eq.s32.totalorder %s17, 1
    %p70 = por %p68, %p69
    %p71 = scmp.ne.s32.totalorder %s62, %s63
    %p72 = scmp.eq.s32.totalorder %s17, 0
    %p73 = por %p71, %p72
    %p74 = scmp.ne.s32.totalorder %s62, %s63
    %p75 = scmp.eq.s32.totalorder %s18, 1
    %p76 = por %p74, %p75
    %p78 = scmp.ne.s32.totalorder %s63, %s77
    %p79 = scmp.eq.s32.totalorder %s18, 0
    %p80 = por %p78, %p79
    %s82 = sadd.s32 %s81, 1
    %p85 = scmp.eq.s32.totalorder %s12, 1
    %p86 = scmp.ne.s32.totalorder %s81, %s83
    %p87 = scmp.eq.s32.totalorder %s12, 0
    %p88 = por %p86, %p87
    %p89 = scmp.ne.s32.totalorder %s81, %s83
    %p90 = scmp.eq.s32.totalorder %s17, 1
    %p91 = por %p89, %p90
    %p92 = scmp.ne.s32.totalorder %s83, %s84
    %p93 = scmp.eq.s32.totalorder %s17, 0
    %p94 = por %p92, %p93
    %p95 = scmp.ne.s32.totalorder %s83, %s84
    %p96 = scmp.eq.s32.totalorder %s18, 1
    %p97 = por %p95, %p96
    %p99 = scmp.ne.s32.totalorder %s84, %s98
    %p100 = scmp.eq.s32.totalorder %s18, 0
    %p101 = por %p99, %p100
    %s102 = ssub.s32 %s19, %s31
    %s103 = ssub.s32 %s20, %s27
    %s104 = sor.u32 %s102, %s103
    %p105 = scmp.eq.s32.totalorder %s104, 0
    %s107 = sadd.s32 %s106, 1
    %s108 = scalar_select %p105, %s106, %s107
    %p111 = pneg %p105
    %p112 = scmp.eq.s32.totalorder %s12, 1
    %p113 = por %p111, %p112
    %p114 = scmp.ne.s32.totalorder %s106, %s109
    %p115 = scmp.eq.s32.totalorder %s12, 0
    %p116 = por %p114, %p115
    %p117 = scmp.ne.s32.totalorder %s106, %s109
    %p118 = scmp.eq.s32.totalorder %s17, 1
    %p119 = por %p117, %p118
    %p120 = scmp.ne.s32.totalorder %s109, %s110
    %p121 = scmp.eq.s32.totalorder %s17, 0
    %p122 = por %p120, %p121
    %p123 = scmp.ne.s32.totalorder %s109, %s110
    %p124 = scmp.eq.s32.totalorder %s18, 1
    %p125 = por %p123, %p124
    %p127 = scmp.ne.s32.totalorder %s110, %s126
    %p128 = scmp.eq.s32.totalorder %s18, 0
    %p129 = por %p127, %p128
    %s130 = ssub.s32 %s19, %s31
    %s131 = ssub.s32 %s20, %s27
    %s132 = sor.u32 %s130, %s131
    %p133 = scmp.eq.s32.totalorder %s132, 0
    %s135 = sadd.s32 %s134, 1
    %s136 = scalar_select %p133, %s134, %s135
    %p139 = pneg %p133
    %p140 = scmp.eq.s32.totalorder %s12, 1
    %p141 = por %p139, %p140
    %p142 = scmp.ne.s32.totalorder %s134, %s137
    %p143 = scmp.eq.s32.totalorder %s12, 0
    %p144 = por %p142, %p143
    %p145 = scmp.ne.s32.totalorder %s134, %s137
    %p146 = scmp.eq.s32.totalorder %s17, 1
    %p147 = por %p145, %p146
    %p148 = scmp.ne.s32.totalorder %s137, %s138
    %p149 = scmp.eq.s32.totalorder %s17, 0
    %p150 = por %p148, %p149
    %p151 = scmp.ne.s32.totalorder %s137, %s138
    %p152 = scmp.eq.s32.totalorder %s18, 1
    %p153 = por %p151, %p152
    %p155 = scmp.ne.s32.totalorder %s138, %s154
    %p156 = scmp.eq.s32.totalorder %s18, 0
    %p157 = por %p155, %p156
    %s158 = ssub.s32 %s19, %s31
    %s159 = ssub.s32 %s20, %s27
    %s160 = sor.u32 %s158, %s159
    %p161 = scmp.eq.s32.totalorder %s160, 0
    %s163 = sadd.s32 %s162, 1
    %s164 = scalar_select %p161, %s162, %s163
    %p167 = pneg %p161
    %p168 = scmp.eq.s32.totalorder %s12, 1
    %p169 = por %p167, %p168
    %p170 = scmp.ne.s32.totalorder %s162, %s165
    %p171 = scmp.eq.s32.totalorder %s12, 0
    %p172 = por %p170, %p171
    %p173 = scmp.ne.s32.totalorder %s162, %s165
    %p174 = scmp.eq.s32.totalorder %s17, 1
    %p175 = por %p173, %p174
    %p176 = scmp.ne.s32.totalorder %s165, %s166
    %p177 = scmp.eq.s32.totalorder %s17, 0
    %p178 = por %p176, %p177
    %p179 = scmp.ne.s32.totalorder %s165, %s166
    %p180 = scmp.eq.s32.totalorder %s18, 1
    %p181 = por %p179, %p180
    %p183 = scmp.ne.s32.totalorder %s166, %s182
    %p184 = scmp.eq.s32.totalorder %s18, 0
    %p185 = por %p183, %p184
    %p186 = scmp.le.s32.totalorder 1, %s12
    %p187 = scmp.lt.s32.totalorder %s12, 3
    %p188 = pnand %p186, %p187
    %p189 = pneg %p188
    // Predicated region
    $region9: #{bottleneck_downsampling.4} parent=5 // pred_check
      _
    $region10: #{bottleneck_downsampling.4} parent=5 // pred_check_branch
      %191 = sbr.rel (%p188) target = $region12
    $region11: #{bottleneck_downsampling.4} parent=5 // pred_region
      %s192 = ssub.s32 %s12, 1
      // Predicated region
      $region13: #{bottleneck_downsampling.4} parent=11 // pred_check
        %p193 = pneg %p73
      $region14: #{bottleneck_downsampling.4} parent=11 // pred_check_branch
        %195 = sbr.rel (%p193) target = $region16
      $region15: #{bottleneck_downsampling.4} parent=11 // pred_region
        _
      $region16: #{bottleneck_downsampling.4} parent=11 // pred_fallthru
        _
      // Predicated region
      $region17: #{bottleneck_downsampling.4} parent=11 // pred_check
        %p196 = pneg %p94
      $region18: #{bottleneck_downsampling.4} parent=11 // pred_check_branch
        %198 = sbr.rel (%p196) target = $region20
      $region19: #{bottleneck_downsampling.4} parent=11 // pred_region
        _
      $region20: #{bottleneck_downsampling.4} parent=11 // pred_fallthru
        _
    $region12: #{bottleneck_downsampling.4} parent=5 // pred_fallthru
      _
    %p199 = scmp.lt.s32.totalorder %s12, 2
    // Predicated region
    $region21: #{bottleneck_downsampling.4} parent=5 // pred_check
      %p200 = pneg %p199
    $region22: #{bottleneck_downsampling.4} parent=5 // pred_check_branch
      %202 = sbr.rel (%p200) target = $region24
    $region23: #{bottleneck_downsampling.4} parent=5 // pred_region
      // Predicated region
      $region25: #{bottleneck_downsampling.4} parent=23 // pred_check
        %p203 = pneg %p46
      $region26: #{bottleneck_downsampling.4} parent=23 // pred_check_branch
        %205 = sbr.rel (%p203) target = $region28
      $region27: #{bottleneck_downsampling.4} parent=23 // pred_region
        %s206 = smul.u32 8, %s20
        %p207 = scmp.lt.s32.totalorder %s19, 1
        %s208 = scalar_select %p207, %s19, 1
        %p209 = scmp.lt.s32.totalorder %s206, 7
        %s210 = scalar_select %p209, %s206, 7
        %s211 = smul.addr %s210, 2
        %s212 = smul.addr %s208, 16
        %s213 = sadd.s32 %s211, %s212
        %s214 = smul.addr %s213, 8
        %s215 = scalar_lea.vmem %s0, %s214
        %s216 = smul.u32 8, %s20
      $region28: #{bottleneck_downsampling.4} parent=23 // pred_fallthru
        _
    $region24: #{bottleneck_downsampling.4} parent=5 // pred_fallthru
      _
    %p217 = scmp.le.s32.totalorder 1, %s12
    %p218 = scmp.lt.s32.totalorder %s12, 3
    %p219 = pnand %p217, %p218
    %p220 = pneg %p219
    // Predicated region
    $region29: #{bottleneck_downsampling.4} parent=5 // pred_check
      _
    $region30: #{bottleneck_downsampling.4} parent=5 // pred_check_branch
      %222 = sbr.rel (%p219) target = $region32
    $region31: #{bottleneck_downsampling.4} parent=5 // pred_region
      %s223 = ssub.s32 %s12, 1
      %s224 = smul.u32 8, %s22
      %p225 = scmp.lt.s32.totalorder %s21, 1
      %s226 = scalar_select %p225, %s21, 1
      %p227 = scmp.lt.s32.totalorder %s224, 7
      %s228 = scalar_select %p227, %s224, 7
      %s229 = smul.addr %s228, 2
      %s230 = smul.addr %s226, 16
      %s231 = sadd.s32 %s229, %s230
      %s232 = smul.addr %s231, 8
      %s233 = scalar_lea.vmem %s0, %s232
      %p234 = pneg %p52
      %p235 = pneg %p49
      %p236 = pneg %p73
      %p237 = pneg %p70
      %p238 = pneg %p94
      %p239 = pneg %p91
      %p240 = pneg %p122
      %p241 = pneg %p119
      %s242 = smul.u32 8, %s22
      %p243 = scmp.lt.s32.totalorder %s21, 1
      %s244 = scalar_select %p243, %s21, 1
      %p245 = scmp.lt.s32.totalorder %s242, 7
      %s246 = scalar_select %p245, %s242, 7
      %s247 = smul.addr %s244, 8
      %s248 = sadd.s32 %s246, %s247
      %s249 = smul.addr %s248, 8
      %s250 = scalar_lea.vmem %s3, %s249
      %p251 = pneg %p150
      %p252 = pneg %p147
      %s253 = smul.u32 8, %s22
      %p254 = scmp.lt.s32.totalorder %s21, 1
      %s255 = scalar_select %p254, %s21, 1
      %p256 = scmp.lt.s32.totalorder %s253, 7
      %s257 = scalar_select %p256, %s253, 7
      %s258 = smul.addr %s255, 8
      %s259 = sadd.s32 %s257, %s258
      %s260 = smul.addr %s259, 8
      %s261 = scalar_lea.vmem %s4, %s260
      %p262 = pneg %p178
      %p263 = pneg %p175
      %p264 = scmp.lt.s32.totalorder %s21, 1
      %s265 = scalar_select %p264, %s21, 1
      %p266 = scmp.lt.s32.totalorder %s22, 0
      %s267 = scalar_select %p266, %s22, 0
      %s268 = sadd.s32 %s267, %s265
      %s269 = smul.addr %s268, 8
      %s270 = scalar_lea.vmem %s5, %s269
      %s271 = smul.u32 8, %s22
      %p272 = scmp.lt.s32.totalorder %s21, 1
      %s273 = scalar_select %p272, %s21, 1
      %p274 = scmp.lt.s32.totalorder %s271, 7
      %s275 = scalar_select %p274, %s271, 7
      %s276 = smul.addr %s275, 2
      %s277 = smul.addr %s273, 16
      %s278 = sadd.s32 %s276, %s277
      %s279 = smul.addr %s278, 8
      %s280 = scalar_lea.vmem %s0, %s279
      %s281 = smul.u32 8, %s22
      %s282 = smul.u32 8, %s22
      %p283 = scmp.lt.s32.totalorder %s21, 1
      %s284 = scalar_select %p283, %s21, 1
      %p285 = scmp.lt.s32.totalorder %s282, 7
      %s286 = scalar_select %p285, %s282, 7
      %s287 = smul.addr %s284, 8
      %s288 = sadd.s32 %s286, %s287
      %s289 = smul.addr %s288, 8
      %s290 = scalar_lea.vmem %s3, %s289
      %s291 = smul.u32 8, %s22
      %s292 = smul.u32 8, %s22
      %p293 = scmp.lt.s32.totalorder %s21, 1
      %s294 = scalar_select %p293, %s21, 1
      %p295 = scmp.lt.s32.totalorder %s292, 7
      %s296 = scalar_select %p295, %s292, 7
      %s297 = smul.addr %s294, 8
      %s298 = sadd.s32 %s296, %s297
      %s299 = smul.addr %s298, 8
      %s300 = scalar_lea.vmem %s4, %s299
      %s301 = smul.u32 8, %s22
      %p302 = scmp.lt.s32.totalorder %s21, 1
      %s303 = scalar_select %p302, %s21, 1
      %p304 = scmp.lt.s32.totalorder %s22, 0
      %s305 = scalar_select %p304, %s22, 0
      %s306 = sadd.s32 %s305, %s303
      %s307 = smul.addr %s306, 8
      %s308 = scalar_lea.vmem %s5, %s307
      %v309 = vld [vmem:[%s280] sm:$0xff]
      %v310 = vld [vmem:[%s280 + $0x8] sm:$0xff]
      %v311 = vld [vmem:[%s280 + $0x10] sm:$0xff]
      %v312 = vld [vmem:[%s280 + $0x18] sm:$0xff]
      %v313 = vld [vmem:[%s280 + $0x20] sm:$0xff]
      %v314 = vld [vmem:[%s280 + $0x28] sm:$0xff]
      %v315 = vld [vmem:[%s280 + $0x30] sm:$0xff]
      %v316 = vld [vmem:[%s280 + $0x38] sm:$0xff]
      %v317 = vld [vmem:[%s280 + $0x40] sm:$0xff]
      %v318 = vld [vmem:[%s280 + $0x48] sm:$0xff]
      %v319 = vld [vmem:[%s280 + $0x50] sm:$0xff]
      %v320 = vld [vmem:[%s280 + $0x58] sm:$0xff]
      %v321 = vld [vmem:[%s280 + $0x60] sm:$0xff]
      %v322 = vld [vmem:[%s280 + $0x68] sm:$0xff]
      %v323 = vld [vmem:[%s280 + $0x70] sm:$0xff]
      %v324 = vld [vmem:[%s280 + $0x78] sm:$0xff]
      %v325 = vld [vmem:[%s1] sm:$0xff]
      %s326 = scalar_lea.vmem %s1, 8
      %v327 = vld [vmem:[%s326] sm:$0xff]
      %vm328 = vcmask 64512
      %v330 = vsel %vm328, %v310, 0
      %v333 = vsel %vm328, %v312, 0
      %v336 = vsel %vm328, %v314, 0
      %v339 = vsel %vm328, %v316, 0
      %v342 = vsel %vm328, %v318, 0
      %v345 = vsel %vm328, %v320, 0
      %v348 = vsel %vm328, %v322, 0
      %v351 = vsel %vm328, %v324, 0
      %353 = vmatprep.subr.mxu0 0.0
      %354 = vmatpush1.msra.mxu0 0.0
      %355 = vmatprep.subr.mxu0 0.0
      %356 = vmatpush1.msra.mxu0 0.0
      %357 = vmatprep.subr.mxu0 0.0
      %358 = vmatpush1.msra.mxu0 0.0
      %359 = vmatprep.subr.mxu0 0.0
      %360 = vmatpush1.msra.mxu0 0.0
      %361 = vmatprep.subr.mxu0 0.0
      %362 = vmatpush1.msra.mxu0 0.0
      %363 = vmatprep.subr.mxu0 0.0
      %364 = vmatpush1.msra.mxu0 0.0
      %365 = vmatprep.subr.mxu0 0.0
      %366 = vmatpush1.msra.mxu0 0.0
      %367 = vmatprep.subr.mxu0 0.0
      %368 = vmatpush1.msra.mxu0 0.0
      %369 = vmatprep.subr.mxu0 0.0
      %370 = vmatpush1.msra.mxu0 0.0
      %371 = vmatprep.subr.mxu0 0.0
      %372 = vmatpush1.msra.mxu0 0.0
      %373 = vmatprep.subr.mxu0 0.0
      %374 = vmatpush1.msra.mxu0 0.0
      %375 = vmatprep.subr.mxu0 0.0
      %376 = vmatpush1.msra.mxu0 0.0
      %377 = vmatprep.subr.mxu0 0.0
      %378 = vmatpush1.msra.mxu0 0.0
      %379 = vmatprep.subr.mxu0 0.0
      %380 = vmatpush1.msra.mxu0 0.0
      %381 = vmatprep.subr.mxu0 0.0
      %382 = vmatpush1.msra.mxu0 0.0
      %383 = vmatprep.subr.mxu0 0.0
      %384 = vmatpush1.msra.mxu0 %v327
      %385 = vmatprep.subr.mxu0 0.0
      %386 = vmatpush2.msra.mxu0 0.0
      %387 = vmatprep.subr.mxu0 0.0
      %388 = vmatpush2.msra.mxu0 0.0
      %389 = vmatprep.subr.mxu0 0.0
      %390 = vmatpush2.msra.mxu0 0.0
      %391 = vmatprep.subr.mxu0 0.0
      %392 = vmatpush2.msra.mxu0 0.0
      %393 = vmatprep.subr.mxu0 0.0
      %394 = vmatpush2.msra.mxu0 0.0
      %395 = vmatprep.subr.mxu0 0.0
      %396 = vmatpush2.msra.mxu0 0.0
      %397 = vmatprep.subr.mxu0 0.0
      %398 = vmatpush2.msra.mxu0 0.0
      %399 = vmatprep.subr.mxu0 0.0
      %400 = vmatpush2.msra.mxu0 0.0
      %401 = vmatprep.subr.mxu0 0.0
      %402 = vmatpush2.msra.mxu0 0.0
      %403 = vmatprep.subr.mxu0 0.0
      %404 = vmatpush2.msra.mxu0 0.0
      %405 = vmatprep.subr.mxu0 0.0
      %406 = vmatpush2.msra.mxu0 0.0
      %407 = vmatprep.subr.mxu0 0.0
      %408 = vmatpush2.msra.mxu0 0.0
      %409 = vmatprep.subr.mxu0 0.0
      %410 = vmatpush2.msra.mxu0 0.0
      %411 = vmatprep.subr.mxu0 0.0
      %412 = vmatpush2.msra.mxu0 0.0
      %413 = vmatprep.subr.mxu0 0.0
      %414 = vmatpush2.msra.mxu0 0.0
      %415 = vmatprep.subr.mxu0 0.0
      %416 = vmatpush2.msra.mxu0 0.0
      %417 = vmatprep.mubr.f32.mxu0 0.0
      %418 = vmatmul.mubr.f32.gmra.mxu0 %v330
      %v419 = vpop.f32.mrf.mxu0
      %v420 = vadd.f32 0.0, %v419
      %v421 = vpop.f32.mrf.mxu0
      %422 = vmatprep.mubr.f32.mxu0 0.0
      %423 = vmatmul.mubr.f32.gmra.mxu0 %v333
      %v424 = vpop.f32.mrf.mxu0
      %v425 = vadd.f32 0.0, %v424
      %v426 = vpop.f32.mrf.mxu0
      %427 = vmatprep.mubr.f32.mxu0 0.0
      %428 = vmatmul.mubr.f32.gmra.mxu0 %v336
      %v429 = vpop.f32.mrf.mxu0
      %v430 = vadd.f32 0.0, %v429
      %v431 = vpop.f32.mrf.mxu0
      %432 = vmatprep.mubr.f32.mxu0 0.0
      %433 = vmatmul.mubr.f32.gmra.mxu0 %v339
      %v434 = vpop.f32.mrf.mxu0
      %v435 = vadd.f32 0.0, %v434
      %v436 = vpop.f32.mrf.mxu0
      %437 = vmatprep.mubr.f32.mxu0 0.0
      %438 = vmatmul.mubr.f32.gmra.mxu0 %v342
      %v439 = vpop.f32.mrf.mxu0
      %v440 = vadd.f32 0.0, %v439
      %v441 = vpop.f32.mrf.mxu0
      %442 = vmatprep.mubr.f32.mxu0 0.0
      %443 = vmatmul.mubr.f32.gmra.mxu0 %v345
      %v444 = vpop.f32.mrf.mxu0
      %v445 = vadd.f32 0.0, %v444
      %v446 = vpop.f32.mrf.mxu0
      %447 = vmatprep.mubr.f32.mxu0 0.0
      %448 = vmatmul.mubr.f32.gmra.mxu0 %v348
      %v449 = vpop.f32.mrf.mxu0
      %v450 = vadd.f32 0.0, %v449
      %v451 = vpop.f32.mrf.mxu0
      %452 = vmatprep.mubr.f32.mxu0 0.0
      %453 = vmatmul.mubr.f32.gmra.mxu0 %v351
      %v454 = vpop.f32.mrf.mxu0
      %v455 = vadd.f32 0.0, %v454
      %v456 = vpop.f32.mrf.mxu0
      %457 = vdwg.mxu0
      %v459 = vsel %vm328, %v309, 0
      %v462 = vsel %vm328, %v311, 0
      %v465 = vsel %vm328, %v313, 0
      %v468 = vsel %vm328, %v315, 0
      %v471 = vsel %vm328, %v317, 0
      %v474 = vsel %vm328, %v319, 0
      %v477 = vsel %vm328, %v321, 0
      %v480 = vsel %vm328, %v323, 0
      %482 = vmatprep.subr.mxu0 0.0
      %483 = vmatpush1.msra.mxu0 0.0
      %484 = vmatprep.subr.mxu0 0.0
      %485 = vmatpush1.msra.mxu0 0.0
      %486 = vmatprep.subr.mxu0 0.0
      %487 = vmatpush1.msra.mxu0 0.0
      %488 = vmatprep.subr.mxu0 0.0
      %489 = vmatpush1.msra.mxu0 0.0
      %490 = vmatprep.subr.mxu0 0.0
      %491 = vmatpush1.msra.mxu0 0.0
      %492 = vmatprep.subr.mxu0 0.0
      %493 = vmatpush1.msra.mxu0 0.0
      %494 = vmatprep.subr.mxu0 0.0
      %495 = vmatpush1.msra.mxu0 0.0
      %496 = vmatprep.subr.mxu0 0.0
      %497 = vmatpush1.msra.mxu0 0.0
      %498 = vmatprep.subr.mxu0 0.0
      %499 = vmatpush1.msra.mxu0 0.0
      %500 = vmatprep.subr.mxu0 0.0
      %501 = vmatpush1.msra.mxu0 0.0
      %502 = vmatprep.subr.mxu0 0.0
      %503 = vmatpush1.msra.mxu0 0.0
      %504 = vmatprep.subr.mxu0 0.0
      %505 = vmatpush1.msra.mxu0 0.0
      %506 = vmatprep.subr.mxu0 0.0
      %507 = vmatpush1.msra.mxu0 0.0
      %508 = vmatprep.subr.mxu0 0.0
      %509 = vmatpush1.msra.mxu0 0.0
      %510 = vmatprep.subr.mxu0 0.0
      %511 = vmatpush1.msra.mxu0 0.0
      %512 = vmatprep.subr.mxu0 0.0
      %513 = vmatpush1.msra.mxu0 %v325
      %514 = vmatprep.subr.mxu0 0.0
      %515 = vmatpush2.msra.mxu0 0.0
      %516 = vmatprep.subr.mxu0 0.0
      %517 = vmatpush2.msra.mxu0 0.0
      %518 = vmatprep.subr.mxu0 0.0
      %519 = vmatpush2.msra.mxu0 0.0
      %520 = vmatprep.subr.mxu0 0.0
      %521 = vmatpush2.msra.mxu0 0.0
      %522 = vmatprep.subr.mxu0 0.0
      %523 = vmatpush2.msra.mxu0 0.0
      %524 = vmatprep.subr.mxu0 0.0
      %525 = vmatpush2.msra.mxu0 0.0
      %526 = vmatprep.subr.mxu0 0.0
      %527 = vmatpush2.msra.mxu0 0.0
      %528 = vmatprep.subr.mxu0 0.0
      %529 = vmatpush2.msra.mxu0 0.0
      %530 = vmatprep.subr.mxu0 0.0
      %531 = vmatpush2.msra.mxu0 0.0
      %532 = vmatprep.subr.mxu0 0.0
      %533 = vmatpush2.msra.mxu0 0.0
      %534 = vmatprep.subr.mxu0 0.0
      %535 = vmatpush2.msra.mxu0 0.0
      %536 = vmatprep.subr.mxu0 0.0
      %537 = vmatpush2.msra.mxu0 0.0
      %538 = vmatprep.subr.mxu0 0.0
      %539 = vmatpush2.msra.mxu0 0.0
      %540 = vmatprep.subr.mxu0 0.0
      %541 = vmatpush2.msra.mxu0 0.0
      %542 = vmatprep.subr.mxu0 0.0
      %543 = vmatpush2.msra.mxu0 0.0
      %544 = vmatprep.subr.mxu0 0.0
      %545 = vmatpush2.msra.mxu0 0.0
      %546 = vmatprep.mubr.f32.mxu0 0.0
      %547 = vmatmul.mubr.f32.gmra.mxu0 %v459
      %v548 = vpop.f32.mrf.mxu0
      %v549 = vadd.f32 %v420, %v548
      %v550 = vpop.f32.mrf.mxu0
      %551 = vmatprep.mubr.f32.mxu0 0.0
      %552 = vmatmul.mubr.f32.gmra.mxu0 %v462
      %v553 = vpop.f32.mrf.mxu0
      %v554 = vadd.f32 %v425, %v553
      %v555 = vpop.f32.mrf.mxu0
      %556 = vmatprep.mubr.f32.mxu0 0.0
      %557 = vmatmul.mubr.f32.gmra.mxu0 %v465
      %v558 = vpop.f32.mrf.mxu0
      %v559 = vadd.f32 %v430, %v558
      %v560 = vpop.f32.mrf.mxu0
      %561 = vmatprep.mubr.f32.mxu0 0.0
      %562 = vmatmul.mubr.f32.gmra.mxu0 %v468
      %v563 = vpop.f32.mrf.mxu0
      %v564 = vadd.f32 %v435, %v563
      %v565 = vpop.f32.mrf.mxu0
      %566 = vmatprep.mubr.f32.mxu0 0.0
      %567 = vmatmul.mubr.f32.gmra.mxu0 %v471
      %v568 = vpop.f32.mrf.mxu0
      %v569 = vadd.f32 %v440, %v568
      %v570 = vpop.f32.mrf.mxu0
      %571 = vmatprep.mubr.f32.mxu0 0.0
      %572 = vmatmul.mubr.f32.gmra.mxu0 %v474
      %v573 = vpop.f32.mrf.mxu0
      %v574 = vadd.f32 %v445, %v573
      %v575 = vpop.f32.mrf.mxu0
      %576 = vmatprep.mubr.f32.mxu0 0.0
      %577 = vmatmul.mubr.f32.gmra.mxu0 %v477
      %v578 = vpop.f32.mrf.mxu0
      %v579 = vadd.f32 %v450, %v578
      %v580 = vpop.f32.mrf.mxu0
      %581 = vmatprep.mubr.f32.mxu0 0.0
      %582 = vmatmul.mubr.f32.gmra.mxu0 %v480
      %v583 = vpop.f32.mrf.mxu0
      %v584 = vadd.f32 %v455, %v583
      %v585 = vpop.f32.mrf.mxu0
      %586 = vdwg.mxu0
      %v587 = vld [vmem:[%s2] sm:$0x1]
      %v588 = vlaneseq
      %v589 = vshrl.u32 %v588, 7
      %v590 = vsub.s32 0, %v589
      %v591 = vrot.slane %v587, %v590
      %v592 = vadd.f32 %v549, %v591
      %v593 = vadd.f32 %v554, %v591
      %v594 = vadd.f32 %v559, %v591
      %v595 = vadd.f32 %v564, %v591
      %v596 = vadd.f32 %v569, %v591
      %v597 = vadd.f32 %v574, %v591
      %v598 = vadd.f32 %v579, %v591
      %v599 = vadd.f32 %v584, %v591
      %vm600 = vcmp.ge.f32.partialorder %v592, 0.0
      %vm601 = vcmp.ge.f32.partialorder %v593, 0.0
      %vm602 = vcmp.ge.f32.partialorder %v594, 0.0
      %vm603 = vcmp.ge.f32.partialorder %v595, 0.0
      %vm604 = vcmp.ge.f32.partialorder %v596, 0.0
      %vm605 = vcmp.ge.f32.partialorder %v597, 0.0
      %vm606 = vcmp.ge.f32.partialorder %v598, 0.0
      %vm607 = vcmp.ge.f32.partialorder %v599, 0.0
      %v608 = vld [vmem:[%s2 + $0x1] sm:$0x1]
      %v609 = vlaneseq
      %v610 = vshrl.u32 %v609, 7
      %v611 = vsub.s32 0, %v610
      %v612 = vrot.slane %v608, %v611
      %v613 = vmul.f32 %v612, %v592
      %v614 = vmul.f32 %v612, %v593
      %v615 = vmul.f32 %v612, %v594
      %v616 = vmul.f32 %v612, %v595
      %v617 = vmul.f32 %v612, %v596
      %v618 = vmul.f32 %v612, %v597
      %v619 = vmul.f32 %v612, %v598
      %v620 = vmul.f32 %v612, %v599
      %v621 = vsel %vm600, %v592, %v613
      %v622 = vsel %vm601, %v593, %v614
      %v623 = vsel %vm602, %v594, %v615
      %v624 = vsel %vm603, %v595, %v616
      %v625 = vsel %vm604, %v596, %v617
      %v626 = vsel %vm605, %v597, %v618
      %v627 = vsel %vm606, %v598, %v619
      %v628 = vsel %vm607, %v599, %v620
      %629 = vst [vmem:[%s290] sm:$0xff] %v621
      %630 = vst [vmem:[%s290 + $0x8] sm:$0xff] %v622
      %631 = vst [vmem:[%s290 + $0x10] sm:$0xff] %v623
      %632 = vst [vmem:[%s290 + $0x18] sm:$0xff] %v624
      %633 = vst [vmem:[%s290 + $0x20] sm:$0xff] %v625
      %634 = vst [vmem:[%s290 + $0x28] sm:$0xff] %v626
      %635 = vst [vmem:[%s290 + $0x30] sm:$0xff] %v627
      %636 = vst [vmem:[%s290 + $0x38] sm:$0xff] %v628
      %637 = vrot.lane.b32.xlu0 %v309, 124
      %v638 = vpop.permute.xlu0 %637
      %639 = vrot.lane.b32.xlu0 %v311, 124
      %v640 = vpop.permute.xlu0 %639
      %641 = vrot.lane.b32.xlu0 %v313, 124
      %v642 = vpop.permute.xlu0 %641
      %643 = vrot.lane.b32.xlu0 %v315, 124
      %v644 = vpop.permute.xlu0 %643
      %645 = vrot.lane.b32.xlu0 %v317, 124
      %v646 = vpop.permute.xlu0 %645
      %647 = vrot.lane.b32.xlu0 %v319, 124
      %v648 = vpop.permute.xlu0 %647
      %649 = vrot.lane.b32.xlu0 %v321, 124
      %v650 = vpop.permute.xlu0 %649
      %651 = vrot.lane.b32.xlu0 %v323, 124
      %v652 = vpop.permute.xlu0 %651
      %v661 = vmax.f32 %v309, %v638
      %v662 = vmax.f32 %v311, %v640
      %v663 = vmax.f32 %v313, %v642
      %v664 = vmax.f32 %v315, %v644
      %v665 = vmax.f32 %v317, %v646
      %v666 = vmax.f32 %v319, %v648
      %v667 = vmax.f32 %v321, %v650
      %v668 = vmax.f32 %v323, %v652
      %669 = vrot.lane.b32.xlu0 %v310, 124
      %v670 = vpop.permute.xlu0 %669
      %671 = vrot.lane.b32.xlu0 %v312, 124
      %v672 = vpop.permute.xlu0 %671
      %673 = vrot.lane.b32.xlu0 %v314, 124
      %v674 = vpop.permute.xlu0 %673
      %675 = vrot.lane.b32.xlu0 %v316, 124
      %v676 = vpop.permute.xlu0 %675
      %677 = vrot.lane.b32.xlu0 %v318, 124
      %v678 = vpop.permute.xlu0 %677
      %679 = vrot.lane.b32.xlu0 %v320, 124
      %v680 = vpop.permute.xlu0 %679
      %681 = vrot.lane.b32.xlu0 %v322, 124
      %v682 = vpop.permute.xlu0 %681
      %683 = vrot.lane.b32.xlu0 %v324, 124
      %v684 = vpop.permute.xlu0 %683
      %v693 = vmax.f32 %v310, %v670
      %v694 = vmax.f32 %v312, %v672
      %v695 = vmax.f32 %v314, %v674
      %v696 = vmax.f32 %v316, %v676
      %v697 = vmax.f32 %v318, %v678
      %v698 = vmax.f32 %v320, %v680
      %v699 = vmax.f32 %v322, %v682
      %v700 = vmax.f32 %v324, %v684
      %v701 = vmax.f32 %v661, %v693
      %v702 = vmax.f32 %v662, %v694
      %v703 = vmax.f32 %v663, %v695
      %v704 = vmax.f32 %v664, %v696
      %v705 = vmax.f32 %v665, %v697
      %v706 = vmax.f32 %v666, %v698
      %v707 = vmax.f32 %v667, %v699
      %v708 = vmax.f32 %v668, %v700
      %vm709 = vcmask 31744
      %710 = vst.msk [vmem:[%s300] sm:$0xff] %vm709, %v701
      %711 = vst.msk [vmem:[%s300 + $0x8] sm:$0xff] %vm709, %v702
      %712 = vst.msk [vmem:[%s300 + $0x10] sm:$0xff] %vm709, %v703
      %713 = vst.msk [vmem:[%s300 + $0x18] sm:$0xff] %vm709, %v704
      %714 = vst.msk [vmem:[%s300 + $0x20] sm:$0xff] %vm709, %v705
      %715 = vst.msk [vmem:[%s300 + $0x28] sm:$0xff] %vm709, %v706
      %716 = vst.msk [vmem:[%s300 + $0x30] sm:$0xff] %vm709, %v707
      %717 = vst.msk [vmem:[%s300 + $0x38] sm:$0xff] %vm709, %v708
      %v718 = vadd.f32 %v621, %v622
      %v719 = vadd.f32 %v718, %v623
      %v720 = vadd.f32 %v719, %v624
      %v721 = vadd.f32 %v720, %v625
      %v722 = vadd.f32 %v721, %v626
      %v723 = vadd.f32 %v722, %v627
      %v724 = vadd.f32 %v723, %v628
      %v725 = vrot.slane %v724, 4
      %v726 = vadd.f32 %v724, %v725
      %v727 = vrot.slane %v726, 2
      %v728 = vadd.f32 %v726, %v727
      %v729 = vrot.slane %v728, 1
      %v730 = vadd.f32 %v728, %v729
      %v731 = vmul.f32 %v621, %v621
      %v732 = vmul.f32 %v622, %v622
      %v733 = vmul.f32 %v623, %v623
      %v734 = vmul.f32 %v624, %v624
      %v735 = vmul.f32 %v625, %v625
      %v736 = vmul.f32 %v626, %v626
      %v737 = vmul.f32 %v627, %v627
      %v738 = vmul.f32 %v628, %v628
      %v739 = vadd.f32 %v731, %v732
      %v740 = vadd.f32 %v739, %v733
      %v741 = vadd.f32 %v740, %v734
      %v742 = vadd.f32 %v741, %v735
      %v743 = vadd.f32 %v742, %v736
      %v744 = vadd.f32 %v743, %v737
      %v745 = vadd.f32 %v744, %v738
      %v746 = vrot.slane %v745, 4
      %v747 = vadd.f32 %v745, %v746
      %v748 = vrot.slane %v747, 2
      %v749 = vadd.f32 %v747, %v748
      %v750 = vrot.slane %v749, 1
      %v751 = vadd.f32 %v749, %v750
      %vm752 = vcmask 1040384
      %v753 = vsel %vm752, %v730, %v751
      %vm754 = vcmask 1041408
      %v755 = vsel %vm754, %v753, 0.0
      %756 = vst [vmem:[%s308] sm:$0xff] %v755
      %s757 = smul.u32 8, %s22
      %p758 = scmp.lt.s32.totalorder %s21, 1
      %s759 = scalar_select %p758, %s21, 1
      %p760 = scmp.lt.s32.totalorder %s757, 7
      %s761 = scalar_select %p760, %s757, 7
      %s762 = smul.addr %s759, 8
      %s763 = sadd.s32 %s761, %s762
      %s764 = smul.addr %s763, 8
      %s765 = scalar_lea.vmem %s3, %s764
      %s766 = smul.u32 8, %s22
      %p767 = scmp.lt.s32.totalorder %s21, 1
      %s768 = scalar_select %p767, %s21, 1
      %p769 = scmp.lt.s32.totalorder %s766, 7
      %s770 = scalar_select %p769, %s766, 7
      %s771 = smul.addr %s768, 8
      %s772 = sadd.s32 %s770, %s771
      %s773 = smul.addr %s772, 8
      %s774 = scalar_lea.vmem %s4, %s773
      %p775 = scmp.lt.s32.totalorder %s21, 1
      %s776 = scalar_select %p775, %s21, 1
      %p777 = scmp.lt.s32.totalorder %s22, 0
      %s778 = scalar_select %p777, %s22, 0
      %s779 = sadd.s32 %s778, %s776
      %s780 = smul.addr %s779, 8
      %s781 = scalar_lea.vmem %s5, %s780
      // Predicated region
      $region33: #{bottleneck_downsampling.4} parent=31 // pred_check
        %p782 = pneg %p119
      $region34: #{bottleneck_downsampling.4} parent=31 // pred_check_branch
        %784 = sbr.rel (%p782) target = $region36
      $region35: #{bottleneck_downsampling.4} parent=31 // pred_region
        %s785 = smul.u32 8, %s22
      $region36: #{bottleneck_downsampling.4} parent=31 // pred_fallthru
        _
      // Predicated region
      $region37: #{bottleneck_downsampling.4} parent=31 // pred_check
        %p786 = pneg %p147
      $region38: #{bottleneck_downsampling.4} parent=31 // pred_check_branch
        %788 = sbr.rel (%p786) target = $region40
      $region39: #{bottleneck_downsampling.4} parent=31 // pred_region
        %s789 = smul.u32 8, %s22
      $region40: #{bottleneck_downsampling.4} parent=31 // pred_fallthru
        _
      // Predicated region
      $region41: #{bottleneck_downsampling.4} parent=31 // pred_check
        %p790 = pneg %p175
      $region42: #{bottleneck_downsampling.4} parent=31 // pred_check_branch
        %792 = sbr.rel (%p790) target = $region44
      $region43: #{bottleneck_downsampling.4} parent=31 // pred_region
        _
      $region44: #{bottleneck_downsampling.4} parent=31 // pred_fallthru
        _
    $region32: #{bottleneck_downsampling.4} parent=5 // pred_fallthru
      _
    %p793 = scmp.le.s32.totalorder 2, %s12
    // Predicated region
    $region45: #{bottleneck_downsampling.4} parent=5 // pred_check
      %p794 = pneg %p793
    $region46: #{bottleneck_downsampling.4} parent=5 // pred_check_branch
      %796 = sbr.rel (%p794) target = $region48
    $region47: #{bottleneck_downsampling.4} parent=5 // pred_region
      %s797 = ssub.s32 %s12, 2
      // Predicated region
      $region49: #{bottleneck_downsampling.4} parent=47 // pred_check
        %p798 = pneg %p125
      $region50: #{bottleneck_downsampling.4} parent=47 // pred_check_branch
        %800 = sbr.rel (%p798) target = $region52
      $region51: #{bottleneck_downsampling.4} parent=47 // pred_region
        %s801 = smul.u32 8, %s24
        %p802 = scmp.lt.s32.totalorder %s23, 1
        %s803 = scalar_select %p802, %s23, 1
        %p804 = scmp.lt.s32.totalorder %s801, 7
        %s805 = scalar_select %p804, %s801, 7
        %s806 = smul.addr %s803, 8
        %s807 = sadd.s32 %s805, %s806
        %s808 = smul.addr %s807, 8
        %s809 = scalar_lea.vmem %s3, %s808
      $region52: #{bottleneck_downsampling.4} parent=47 // pred_fallthru
        _
      // Predicated region
      $region53: #{bottleneck_downsampling.4} parent=47 // pred_check
        %p810 = pneg %p153
      $region54: #{bottleneck_downsampling.4} parent=47 // pred_check_branch
        %812 = sbr.rel (%p810) target = $region56
      $region55: #{bottleneck_downsampling.4} parent=47 // pred_region
        %s813 = smul.u32 8, %s24
        %p814 = scmp.lt.s32.totalorder %s23, 1
        %s815 = scalar_select %p814, %s23, 1
        %p816 = scmp.lt.s32.totalorder %s813, 7
        %s817 = scalar_select %p816, %s813, 7
        %s818 = smul.addr %s815, 8
        %s819 = sadd.s32 %s817, %s818
        %s820 = smul.addr %s819, 8
        %s821 = scalar_lea.vmem %s4, %s820
      $region56: #{bottleneck_downsampling.4} parent=47 // pred_fallthru
        _
      // Predicated region
      $region57: #{bottleneck_downsampling.4} parent=47 // pred_check
        %p822 = pneg %p181
      $region58: #{bottleneck_downsampling.4} parent=47 // pred_check_branch
        %824 = sbr.rel (%p822) target = $region60
      $region59: #{bottleneck_downsampling.4} parent=47 // pred_region
        %p825 = scmp.lt.s32.totalorder %s23, 1
        %s826 = scalar_select %p825, %s23, 1
        %p827 = scmp.lt.s32.totalorder %s24, 0
        %s828 = scalar_select %p827, %s24, 0
        %s829 = sadd.s32 %s828, %s826
        %s830 = smul.addr %s829, 8
        %s831 = scalar_lea.vmem %s5, %s830
      $region60: #{bottleneck_downsampling.4} parent=47 // pred_fallthru
        _
    $region48: #{bottleneck_downsampling.4} parent=5 // pred_fallthru
      _
  $region6: #{bottleneck_downsampling.4} parent=0 // loop_footer
    %s16 = sadd.s32 1, %s12
  $region7: #{bottleneck_downsampling.4} parent=0 // loop_footer_branch
    %11 = sbr.rel target = $region3
  $region8: #{bottleneck_downsampling.4} parent=0 // loop_exit
    _

// kernel: bottleneck_downsampling.6
$region0: #{bottleneck_downsampling.6}
  #allocation0 [shape = 'u32[]', space=smem, size = 0x4, offset = 0x4, fixed_abs, tag = 'smem constant byte address 0x4 - core index']
  #allocation1 [shape = 'u32[144,128]{1,0:T(1,128)}', space=vmem, size = 0x12000, scoped, tag = 'internal scratch']
  %s0 = inlined_call_operand.vmem [shape: f32[2,8,8,128], index: 0, kind: input, shape index: {}]
  %s1 = inlined_call_operand.vmem [shape: f32[2,128], index: 1, kind: input, shape index: {}]
  %s2 = inlined_call_operand.vmem [shape: f32[128,128], index: 2, kind: input, shape index: {}]
  %s3 = inlined_call_operand.vmem [shape: f32[2,128], index: 3, kind: input, shape index: {}]
  %s4 = inlined_call_operand.vmem [shape: f32[2,8,8,128], index: 4, kind: output, shape index: {0}]
  %s5 = inlined_call_operand.vmem [shape: f32[2,1,8,128], index: 5, kind: output, shape index: {1}]
  %6 = xla_tuple %s4, %s5
  %s7 = sld [smem:[#allocation0]]
  $region57: #{bottleneck_downsampling.6} parent=0
    _
  %s9 = ssub.s32 1, %s7
  %s10 = scalar_select 0, %s9, %s7
  loop: start=0, step=1, limit=4
  $region2: #{bottleneck_downsampling.6} parent=0 // loop_pre_header
    _
  $region3: #{bottleneck_downsampling.6} parent=0 // loop_header
    %s12 = sphi 0, %s16
    %p13 = scmp.ge.s32.totalorder %s12, 4
    %s19 = sphi 0, %s31
    %s20 = sphi 0, %s27
    %s21 = sphi 0, %s19
    %s22 = sphi 0, %s20
    %s23 = sphi 0, %s21
    %s24 = sphi 0, %s22
    %s36 = sphi 0, %s38
    %s39 = sphi 0, %s36
    %s40 = sphi 0, %s39
    %s56 = sphi 0, %s40
    %s60 = sphi 0, %s60
    %s62 = sphi 0, %s60
    %s63 = sphi 0, %s62
    %s77 = sphi 0, %s63
    %s81 = sphi 0, %s81
    %s83 = sphi 0, %s81
    %s84 = sphi 0, %s83
    %s98 = sphi 0, %s84
    %s102 = sphi 0, %s102
    %s104 = sphi 0, %s102
    %s105 = sphi 0, %s104
    %s119 = sphi 0, %s105
    %s127 = sphi 0, %s129
    %s130 = sphi 0, %s127
    %s131 = sphi 0, %s130
    %s147 = sphi 0, %s131
    %s155 = sphi 0, %s157
    %s158 = sphi 0, %s155
    %s159 = sphi 0, %s158
    %s175 = sphi 0, %s159
  $region4: #{bottleneck_downsampling.6} parent=0 // loop_header_branch
    %15 = sbr.rel (%p13) target = $region8
  $region5: #{bottleneck_downsampling.6} parent=0 // loop_body
    %s17 = ssub.s32 %s12, 1
    %s18 = ssub.s32 %s12, 2
    %s25 = sadd.s32 1, %s20
    %p26 = scmp.ge.s32.totalorder %s25, 1
    %s27 = scalar_select %p26, 0, %s25
    %s28 = sadd.s32 1, %s19
    %s29 = scalar_select %p26, %s28, %s19
    %p30 = scmp.ge.s32.totalorder %s29, 2
    %s31 = scalar_select %p30, 0, %s29
    %s32 = ssub.s32 %s19, %s31
    %s33 = ssub.s32 %s20, %s27
    %s34 = sor.u32 %s32, %s33
    %p35 = scmp.eq.s32.totalorder %s34, 0
    %s37 = sadd.s32 %s36, 1
    %s38 = scalar_select %p35, %s36, %s37
    %p41 = pneg %p35
    %p42 = scmp.eq.s32.totalorder %s12, 1
    %p43 = por %p41, %p42
    %p44 = scmp.ne.s32.totalorder %s36, %s39
    %p45 = scmp.eq.s32.totalorder %s12, 0
    %p46 = por %p44, %p45
    %p47 = scmp.ne.s32.totalorder %s36, %s39
    %p48 = scmp.eq.s32.totalorder %s17, 1
    %p49 = por %p47, %p48
    %p50 = scmp.ne.s32.totalorder %s39, %s40
    %p51 = scmp.eq.s32.totalorder %s17, 0
    %p52 = por %p50, %p51
    %p53 = scmp.ne.s32.totalorder %s39, %s40
    %p54 = scmp.eq.s32.totalorder %s18, 1
    %p55 = por %p53, %p54
    %p57 = scmp.ne.s32.totalorder %s40, %s56
    %p58 = scmp.eq.s32.totalorder %s18, 0
    %p59 = por %p57, %p58
    %s61 = sadd.s32 %s60, 1
    %p64 = scmp.eq.s32.totalorder %s12, 1
    %p65 = scmp.ne.s32.totalorder %s60, %s62
    %p66 = scmp.eq.s32.totalorder %s12, 0
    %p67 = por %p65, %p66
    %p68 = scmp.ne.s32.totalorder %s60, %s62
    %p69 = scmp.eq.s32.totalorder %s17, 1
    %p70 = por %p68, %p69
    %p71 = scmp.ne.s32.totalorder %s62, %s63
    %p72 = scmp.eq.s32.totalorder %s17, 0
    %p73 = por %p71, %p72
    %p74 = scmp.ne.s32.totalorder %s62, %s63
    %p75 = scmp.eq.s32.totalorder %s18, 1
    %p76 = por %p74, %p75
    %p78 = scmp.ne.s32.totalorder %s63, %s77
    %p79 = scmp.eq.s32.totalorder %s18, 0
    %p80 = por %p78, %p79
    %s82 = sadd.s32 %s81, 1
    %p85 = scmp.eq.s32.totalorder %s12, 1
    %p86 = scmp.ne.s32.totalorder %s81, %s83
    %p87 = scmp.eq.s32.totalorder %s12, 0
    %p88 = por %p86, %p87
    %p89 = scmp.ne.s32.totalorder %s81, %s83
    %p90 = scmp.eq.s32.totalorder %s17, 1
    %p91 = por %p89, %p90
    %p92 = scmp.ne.s32.totalorder %s83, %s84
    %p93 = scmp.eq.s32.totalorder %s17, 0
    %p94 = por %p92, %p93
    %p95 = scmp.ne.s32.totalorder %s83, %s84
    %p96 = scmp.eq.s32.totalorder %s18, 1
    %p97 = por %p95, %p96
    %p99 = scmp.ne.s32.totalorder %s84, %s98
    %p100 = scmp.eq.s32.totalorder %s18, 0
    %p101 = por %p99, %p100
    %s103 = sadd.s32 %s102, 1
    %p106 = scmp.eq.s32.totalorder %s12, 1
    %p107 = scmp.ne.s32.totalorder %s102, %s104
    %p108 = scmp.eq.s32.totalorder %s12, 0
    %p109 = por %p107, %p108
    %p110 = scmp.ne.s32.totalorder %s102, %s104
    %p111 = scmp.eq.s32.totalorder %s17, 1
    %p112 = por %p110, %p111
    %p113 = scmp.ne.s32.totalorder %s104, %s105
    %p114 = scmp.eq.s32.totalorder %s17, 0
    %p115 = por %p113, %p114
    %p116 = scmp.ne.s32.totalorder %s104, %s105
    %p117 = scmp.eq.s32.totalorder %s18, 1
    %p118 = por %p116, %p117
    %p120 = scmp.ne.s32.totalorder %s105, %s119
    %p121 = scmp.eq.s32.totalorder %s18, 0
    %p122 = por %p120, %p121
    %s123 = ssub.s32 %s19, %s31
    %s124 = ssub.s32 %s20, %s27
    %s125 = sor.u32 %s123, %s124
    %p126 = scmp.eq.s32.totalorder %s125, 0
    %s128 = sadd.s32 %s127, 1
    %s129 = scalar_select %p126, %s127, %s128
    %p132 = pneg %p126
    %p133 = scmp.eq.s32.totalorder %s12, 1
    %p134 = por %p132, %p133
    %p135 = scmp.ne.s32.totalorder %s127, %s130
    %p136 = scmp.eq.s32.totalorder %s12, 0
    %p137 = por %p135, %p136
    %p138 = scmp.ne.s32.totalorder %s127, %s130
    %p139 = scmp.eq.s32.totalorder %s17, 1
    %p140 = por %p138, %p139
    %p141 = scmp.ne.s32.totalorder %s130, %s131
    %p142 = scmp.eq.s32.totalorder %s17, 0
    %p143 = por %p141, %p142
    %p144 = scmp.ne.s32.totalorder %s130, %s131
    %p145 = scmp.eq.s32.totalorder %s18, 1
    %p146 = por %p144, %p145
    %p148 = scmp.ne.s32.totalorder %s131, %s147
    %p149 = scmp.eq.s32.totalorder %s18, 0
    %p150 = por %p148, %p149
    %s151 = ssub.s32 %s19, %s31
    %s152 = ssub.s32 %s20, %s27
    %s153 = sor.u32 %s151, %s152
    %p154 = scmp.eq.s32.totalorder %s153, 0
    %s156 = sadd.s32 %s155, 1
    %s157 = scalar_select %p154, %s155, %s156
    %p160 = pneg %p154
    %p161 = scmp.eq.s32.totalorder %s12, 1
    %p162 = por %p160, %p161
    %p163 = scmp.ne.s32.totalorder %s155, %s158
    %p164 = scmp.eq.s32.totalorder %s12, 0
    %p165 = por %p163, %p164
    %p166 = scmp.ne.s32.totalorder %s155, %s158
    %p167 = scmp.eq.s32.totalorder %s17, 1
    %p168 = por %p166, %p167
    %p169 = scmp.ne.s32.totalorder %s158, %s159
    %p170 = scmp.eq.s32.totalorder %s17, 0
    %p171 = por %p169, %p170
    %p172 = scmp.ne.s32.totalorder %s158, %s159
    %p173 = scmp.eq.s32.totalorder %s18, 1
    %p174 = por %p172, %p173
    %p176 = scmp.ne.s32.totalorder %s159, %s175
    %p177 = scmp.eq.s32.totalorder %s18, 0
    %p178 = por %p176, %p177
    %p179 = scmp.le.s32.totalorder 1, %s12
    %p180 = scmp.lt.s32.totalorder %s12, 3
    %p181 = pnand %p179, %p180
    %p182 = pneg %p181
    // Predicated region
    $region9: #{bottleneck_downsampling.6} parent=5 // pred_check
      _
    $region10: #{bottleneck_downsampling.6} parent=5 // pred_check_branch
      %184 = sbr.rel (%p181) target = $region12
    $region11: #{bottleneck_downsampling.6} parent=5 // pred_region
      %s185 = ssub.s32 %s12, 1
      // Predicated region
      $region13: #{bottleneck_downsampling.6} parent=11 // pred_check
        %p186 = pneg %p73
      $region14: #{bottleneck_downsampling.6} parent=11 // pred_check_branch
        %188 = sbr.rel (%p186) target = $region16
      $region15: #{bottleneck_downsampling.6} parent=11 // pred_region
        _
      $region16: #{bottleneck_downsampling.6} parent=11 // pred_fallthru
        _
      // Predicated region
      $region17: #{bottleneck_downsampling.6} parent=11 // pred_check
        %p189 = pneg %p94
      $region18: #{bottleneck_downsampling.6} parent=11 // pred_check_branch
        %191 = sbr.rel (%p189) target = $region20
      $region19: #{bottleneck_downsampling.6} parent=11 // pred_region
        _
      $region20: #{bottleneck_downsampling.6} parent=11 // pred_fallthru
        _
      // Predicated region
      $region21: #{bottleneck_downsampling.6} parent=11 // pred_check
        %p192 = pneg %p115
      $region22: #{bottleneck_downsampling.6} parent=11 // pred_check_branch
        %194 = sbr.rel (%p192) target = $region24
      $region23: #{bottleneck_downsampling.6} parent=11 // pred_region
        _
      $region24: #{bottleneck_downsampling.6} parent=11 // pred_fallthru
        _
    $region12: #{bottleneck_downsampling.6} parent=5 // pred_fallthru
      _
    %p195 = scmp.lt.s32.totalorder %s12, 2
    // Predicated region
    $region25: #{bottleneck_downsampling.6} parent=5 // pred_check
      %p196 = pneg %p195
    $region26: #{bottleneck_downsampling.6} parent=5 // pred_check_branch
      %198 = sbr.rel (%p196) target = $region28
    $region27: #{bottleneck_downsampling.6} parent=5 // pred_region
      // Predicated region
      $region29: #{bottleneck_downsampling.6} parent=27 // pred_check
        %p199 = pneg %p46
      $region30: #{bottleneck_downsampling.6} parent=27 // pred_check_branch
        %201 = sbr.rel (%p199) target = $region32
      $region31: #{bottleneck_downsampling.6} parent=27 // pred_region
        %s202 = smul.u32 8, %s20
        %p203 = scmp.lt.s32.totalorder %s19, 1
        %s204 = scalar_select %p203, %s19, 1
        %p205 = scmp.lt.s32.totalorder %s202, 7
        %s206 = scalar_select %p205, %s202, 7
        %s207 = smul.addr %s204, 8
        %s208 = sadd.s32 %s206, %s207
        %s209 = smul.addr %s208, 8
        %s210 = scalar_lea.vmem %s0, %s209
        %s211 = smul.u32 8, %s20
      $region32: #{bottleneck_downsampling.6} parent=27 // pred_fallthru
        _
    $region28: #{bottleneck_downsampling.6} parent=5 // pred_fallthru
      _
    %p212 = scmp.le.s32.totalorder 1, %s12
    %p213 = scmp.lt.s32.totalorder %s12, 3
    %p214 = pnand %p212, %p213
    %p215 = pneg %p214
    // Predicated region
    $region33: #{bottleneck_downsampling.6} parent=5 // pred_check
      _
    $region34: #{bottleneck_downsampling.6} parent=5 // pred_check_branch
      %217 = sbr.rel (%p214) target = $region36
    $region35: #{bottleneck_downsampling.6} parent=5 // pred_region
      %s218 = ssub.s32 %s12, 1
      %s219 = smul.u32 8, %s22
      %p220 = scmp.lt.s32.totalorder %s21, 1
      %s221 = scalar_select %p220, %s21, 1
      %p222 = scmp.lt.s32.totalorder %s219, 7
      %s223 = scalar_select %p222, %s219, 7
      %s224 = smul.addr %s221, 8
      %s225 = sadd.s32 %s223, %s224
      %s226 = smul.addr %s225, 8
      %s227 = scalar_lea.vmem %s0, %s226
      %p228 = pneg %p52
      %p229 = pneg %p49
      %p230 = pneg %p73
      %p231 = pneg %p70
      %p232 = pneg %p94
      %p233 = pneg %p91
      %p234 = pneg %p115
      %p235 = pneg %p112
      %p236 = pneg %p143
      %p237 = pneg %p140
      %s238 = smul.u32 8, %s22
      %p239 = scmp.lt.s32.totalorder %s21, 1
      %s240 = scalar_select %p239, %s21, 1
      %p241 = scmp.lt.s32.totalorder %s238, 7
      %s242 = scalar_select %p241, %s238, 7
      %s243 = smul.addr %s240, 8
      %s244 = sadd.s32 %s242, %s243
      %s245 = smul.addr %s244, 8
      %s246 = scalar_lea.vmem %s4, %s245
      %p247 = pneg %p171
      %p248 = pneg %p168
      %p249 = scmp.lt.s32.totalorder %s21, 1
      %s250 = scalar_select %p249, %s21, 1
      %p251 = scmp.lt.s32.totalorder %s22, 0
      %s252 = scalar_select %p251, %s22, 0
      %s253 = sadd.s32 %s252, %s250
      %s254 = smul.addr %s253, 8
      %s255 = scalar_lea.vmem %s5, %s254
      %s256 = smul.u32 8, %s22
      %p257 = scmp.lt.s32.totalorder %s21, 1
      %s258 = scalar_select %p257, %s21, 1
      %p259 = scmp.lt.s32.totalorder %s256, 7
      %s260 = scalar_select %p259, %s256, 7
      %s261 = smul.addr %s258, 8
      %s262 = sadd.s32 %s260, %s261
      %s263 = smul.addr %s262, 8
      %s264 = scalar_lea.vmem %s0, %s263
      %s265 = smul.u32 8, %s22
      %s266 = smul.u32 8, %s22
      %p267 = scmp.lt.s32.totalorder %s21, 1
      %s268 = scalar_select %p267, %s21, 1
      %p269 = scmp.lt.s32.totalorder %s266, 7
      %s270 = scalar_select %p269, %s266, 7
      %s271 = smul.addr %s268, 8
      %s272 = sadd.s32 %s270, %s271
      %s273 = smul.addr %s272, 8
      %s274 = scalar_lea.vmem %s4, %s273
      %s275 = smul.u32 8, %s22
      %p276 = scmp.lt.s32.totalorder %s21, 1
      %s277 = scalar_select %p276, %s21, 1
      %p278 = scmp.lt.s32.totalorder %s22, 0
      %s279 = scalar_select %p278, %s22, 0
      %s280 = sadd.s32 %s279, %s277
      %s281 = smul.addr %s280, 8
      %s282 = scalar_lea.vmem %s5, %s281
      %v283 = vld [vmem:[%s264] sm:$0xff]
      %v284 = vld [vmem:[%s264 + $0x8] sm:$0xff]
      %v285 = vld [vmem:[%s264 + $0x10] sm:$0xff]
      %v286 = vld [vmem:[%s264 + $0x18] sm:$0xff]
      %v287 = vld [vmem:[%s264 + $0x20] sm:$0xff]
      %v288 = vld [vmem:[%s264 + $0x28] sm:$0xff]
      %v289 = vld [vmem:[%s264 + $0x30] sm:$0xff]
      %v290 = vld [vmem:[%s264 + $0x38] sm:$0xff]
      %v291 = vld [vmem:[%s1] sm:$0x1]
      %v292 = vlaneseq
      %v293 = vshrl.u32 %v292, 7
      %v294 = vsub.s32 0, %v293
      %v295 = vrot.slane %v291, %v294
      %v296 = vmul.f32 %v283, %v295
      %v297 = vmul.f32 %v284, %v295
      %v298 = vmul.f32 %v285, %v295
      %v299 = vmul.f32 %v286, %v295
      %v300 = vmul.f32 %v287, %v295
      %v301 = vmul.f32 %v288, %v295
      %v302 = vmul.f32 %v289, %v295
      %v303 = vmul.f32 %v290, %v295
      %v304 = vld [vmem:[%s1 + $0x1] sm:$0x1]
      %v305 = vlaneseq
      %v306 = vshrl.u32 %v305, 7
      %v307 = vsub.s32 0, %v306
      %v308 = vrot.slane %v304, %v307
      %v309 = vadd.f32 %v296, %v308
      %v310 = vadd.f32 %v297, %v308
      %v311 = vadd.f32 %v298, %v308
      %v312 = vadd.f32 %v299, %v308
      %v313 = vadd.f32 %v300, %v308
      %v314 = vadd.f32 %v301, %v308
      %v315 = vadd.f32 %v302, %v308
      %v316 = vadd.f32 %v303, %v308
      %v317 = vld [vmem:[%s2] sm:$0xff]
      %v318 = vld [vmem:[%s2 + $0x8] sm:$0xff]
      %v319 = vld [vmem:[%s2 + $0x10] sm:$0xff]
      %v320 = vld [vmem:[%s2 + $0x18] sm:$0xff]
      %v321 = vld [vmem:[%s2 + $0x20] sm:$0xff]
      %v322 = vld [vmem:[%s2 + $0x28] sm:$0xff]
      %v323 = vld [vmem:[%s2 + $0x30] sm:$0xff]
      %v324 = vld [vmem:[%s2 + $0x38] sm:$0xff]
      %v325 = vld [vmem:[%s2 + $0x40] sm:$0xff]
      %v326 = vld [vmem:[%s2 + $0x48] sm:$0xff]
      %v327 = vld [vmem:[%s2 + $0x50] sm:$0xff]
      %v328 = vld [vmem:[%s2 + $0x58] sm:$0xff]
      %v329 = vld [vmem:[%s2 + $0x60] sm:$0xff]
      %v330 = vld [vmem:[%s2 + $0x68] sm:$0xff]
      %v331 = vld [vmem:[%s2 + $0x70] sm:$0xff]
      %v332 = vld [vmem:[%s2 + $0x78] sm:$0xff]
      %v333 = vld [vmem:[%s3] sm:$0x1]
      %v334 = vlaneseq
      %v335 = vshrl.u32 %v334, 7
      %v336 = vsub.s32 0, %v335
      %v337 = vrot.slane %v333, %v336
      %338 = vmatprep.subr.mxu0 0.0
      %339 = vmatpush1.msra.mxu0 %v332
      %340 = vmatprep.subr.mxu0 0.0
      %341 = vmatpush1.msra.mxu0 %v331
      %342 = vmatprep.subr.mxu0 0.0
      %343 = vmatpush1.msra.mxu0 %v330
      %344 = vmatprep.subr.mxu0 0.0
      %345 = vmatpush1.msra.mxu0 %v329
      %346 = vmatprep.subr.mxu0 0.0
      %347 = vmatpush1.msra.mxu0 %v328
      %348 = vmatprep.subr.mxu0 0.0
      %349 = vmatpush1.msra.mxu0 %v327
      %350 = vmatprep.subr.mxu0 0.0
      %351 = vmatpush1.msra.mxu0 %v326
      %352 = vmatprep.subr.mxu0 0.0
      %353 = vmatpush1.msra.mxu0 %v325
      %354 = vmatprep.subr.mxu0 0.0
      %355 = vmatpush1.msra.mxu0 %v324
      %356 = vmatprep.subr.mxu0 0.0
      %357 = vmatpush1.msra.mxu0 %v323
      %358 = vmatprep.subr.mxu0 0.0
      %359 = vmatpush1.msra.mxu0 %v322
      %360 = vmatprep.subr.mxu0 0.0
      %361 = vmatpush1.msra.mxu0 %v321
      %362 = vmatprep.subr.mxu0 0.0
      %363 = vmatpush1.msra.mxu0 %v320
      %364 = vmatprep.subr.mxu0 0.0
      %365 = vmatpush1.msra.mxu0 %v319
      %366 = vmatprep.subr.mxu0 0.0
      %367 = vmatpush1.msra.mxu0 %v318
      %368 = vmatprep.subr.mxu0 0.0
      %369 = vmatpush1.msra.mxu0 %v317
      %370 = vmatprep.subr.mxu0 0.0
      %371 = vmatpush2.msra.mxu0 0.0
      %372 = vmatprep.subr.mxu0 0.0
      %373 = vmatpush2.msra.mxu0 0.0
      %374 = vmatprep.subr.mxu0 0.0
      %375 = vmatpush2.msra.mxu0 0.0
      %376 = vmatprep.subr.mxu0 0.0
      %377 = vmatpush2.msra.mxu0 0.0
      %378 = vmatprep.subr.mxu0 0.0
      %379 = vmatpush2.msra.mxu0 0.0
      %380 = vmatprep.subr.mxu0 0.0
      %381 = vmatpush2.msra.mxu0 0.0
      %382 = vmatprep.subr.mxu0 0.0
      %383 = vmatpush2.msra.mxu0 0.0
      %384 = vmatprep.subr.mxu0 0.0
      %385 = vmatpush2.msra.mxu0 0.0
      %386 = vmatprep.subr.mxu0 0.0
      %387 = vmatpush2.msra.mxu0 0.0
      %388 = vmatprep.subr.mxu0 0.0
      %389 = vmatpush2.msra.mxu0 0.0
      %390 = vmatprep.subr.mxu0 0.0
      %391 = vmatpush2.msra.mxu0 0.0
      %392 = vmatprep.subr.mxu0 0.0
      %393 = vmatpush2.msra.mxu0 0.0
      %394 = vmatprep.subr.mxu0 0.0
      %395 = vmatpush2.msra.mxu0 0.0
      %396 = vmatprep.subr.mxu0 0.0
      %397 = vmatpush2.msra.mxu0 0.0
      %398 = vmatprep.subr.mxu0 0.0
      %399 = vmatpush2.msra.mxu0 0.0
      %400 = vmatprep.subr.mxu0 0.0
      %401 = vmatpush2.msra.mxu0 0.0
      %402 = vmatprep.mubr.f32.mxu0 0.0
      %403 = vmatmul.mubr.f32.gmra.mxu0 %v309
      %v404 = vpop.f32.mrf.mxu0
      %v405 = vadd.f32 %v337, %v404
      %v406 = vpop.f32.mrf.mxu0
      %407 = vmatprep.mubr.f32.mxu0 0.0
      %408 = vmatmul.mubr.f32.gmra.mxu0 %v310
      %v409 = vpop.f32.mrf.mxu0
      %v410 = vadd.f32 %v337, %v409
      %v411 = vpop.f32.mrf.mxu0
      %412 = vmatprep.mubr.f32.mxu0 0.0
      %413 = vmatmul.mubr.f32.gmra.mxu0 %v311
      %v414 = vpop.f32.mrf.mxu0
      %v415 = vadd.f32 %v337, %v414
      %v416 = vpop.f32.mrf.mxu0
      %417 = vmatprep.mubr.f32.mxu0 0.0
      %418 = vmatmul.mubr.f32.gmra.mxu0 %v312
      %v419 = vpop.f32.mrf.mxu0
      %v420 = vadd.f32 %v337, %v419
      %v421 = vpop.f32.mrf.mxu0
      %422 = vmatprep.mubr.f32.mxu0 0.0
      %423 = vmatmul.mubr.f32.gmra.mxu0 %v313
      %v424 = vpop.f32.mrf.mxu0
      %v425 = vadd.f32 %v337, %v424
      %v426 = vpop.f32.mrf.mxu0
      %427 = vmatprep.mubr.f32.mxu0 0.0
      %428 = vmatmul.mubr.f32.gmra.mxu0 %v314
      %v429 = vpop.f32.mrf.mxu0
      %v430 = vadd.f32 %v337, %v429
      %v431 = vpop.f32.mrf.mxu0
      %432 = vmatprep.mubr.f32.mxu0 0.0
      %433 = vmatmul.mubr.f32.gmra.mxu0 %v315
      %v434 = vpop.f32.mrf.mxu0
      %v435 = vadd.f32 %v337, %v434
      %v436 = vpop.f32.mrf.mxu0
      %437 = vmatprep.mubr.f32.mxu0 0.0
      %438 = vmatmul.mubr.f32.gmra.mxu0 %v316
      %v439 = vpop.f32.mrf.mxu0
      %v440 = vadd.f32 %v337, %v439
      %v441 = vpop.f32.mrf.mxu0
      %442 = vdwg.mxu0
      %vm443 = vcmp.ge.f32.partialorder %v405, 0.0
      %vm444 = vcmp.ge.f32.partialorder %v410, 0.0
      %vm445 = vcmp.ge.f32.partialorder %v415, 0.0
      %vm446 = vcmp.ge.f32.partialorder %v420, 0.0
      %vm447 = vcmp.ge.f32.partialorder %v425, 0.0
      %vm448 = vcmp.ge.f32.partialorder %v430, 0.0
      %vm449 = vcmp.ge.f32.partialorder %v435, 0.0
      %vm450 = vcmp.ge.f32.partialorder %v440, 0.0
      %v451 = vld [vmem:[%s3 + $0x1] sm:$0x1]
      %v452 = vlaneseq
      %v453 = vshrl.u32 %v452, 7
      %v454 = vsub.s32 0, %v453
      %v455 = vrot.slane %v451, %v454
      %v456 = vmul.f32 %v455, %v405
      %v457 = vmul.f32 %v455, %v410
      %v458 = vmul.f32 %v455, %v415
      %v459 = vmul.f32 %v455, %v420
      %v460 = vmul.f32 %v455, %v425
      %v461 = vmul.f32 %v455, %v430
      %v462 = vmul.f32 %v455, %v435
      %v463 = vmul.f32 %v455, %v440
      %v464 = vsel %vm443, %v405, %v456
      %v465 = vsel %vm444, %v410, %v457
      %v466 = vsel %vm445, %v415, %v458
      %v467 = vsel %vm446, %v420, %v459
      %v468 = vsel %vm447, %v425, %v460
      %v469 = vsel %vm448, %v430, %v461
      %v470 = vsel %vm449, %v435, %v462
      %v471 = vsel %vm450, %v440, %v463
      %472 = vst [vmem:[%s274] sm:$0xff] %v464
      %473 = vst [vmem:[%s274 + $0x8] sm:$0xff] %v465
      %474 = vst [vmem:[%s274 + $0x10] sm:$0xff] %v466
      %475 = vst [vmem:[%s274 + $0x18] sm:$0xff] %v467
      %476 = vst [vmem:[%s274 + $0x20] sm:$0xff] %v468
      %477 = vst [vmem:[%s274 + $0x28] sm:$0xff] %v469
      %478 = vst [vmem:[%s274 + $0x30] sm:$0xff] %v470
      %479 = vst [vmem:[%s274 + $0x38] sm:$0xff] %v471
      %v480 = vadd.f32 %v464, %v465
      %v481 = vadd.f32 %v480, %v466
      %v482 = vadd.f32 %v481, %v467
      %v483 = vadd.f32 %v482, %v468
      %v484 = vadd.f32 %v483, %v469
      %v485 = vadd.f32 %v484, %v470
      %v486 = vadd.f32 %v485, %v471
      %v487 = vrot.slane %v486, 4
      %v488 = vadd.f32 %v486, %v487
      %v489 = vrot.slane %v488, 2
      %v490 = vadd.f32 %v488, %v489
      %v491 = vrot.slane %v490, 1
      %v492 = vadd.f32 %v490, %v491
      %v493 = vmul.f32 %v464, %v464
      %v494 = vmul.f32 %v465, %v465
      %v495 = vmul.f32 %v466, %v466
      %v496 = vmul.f32 %v467, %v467
      %v497 = vmul.f32 %v468, %v468
      %v498 = vmul.f32 %v469, %v469
      %v499 = vmul.f32 %v470, %v470
      %v500 = vmul.f32 %v471, %v471
      %v501 = vadd.f32 %v493, %v494
      %v502 = vadd.f32 %v501, %v495
      %v503 = vadd.f32 %v502, %v496
      %v504 = vadd.f32 %v503, %v497
      %v505 = vadd.f32 %v504, %v498
      %v506 = vadd.f32 %v505, %v499
      %v507 = vadd.f32 %v506, %v500
      %v508 = vrot.slane %v507, 4
      %v509 = vadd.f32 %v507, %v508
      %v510 = vrot.slane %v509, 2
      %v511 = vadd.f32 %v509, %v510
      %v512 = vrot.slane %v511, 1
      %v513 = vadd.f32 %v511, %v512
      %vm514 = vcmask 1040384
      %v515 = vsel %vm514, %v492, %v513
      %vm516 = vcmask 1041408
      %v517 = vsel %vm516, %v515, 0.0
      %518 = vst [vmem:[%s282] sm:$0xff] %v517
      %s519 = smul.u32 8, %s22
      %p520 = scmp.lt.s32.totalorder %s21, 1
      %s521 = scalar_select %p520, %s21, 1
      %p522 = scmp.lt.s32.totalorder %s519, 7
      %s523 = scalar_select %p522, %s519, 7
      %s524 = smul.addr %s521, 8
      %s525 = sadd.s32 %s523, %s524
      %s526 = smul.addr %s525, 8
      %s527 = scalar_lea.vmem %s4, %s526
      %p528 = scmp.lt.s32.totalorder %s21, 1
      %s529 = scalar_select %p528, %s21, 1
      %p530 = scmp.lt.s32.totalorder %s22, 0
      %s531 = scalar_select %p530, %s22, 0
      %s532 = sadd.s32 %s531, %s529
      %s533 = smul.addr %s532, 8
      %s534 = scalar_lea.vmem %s5, %s533
      // Predicated region
      $region37: #{bottleneck_downsampling.6} parent=35 // pred_check
        %p535 = pneg %p140
      $region38: #{bottleneck_downsampling.6} parent=35 // pred_check_branch
        %537 = sbr.rel (%p535) target = $region40
      $region39: #{bottleneck_downsampling.6} parent=35 // pred_region
        %s538 = smul.u32 8, %s22
      $region40: #{bottleneck_downsampling.6} parent=35 // pred_fallthru
        _
      // Predicated region
      $region41: #{bottleneck_downsampling.6} parent=35 // pred_check
        %p539 = pneg %p168
      $region42: #{bottleneck_downsampling.6} parent=35 // pred_check_branch
        %541 = sbr.rel (%p539) target = $region44
      $region43: #{bottleneck_downsampling.6} parent=35 // pred_region
        _
      $region44: #{bottleneck_downsampling.6} parent=35 // pred_fallthru
        _
    $region36: #{bottleneck_downsampling.6} parent=5 // pred_fallthru
      _
    %p542 = scmp.le.s32.totalorder 2, %s12
    // Predicated region
    $region45: #{bottleneck_downsampling.6} parent=5 // pred_check
      %p543 = pneg %p542
    $region46: #{bottleneck_downsampling.6} parent=5 // pred_check_branch
      %545 = sbr.rel (%p543) target = $region48
    $region47: #{bottleneck_downsampling.6} parent=5 // pred_region
      %s546 = ssub.s32 %s12, 2
      // Predicated region
      $region49: #{bottleneck_downsampling.6} parent=47 // pred_check
        %p547 = pneg %p146
      $region50: #{bottleneck_downsampling.6} parent=47 // pred_check_branch
        %549 = sbr.rel (%p547) target = $region52
      $region51: #{bottleneck_downsampling.6} parent=47 // pred_region
        %s550 = smul.u32 8, %s24
        %p551 = scmp.lt.s32.totalorder %s23, 1
        %s552 = scalar_select %p551, %s23, 1
        %p553 = scmp.lt.s32.totalorder %s550, 7
        %s554 = scalar_select %p553, %s550, 7
        %s555 = smul.addr %s552, 8
        %s556 = sadd.s32 %s554, %s555
        %s557 = smul.addr %s556, 8
        %s558 = scalar_lea.vmem %s4, %s557
      $region52: #{bottleneck_downsampling.6} parent=47 // pred_fallthru
        _
      // Predicated region
      $region53: #{bottleneck_downsampling.6} parent=47 // pred_check
        %p559 = pneg %p174
      $region54: #{bottleneck_downsampling.6} parent=47 // pred_check_branch
        %561 = sbr.rel (%p559) target = $region56
      $region55: #{bottleneck_downsampling.6} parent=47 // pred_region
        %p562 = scmp.lt.s32.totalorder %s23, 1
        %s563 = scalar_select %p562, %s23, 1
        %p564 = scmp.lt.s32.totalorder %s24, 0
        %s565 = scalar_select %p564, %s24, 0
        %s566 = sadd.s32 %s565, %s563
        %s567 = smul.addr %s566, 8
        %s568 = scalar_lea.vmem %s5, %s567
      $region56: #{bottleneck_downsampling.6} parent=47 // pred_fallthru
        _
    $region48: #{bottleneck_downsampling.6} parent=5 // pred_fallthru
      _
  $region6: #{bottleneck_downsampling.6} parent=0 // loop_footer
    %s16 = sadd.s32 1, %s12
  $region7: #{bottleneck_downsampling.6} parent=0 // loop_footer_branch
    %11 = sbr.rel target = $region3
  $region8: #{bottleneck_downsampling.6} parent=0 // loop_exit
    _

// kernel: bottleneck_downsampling.7
$region0: #{bottleneck_downsampling.7}
  #allocation0 [shape = 'u32[]', space=smem, size = 0x4, offset = 0x4, fixed_abs, tag = 'smem constant byte address 0x4 - core index']
  #allocation1 [shape = 'u32[144,128]{1,0:T(1,128)}', space=vmem, size = 0x12000, scoped, tag = 'internal scratch']
  %s0 = inlined_call_operand.vmem [shape: f32[2,8,8,128], index: 0, kind: input, shape index: {}]
  %s1 = inlined_call_operand.vmem [shape: f32[2,128], index: 1, kind: input, shape index: {}]
  %s2 = inlined_call_operand.vmem [shape: f32[2,8,8,4], index: 2, kind: input, shape index: {}]
  %s3 = inlined_call_operand.vmem [shape: f32[4,8], index: 3, kind: input, shape index: {}]
  %s4 = inlined_call_operand.vmem [shape: f32[1,8], index: 4, kind: input, shape index: {}]
  %s5 = inlined_call_operand.vmem [shape: f32[2,8,8,8], index: 5, kind: output, shape index: {}]
  %s6 = sld [smem:[#allocation0]]
  $region53: #{bottleneck_downsampling.7} parent=0
    _
  %s8 = ssub.s32 1, %s6
  %s9 = scalar_select 0, %s8, %s6
  loop: start=0, step=1, limit=4
  $region2: #{bottleneck_downsampling.7} parent=0 // loop_pre_header
    _
  $region3: #{bottleneck_downsampling.7} parent=0 // loop_header
    %s11 = sphi 0, %s15
    %p12 = scmp.ge.s32.totalorder %s11, 4
    %s18 = sphi 0, %s30
    %s19 = sphi 0, %s26
    %s20 = sphi 0, %s18
    %s21 = sphi 0, %s19
    %s22 = sphi 0, %s20
    %s23 = sphi 0, %s21
    %s35 = sphi 0, %s37
    %s38 = sphi 0, %s35
    %s39 = sphi 0, %s38
    %s55 = sphi 0, %s39
    %s59 = sphi 0, %s59
    %s61 = sphi 0, %s59
    %s62 = sphi 0, %s61
    %s76 = sphi 0, %s62
    %s84 = sphi 0, %s86
    %s87 = sphi 0, %s84
    %s88 = sphi 0, %s87
    %s104 = sphi 0, %s88
    %s108 = sphi 0, %s108
    %s110 = sphi 0, %s108
    %s111 = sphi 0, %s110
    %s125 = sphi 0, %s111
    %s129 = sphi 0, %s129
    %s131 = sphi 0, %s129
    %s132 = sphi 0, %s131
    %s146 = sphi 0, %s132
    %s154 = sphi 0, %s156
    %s157 = sphi 0, %s154
    %s158 = sphi 0, %s157
    %s174 = sphi 0, %s158
  $region4: #{bottleneck_downsampling.7} parent=0 // loop_header_branch
    %14 = sbr.rel (%p12) target = $region8
  $region5: #{bottleneck_downsampling.7} parent=0 // loop_body
    %s16 = ssub.s32 %s11, 1
    %s17 = ssub.s32 %s11, 2
    %s24 = sadd.s32 1, %s19
    %p25 = scmp.ge.s32.totalorder %s24, 1
    %s26 = scalar_select %p25, 0, %s24
    %s27 = sadd.s32 1, %s18
    %s28 = scalar_select %p25, %s27, %s18
    %p29 = scmp.ge.s32.totalorder %s28, 2
    %s30 = scalar_select %p29, 0, %s28
    %s31 = ssub.s32 %s18, %s30
    %s32 = ssub.s32 %s19, %s26
    %s33 = sor.u32 %s31, %s32
    %p34 = scmp.eq.s32.totalorder %s33, 0
    %s36 = sadd.s32 %s35, 1
    %s37 = scalar_select %p34, %s35, %s36
    %p40 = pneg %p34
    %p41 = scmp.eq.s32.totalorder %s11, 1
    %p42 = por %p40, %p41
    %p43 = scmp.ne.s32.totalorder %s35, %s38
    %p44 = scmp.eq.s32.totalorder %s11, 0
    %p45 = por %p43, %p44
    %p46 = scmp.ne.s32.totalorder %s35, %s38
    %p47 = scmp.eq.s32.totalorder %s16, 1
    %p48 = por %p46, %p47
    %p49 = scmp.ne.s32.totalorder %s38, %s39
    %p50 = scmp.eq.s32.totalorder %s16, 0
    %p51 = por %p49, %p50
    %p52 = scmp.ne.s32.totalorder %s38, %s39
    %p53 = scmp.eq.s32.totalorder %s17, 1
    %p54 = por %p52, %p53
    %p56 = scmp.ne.s32.totalorder %s39, %s55
    %p57 = scmp.eq.s32.totalorder %s17, 0
    %p58 = por %p56, %p57
    %s60 = sadd.s32 %s59, 1
    %p63 = scmp.eq.s32.totalorder %s11, 1
    %p64 = scmp.ne.s32.totalorder %s59, %s61
    %p65 = scmp.eq.s32.totalorder %s11, 0
    %p66 = por %p64, %p65
    %p67 = scmp.ne.s32.totalorder %s59, %s61
    %p68 = scmp.eq.s32.totalorder %s16, 1
    %p69 = por %p67, %p68
    %p70 = scmp.ne.s32.totalorder %s61, %s62
    %p71 = scmp.eq.s32.totalorder %s16, 0
    %p72 = por %p70, %p71
    %p73 = scmp.ne.s32.totalorder %s61, %s62
    %p74 = scmp.eq.s32.totalorder %s17, 1
    %p75 = por %p73, %p74
    %p77 = scmp.ne.s32.totalorder %s62, %s76
    %p78 = scmp.eq.s32.totalorder %s17, 0
    %p79 = por %p77, %p78
    %s80 = ssub.s32 %s18, %s30
    %s81 = ssub.s32 %s19, %s26
    %s82 = sor.u32 %s80, %s81
    %p83 = scmp.eq.s32.totalorder %s82, 0
    %s85 = sadd.s32 %s84, 1
    %s86 = scalar_select %p83, %s84, %s85
    %p89 = pneg %p83
    %p90 = scmp.eq.s32.totalorder %s11, 1
    %p91 = por %p89, %p90
    %p92 = scmp.ne.s32.totalorder %s84, %s87
    %p93 = scmp.eq.s32.totalorder %s11, 0
    %p94 = por %p92, %p93
    %p95 = scmp.ne.s32.totalorder %s84, %s87
    %p96 = scmp.eq.s32.totalorder %s16, 1
    %p97 = por %p95, %p96
    %p98 = scmp.ne.s32.totalorder %s87, %s88
    %p99 = scmp.eq.s32.totalorder %s16, 0
    %p100 = por %p98, %p99
    %p101 = scmp.ne.s32.totalorder %s87, %s88
    %p102 = scmp.eq.s32.totalorder %s17, 1
    %p103 = por %p101, %p102
    %p105 = scmp.ne.s32.totalorder %s88, %s104
    %p106 = scmp.eq.s32.totalorder %s17, 0
    %p107 = por %p105, %p106
    %s109 = sadd.s32 %s108, 1
    %p112 = scmp.eq.s32.totalorder %s11, 1
    %p113 = scmp.ne.s32.totalorder %s108, %s110
    %p114 = scmp.eq.s32.totalorder %s11, 0
    %p115 = por %p113, %p114
    %p116 = scmp.ne.s32.totalorder %s108, %s110
    %p117 = scmp.eq.s32.totalorder %s16, 1
    %p118 = por %p116, %p117
    %p119 = scmp.ne.s32.totalorder %s110, %s111
    %p120 = scmp.eq.s32.totalorder %s16, 0
    %p121 = por %p119, %p120
    %p122 = scmp.ne.s32.totalorder %s110, %s111
    %p123 = scmp.eq.s32.totalorder %s17, 1
    %p124 = por %p122, %p123
    %p126 = scmp.ne.s32.totalorder %s111, %s125
    %p127 = scmp.eq.s32.totalorder %s17, 0
    %p128 = por %p126, %p127
    %s130 = sadd.s32 %s129, 1
    %p133 = scmp.eq.s32.totalorder %s11, 1
    %p134 = scmp.ne.s32.totalorder %s129, %s131
    %p135 = scmp.eq.s32.totalorder %s11, 0
    %p136 = por %p134, %p135
    %p137 = scmp.ne.s32.totalorder %s129, %s131
    %p138 = scmp.eq.s32.totalorder %s16, 1
    %p139 = por %p137, %p138
    %p140 = scmp.ne.s32.totalorder %s131, %s132
    %p141 = scmp.eq.s32.totalorder %s16, 0
    %p142 = por %p140, %p141
    %p143 = scmp.ne.s32.totalorder %s131, %s132
    %p144 = scmp.eq.s32.totalorder %s17, 1
    %p145 = por %p143, %p144
    %p147 = scmp.ne.s32.totalorder %s132, %s146
    %p148 = scmp.eq.s32.totalorder %s17, 0
    %p149 = por %p147, %p148
    %s150 = ssub.s32 %s18, %s30
    %s151 = ssub.s32 %s19, %s26
    %s152 = sor.u32 %s150, %s151
    %p153 = scmp.eq.s32.totalorder %s152, 0
    %s155 = sadd.s32 %s154, 1
    %s156 = scalar_select %p153, %s154, %s155
    %p159 = pneg %p153
    %p160 = scmp.eq.s32.totalorder %s11, 1
    %p161 = por %p159, %p160
    %p162 = scmp.ne.s32.totalorder %s154, %s157
    %p163 = scmp.eq.s32.totalorder %s11, 0
    %p164 = por %p162, %p163
    %p165 = scmp.ne.s32.totalorder %s154, %s157
    %p166 = scmp.eq.s32.totalorder %s16, 1
    %p167 = por %p165, %p166
    %p168 = scmp.ne.s32.totalorder %s157, %s158
    %p169 = scmp.eq.s32.totalorder %s16, 0
    %p170 = por %p168, %p169
    %p171 = scmp.ne.s32.totalorder %s157, %s158
    %p172 = scmp.eq.s32.totalorder %s17, 1
    %p173 = por %p171, %p172
    %p175 = scmp.ne.s32.totalorder %s158, %s174
    %p176 = scmp.eq.s32.totalorder %s17, 0
    %p177 = por %p175, %p176
    %p178 = scmp.le.s32.totalorder 1, %s11
    %p179 = scmp.lt.s32.totalorder %s11, 3
    %p180 = pnand %p178, %p179
    %p181 = pneg %p180
    // Predicated region
    $region9: #{bottleneck_downsampling.7} parent=5 // pred_check
      _
    $region10: #{bottleneck_downsampling.7} parent=5 // pred_check_branch
      %183 = sbr.rel (%p180) target = $region12
    $region11: #{bottleneck_downsampling.7} parent=5 // pred_region
      %s184 = ssub.s32 %s11, 1
      // Predicated region
      $region13: #{bottleneck_downsampling.7} parent=11 // pred_check
        %p185 = pneg %p72
      $region14: #{bottleneck_downsampling.7} parent=11 // pred_check_branch
        %187 = sbr.rel (%p185) target = $region16
      $region15: #{bottleneck_downsampling.7} parent=11 // pred_region
        _
      $region16: #{bottleneck_downsampling.7} parent=11 // pred_fallthru
        _
      // Predicated region
      $region17: #{bottleneck_downsampling.7} parent=11 // pred_check
        %p188 = pneg %p121
      $region18: #{bottleneck_downsampling.7} parent=11 // pred_check_branch
        %190 = sbr.rel (%p188) target = $region20
      $region19: #{bottleneck_downsampling.7} parent=11 // pred_region
        _
      $region20: #{bottleneck_downsampling.7} parent=11 // pred_fallthru
        _
      // Predicated region
      $region21: #{bottleneck_downsampling.7} parent=11 // pred_check
        %p191 = pneg %p142
      $region22: #{bottleneck_downsampling.7} parent=11 // pred_check_branch
        %193 = sbr.rel (%p191) target = $region24
      $region23: #{bottleneck_downsampling.7} parent=11 // pred_region
        _
      $region24: #{bottleneck_downsampling.7} parent=11 // pred_fallthru
        _
    $region12: #{bottleneck_downsampling.7} parent=5 // pred_fallthru
      _
    %p194 = scmp.lt.s32.totalorder %s11, 2
    // Predicated region
    $region25: #{bottleneck_downsampling.7} parent=5 // pred_check
      %p195 = pneg %p194
    $region26: #{bottleneck_downsampling.7} parent=5 // pred_check_branch
      %197 = sbr.rel (%p195) target = $region28
    $region27: #{bottleneck_downsampling.7} parent=5 // pred_region
      // Predicated region
      $region29: #{bottleneck_downsampling.7} parent=27 // pred_check
        %p198 = pneg %p45
      $region30: #{bottleneck_downsampling.7} parent=27 // pred_check_branch
        %200 = sbr.rel (%p198) target = $region32
      $region31: #{bottleneck_downsampling.7} parent=27 // pred_region
        %s201 = smul.u32 8, %s19
        %p202 = scmp.lt.s32.totalorder %s18, 1
        %s203 = scalar_select %p202, %s18, 1
        %p204 = scmp.lt.s32.totalorder %s201, 7
        %s205 = scalar_select %p204, %s201, 7
        %s206 = smul.addr %s203, 8
        %s207 = sadd.s32 %s205, %s206
        %s208 = smul.addr %s207, 8
        %s209 = scalar_lea.vmem %s0, %s208
        %s210 = smul.u32 8, %s19
      $region32: #{bottleneck_downsampling.7} parent=27 // pred_fallthru
        _
      // Predicated region
      $region33: #{bottleneck_downsampling.7} parent=27 // pred_check
        %p211 = pneg %p94
      $region34: #{bottleneck_downsampling.7} parent=27 // pred_check_branch
        %213 = sbr.rel (%p211) target = $region36
      $region35: #{bottleneck_downsampling.7} parent=27 // pred_region
        %s214 = smul.u32 8, %s19
        %p215 = scmp.lt.s32.totalorder %s18, 1
        %s216 = scalar_select %p215, %s18, 1
        %p217 = scmp.lt.s32.totalorder %s214, 7
        %s218 = scalar_select %p217, %s214, 7
        %s219 = smul.addr %s216, 8
        %s220 = sadd.s32 %s218, %s219
        %s221 = smul.addr %s220, 8
        %s222 = scalar_lea.vmem %s2, %s221
        %s223 = smul.u32 8, %s19
      $region36: #{bottleneck_downsampling.7} parent=27 // pred_fallthru
        _
    $region28: #{bottleneck_downsampling.7} parent=5 // pred_fallthru
      _
    %p224 = scmp.le.s32.totalorder 1, %s11
    %p225 = scmp.lt.s32.totalorder %s11, 3
    %p226 = pnand %p224, %p225
    %p227 = pneg %p226
    // Predicated region
    $region37: #{bottleneck_downsampling.7} parent=5 // pred_check
      _
    $region38: #{bottleneck_downsampling.7} parent=5 // pred_check_branch
      %229 = sbr.rel (%p226) target = $region40
    $region39: #{bottleneck_downsampling.7} parent=5 // pred_region
      %s230 = ssub.s32 %s11, 1
      %s231 = smul.u32 8, %s21
      %p232 = scmp.lt.s32.totalorder %s20, 1
      %s233 = scalar_select %p232, %s20, 1
      %p234 = scmp.lt.s32.totalorder %s231, 7
      %s235 = scalar_select %p234, %s231, 7
      %s236 = smul.addr %s233, 8
      %s237 = sadd.s32 %s235, %s236
      %s238 = smul.addr %s237, 8
      %s239 = scalar_lea.vmem %s0, %s238
      %p240 = pneg %p51
      %p241 = pneg %p48
      %p242 = pneg %p72
      %p243 = pneg %p69
      %s244 = smul.u32 8, %s21
      %p245 = scmp.lt.s32.totalorder %s20, 1
      %s246 = scalar_select %p245, %s20, 1
      %p247 = scmp.lt.s32.totalorder %s244, 7
      %s248 = scalar_select %p247, %s244, 7
      %s249 = smul.addr %s246, 8
      %s250 = sadd.s32 %s248, %s249
      %s251 = smul.addr %s250, 8
      %s252 = scalar_lea.vmem %s2, %s251
      %p253 = pneg %p100
      %p254 = pneg %p97
      %p255 = pneg %p121
      %p256 = pneg %p118
      %p257 = pneg %p142
      %p258 = pneg %p139
      %p259 = pneg %p170
      %p260 = pneg %p167
      %s261 = smul.u32 8, %s21
      %p262 = scmp.lt.s32.totalorder %s20, 1
      %s263 = scalar_select %p262, %s20, 1
      %p264 = scmp.lt.s32.totalorder %s261, 7
      %s265 = scalar_select %p264, %s261, 7
      %s266 = smul.addr %s263, 8
      %s267 = sadd.s32 %s265, %s266
      %s268 = smul.addr %s267, 8
      %s269 = scalar_lea.vmem %s5, %s268
      %s270 = smul.u32 8, %s21
      %p271 = scmp.lt.s32.totalorder %s20, 1
      %s272 = scalar_select %p271, %s20, 1
      %p273 = scmp.lt.s32.totalorder %s270, 7
      %s274 = scalar_select %p273, %s270, 7
      %s275 = smul.addr %s272, 8
      %s276 = sadd.s32 %s274, %s275
      %s277 = smul.addr %s276, 8
      %s278 = scalar_lea.vmem %s0, %s277
      %s279 = smul.u32 8, %s21
      %s280 = smul.u32 8, %s21
      %p281 = scmp.lt.s32.totalorder %s20, 1
      %s282 = scalar_select %p281, %s20, 1
      %p283 = scmp.lt.s32.totalorder %s280, 7
      %s284 = scalar_select %p283, %s280, 7
      %s285 = smul.addr %s282, 8
      %s286 = sadd.s32 %s284, %s285
      %s287 = smul.addr %s286, 8
      %s288 = scalar_lea.vmem %s2, %s287
      %s289 = smul.u32 8, %s21
      %s290 = smul.u32 8, %s21
      %p291 = scmp.lt.s32.totalorder %s20, 1
      %s292 = scalar_select %p291, %s20, 1
      %p293 = scmp.lt.s32.totalorder %s290, 7
      %s294 = scalar_select %p293, %s290, 7
      %s295 = smul.addr %s292, 8
      %s296 = sadd.s32 %s294, %s295
      %s297 = smul.addr %s296, 8
      %s298 = scalar_lea.vmem %s5, %s297
      %s299 = smul.u32 8, %s21
      %v300 = vld [vmem:[%s278] sm:$0xff]
      %v301 = vld [vmem:[%s278 + $0x8] sm:$0xff]
      %v302 = vld [vmem:[%s278 + $0x10] sm:$0xff]
      %v303 = vld [vmem:[%s278 + $0x18] sm:$0xff]
      %v304 = vld [vmem:[%s278 + $0x20] sm:$0xff]
      %v305 = vld [vmem:[%s278 + $0x28] sm:$0xff]
      %v306 = vld [vmem:[%s278 + $0x30] sm:$0xff]
      %v307 = vld [vmem:[%s278 + $0x38] sm:$0xff]
      %v308 = vld [vmem:[%s1] sm:$0x1]
      %v309 = vlaneseq
      %v310 = vshrl.u32 %v309, 7
      %v311 = vsub.s32 0, %v310
      %v312 = vrot.slane %v308, %v311
      %v313 = vmul.f32 %v300, %v312
      %v314 = vmul.f32 %v301, %v312
      %v315 = vmul.f32 %v302, %v312
      %v316 = vmul.f32 %v303, %v312
      %v317 = vmul.f32 %v304, %v312
      %v318 = vmul.f32 %v305, %v312
      %v319 = vmul.f32 %v306, %v312
      %v320 = vmul.f32 %v307, %v312
      %v321 = vld [vmem:[%s1 + $0x1] sm:$0x1]
      %v322 = vlaneseq
      %v323 = vshrl.u32 %v322, 7
      %v324 = vsub.s32 0, %v323
      %v325 = vrot.slane %v321, %v324
      %v326 = vadd.f32 %v313, %v325
      %v327 = vadd.f32 %v314, %v325
      %v328 = vadd.f32 %v315, %v325
      %v329 = vadd.f32 %v316, %v325
      %v330 = vadd.f32 %v317, %v325
      %v331 = vadd.f32 %v318, %v325
      %v332 = vadd.f32 %v319, %v325
      %v333 = vadd.f32 %v320, %v325
      %v334 = vld [vmem:[%s288] sm:$0xff]
      %v335 = vld [vmem:[%s288 + $0x8] sm:$0xff]
      %v336 = vld [vmem:[%s288 + $0x10] sm:$0xff]
      %v337 = vld [vmem:[%s288 + $0x18] sm:$0xff]
      %v338 = vld [vmem:[%s288 + $0x20] sm:$0xff]
      %v339 = vld [vmem:[%s288 + $0x28] sm:$0xff]
      %v340 = vld [vmem:[%s288 + $0x30] sm:$0xff]
      %v341 = vld [vmem:[%s288 + $0x38] sm:$0xff]
      %v342 = vld [vmem:[%s3] sm:$0xf]
      %vm343 = vcmask 31744
      %v345 = vsel %vm343, %v334, 0
      %v348 = vsel %vm343, %v335, 0
      %v351 = vsel %vm343, %v336, 0
      %v354 = vsel %vm343, %v337, 0
      %v357 = vsel %vm343, %v338, 0
      %v360 = vsel %vm343, %v339, 0
      %v363 = vsel %vm343, %v340, 0
      %v366 = vsel %vm343, %v341, 0
      %vm368 = vcmask 1043456
      %v370 = vsel %vm368, %v342, 0
      %372 = vmatprep.subr.mxu0 0.0
      %373 = vmatpush1.msra.mxu0 0.0
      %374 = vmatprep.subr.mxu0 0.0
      %375 = vmatpush1.msra.mxu0 0.0
      %376 = vmatprep.subr.mxu0 0.0
      %377 = vmatpush1.msra.mxu0 0.0
      %378 = vmatprep.subr.mxu0 0.0
      %379 = vmatpush1.msra.mxu0 0.0
      %380 = vmatprep.subr.mxu0 0.0
      %381 = vmatpush1.msra.mxu0 0.0
      %382 = vmatprep.subr.mxu0 0.0
      %383 = vmatpush1.msra.mxu0 0.0
      %384 = vmatprep.subr.mxu0 0.0
      %385 = vmatpush1.msra.mxu0 0.0
      %386 = vmatprep.subr.mxu0 0.0
      %387 = vmatpush1.msra.mxu0 0.0
      %388 = vmatprep.subr.mxu0 0.0
      %389 = vmatpush1.msra.mxu0 0.0
      %390 = vmatprep.subr.mxu0 0.0
      %391 = vmatpush1.msra.mxu0 0.0
      %392 = vmatprep.subr.mxu0 0.0
      %393 = vmatpush1.msra.mxu0 0.0
      %394 = vmatprep.subr.mxu0 0.0
      %395 = vmatpush1.msra.mxu0 0.0
      %396 = vmatprep.subr.mxu0 0.0
      %397 = vmatpush1.msra.mxu0 0.0
      %398 = vmatprep.subr.mxu0 0.0
      %399 = vmatpush1.msra.mxu0 0.0
      %400 = vmatprep.subr.mxu0 0.0
      %401 = vmatpush1.msra.mxu0 0.0
      %402 = vmatprep.subr.mxu0 0.0
      %403 = vmatpush1.msra.mxu0 %v370
      %404 = vmatprep.subr.mxu0 0.0
      %405 = vmatpush2.msra.mxu0 0.0
      %406 = vmatprep.subr.mxu0 0.0
      %407 = vmatpush2.msra.mxu0 0.0
      %408 = vmatprep.subr.mxu0 0.0
      %409 = vmatpush2.msra.mxu0 0.0
      %410 = vmatprep.subr.mxu0 0.0
      %411 = vmatpush2.msra.mxu0 0.0
      %412 = vmatprep.subr.mxu0 0.0
      %413 = vmatpush2.msra.mxu0 0.0
      %414 = vmatprep.subr.mxu0 0.0
      %415 = vmatpush2.msra.mxu0 0.0
      %416 = vmatprep.subr.mxu0 0.0
      %417 = vmatpush2.msra.mxu0 0.0
      %418 = vmatprep.subr.mxu0 0.0
      %419 = vmatpush2.msra.mxu0 0.0
      %420 = vmatprep.subr.mxu0 0.0
      %421 = vmatpush2.msra.mxu0 0.0
      %422 = vmatprep.subr.mxu0 0.0
      %423 = vmatpush2.msra.mxu0 0.0
      %424 = vmatprep.subr.mxu0 0.0
      %425 = vmatpush2.msra.mxu0 0.0
      %426 = vmatprep.subr.mxu0 0.0
      %427 = vmatpush2.msra.mxu0 0.0
      %428 = vmatprep.subr.mxu0 0.0
      %429 = vmatpush2.msra.mxu0 0.0
      %430 = vmatprep.subr.mxu0 0.0
      %431 = vmatpush2.msra.mxu0 0.0
      %432 = vmatprep.subr.mxu0 0.0
      %433 = vmatpush2.msra.mxu0 0.0
      %434 = vmatprep.subr.mxu0 0.0
      %435 = vmatpush2.msra.mxu0 0.0
      %436 = vmatprep.mubr.f32.mxu0 0.0
      %437 = vmatmul.mubr.f32.gmra.mxu0 %v345
      %v438 = vpop.f32.mrf.mxu0
      %v439 = vadd.f32 0.0, %v438
      %v440 = vpop.f32.mrf.mxu0
      %441 = vmatprep.mubr.f32.mxu0 0.0
      %442 = vmatmul.mubr.f32.gmra.mxu0 %v348
      %v443 = vpop.f32.mrf.mxu0
      %v444 = vadd.f32 0.0, %v443
      %v445 = vpop.f32.mrf.mxu0
      %446 = vmatprep.mubr.f32.mxu0 0.0
      %447 = vmatmul.mubr.f32.gmra.mxu0 %v351
      %v448 = vpop.f32.mrf.mxu0
      %v449 = vadd.f32 0.0, %v448
      %v450 = vpop.f32.mrf.mxu0
      %451 = vmatprep.mubr.f32.mxu0 0.0
      %452 = vmatmul.mubr.f32.gmra.mxu0 %v354
      %v453 = vpop.f32.mrf.mxu0
      %v454 = vadd.f32 0.0, %v453
      %v455 = vpop.f32.mrf.mxu0
      %456 = vmatprep.mubr.f32.mxu0 0.0
      %457 = vmatmul.mubr.f32.gmra.mxu0 %v357
      %v458 = vpop.f32.mrf.mxu0
      %v459 = vadd.f32 0.0, %v458
      %v460 = vpop.f32.mrf.mxu0
      %461 = vmatprep.mubr.f32.mxu0 0.0
      %462 = vmatmul.mubr.f32.gmra.mxu0 %v360
      %v463 = vpop.f32.mrf.mxu0
      %v464 = vadd.f32 0.0, %v463
      %v465 = vpop.f32.mrf.mxu0
      %466 = vmatprep.mubr.f32.mxu0 0.0
      %467 = vmatmul.mubr.f32.gmra.mxu0 %v363
      %v468 = vpop.f32.mrf.mxu0
      %v469 = vadd.f32 0.0, %v468
      %v470 = vpop.f32.mrf.mxu0
      %471 = vmatprep.mubr.f32.mxu0 0.0
      %472 = vmatmul.mubr.f32.gmra.mxu0 %v366
      %v473 = vpop.f32.mrf.mxu0
      %v474 = vadd.f32 0.0, %v473
      %v475 = vpop.f32.mrf.mxu0
      %476 = vdwg.mxu0
      %v477 = vadd.f32 %v326, %v439
      %v478 = vadd.f32 %v327, %v444
      %v479 = vadd.f32 %v328, %v449
      %v480 = vadd.f32 %v329, %v454
      %v481 = vadd.f32 %v330, %v459
      %v482 = vadd.f32 %v331, %v464
      %v483 = vadd.f32 %v332, %v469
      %v484 = vadd.f32 %v333, %v474
      %v485 = vld [vmem:[%s4] sm:$0x1]
      %v487 = vlaneseq
      %v488 = vshrl.u32 %v487, 7
      %v489 = vsub.s32 0, %v488
      %v490 = vrot.slane %v485, %v489
      %v492 = vadd.f32 %v477, %v490
      %v493 = vadd.f32 %v478, %v490
      %v494 = vadd.f32 %v479, %v490
      %v495 = vadd.f32 %v480, %v490
      %v496 = vadd.f32 %v481, %v490
      %v497 = vadd.f32 %v482, %v490
      %v498 = vadd.f32 %v483, %v490
      %v499 = vadd.f32 %v484, %v490
      %vm500 = vcmask 64512
      %501 = vst.msk [vmem:[%s298] sm:$0xff] %vm500, %v492
      %502 = vst.msk [vmem:[%s298 + $0x8] sm:$0xff] %vm500, %v493
      %503 = vst.msk [vmem:[%s298 + $0x10] sm:$0xff] %vm500, %v494
      %504 = vst.msk [vmem:[%s298 + $0x18] sm:$0xff] %vm500, %v495
      %505 = vst.msk [vmem:[%s298 + $0x20] sm:$0xff] %vm500, %v496
      %506 = vst.msk [vmem:[%s298 + $0x28] sm:$0xff] %vm500, %v497
      %507 = vst.msk [vmem:[%s298 + $0x30] sm:$0xff] %vm500, %v498
      %508 = vst.msk [vmem:[%s298 + $0x38] sm:$0xff] %vm500, %v499
      %s509 = smul.u32 8, %s21
      %p510 = scmp.lt.s32.totalorder %s20, 1
      %s511 = scalar_select %p510, %s20, 1
      %p512 = scmp.lt.s32.totalorder %s509, 7
      %s513 = scalar_select %p512, %s509, 7
      %s514 = smul.addr %s511, 8
      %s515 = sadd.s32 %s513, %s514
      %s516 = smul.addr %s515, 8
      %s517 = scalar_lea.vmem %s5, %s516
      // Predicated region
      $region41: #{bottleneck_downsampling.7} parent=39 // pred_check
        %p518 = pneg %p167
      $region42: #{bottleneck_downsampling.7} parent=39 // pred_check_branch
        %520 = sbr.rel (%p518) target = $region44
      $region43: #{bottleneck_downsampling.7} parent=39 // pred_region
        %s521 = smul.u32 8, %s21
      $region44: #{bottleneck_downsampling.7} parent=39 // pred_fallthru
        _
    $region40: #{bottleneck_downsampling.7} parent=5 // pred_fallthru
      _
    %p522 = scmp.le.s32.totalorder 2, %s11
    // Predicated region
    $region45: #{bottleneck_downsampling.7} parent=5 // pred_check
      %p523 = pneg %p522
    $region46: #{bottleneck_downsampling.7} parent=5 // pred_check_branch
      %525 = sbr.rel (%p523) target = $region48
    $region47: #{bottleneck_downsampling.7} parent=5 // pred_region
      %s526 = ssub.s32 %s11, 2
      // Predicated region
      $region49: #{bottleneck_downsampling.7} parent=47 // pred_check
        %p527 = pneg %p173
      $region50: #{bottleneck_downsampling.7} parent=47 // pred_check_branch
        %529 = sbr.rel (%p527) target = $region52
      $region51: #{bottleneck_downsampling.7} parent=47 // pred_region
        %s530 = smul.u32 8, %s23
        %p531 = scmp.lt.s32.totalorder %s22, 1
        %s532 = scalar_select %p531, %s22, 1
        %p533 = scmp.lt.s32.totalorder %s530, 7
        %s534 = scalar_select %p533, %s530, 7
        %s535 = smul.addr %s532, 8
        %s536 = sadd.s32 %s534, %s535
        %s537 = smul.addr %s536, 8
        %s538 = scalar_lea.vmem %s5, %s537
      $region52: #{bottleneck_downsampling.7} parent=47 // pred_fallthru
        _
    $region48: #{bottleneck_downsampling.7} parent=5 // pred_fallthru
      _
  $region6: #{bottleneck_downsampling.7} parent=0 // loop_footer
    %s15 = sadd.s32 1, %s11
  $region7: #{bottleneck_downsampling.7} parent=0 // loop_footer_branch
    %10 = sbr.rel target = $region3
  $region8: #{bottleneck_downsampling.7} parent=0 // loop_exit
    _

// kernel: bottleneck_downsampling.5
$region0: #{bottleneck_downsampling.5}
  #allocation0 [shape = 'u32[]', space=smem, size = 0x4, offset = 0x4, fixed_abs, tag = 'smem constant byte address 0x4 - core index']
  #allocation1 [shape = 'u32[144,128]{1,0:T(1,128)}', space=vmem, size = 0x12000, scoped, tag = 'internal scratch']
  #allocation2 [shape = 'f32[102,128]{1,0:T(8,128)}', space=vmem, size = 0xd000, scoped, tag = 'scratch operand']
  %s0 = inlined_call_operand.vmem [shape: f32[2,8,8,128], index: 0, kind: input, shape index: {}]
  %s1 = inlined_call_operand.vmem [shape: f32[2,128], index: 1, kind: input, shape index: {}]
  %s2 = inlined_call_operand.vmem [shape: f32[9,128,128], index: 2, kind: input, shape index: {}]
  %s3 = inlined_call_operand.vmem [shape: f32[2,128], index: 3, kind: input, shape index: {}]
  %s4 = inlined_call_operand.vmem [shape: f32[2,8,8,128], index: 4, kind: output, shape index: {0}]
  %s5 = inlined_call_operand.vmem [shape: f32[2,1,8,128], index: 5, kind: output, shape index: {1}]
  %6 = xla_tuple %s4, %s5
  %s7 = sld [smem:[#allocation0]]
  $region57: #{bottleneck_downsampling.5} parent=0
    _
  %s9 = ssub.s32 1, %s7
  %s10 = scalar_select 0, %s9, %s7
  loop: start=0, step=1, limit=4
  $region2: #{bottleneck_downsampling.5} parent=0 // loop_pre_header
    _
  $region3: #{bottleneck_downsampling.5} parent=0 // loop_header
    %s12 = sphi 0, %s16
    %p13 = scmp.ge.s32.totalorder %s12, 4
    %s22 = sphi 0, %s24
    %s25 = sphi 0, %s22
    %s26 = sphi 0, %s25
    %s42 = sphi 0, %s26
    %s46 = sphi 0, %s46
    %s48 = sphi 0, %s46
    %s49 = sphi 0, %s48
    %s63 = sphi 0, %s49
    %s67 = sphi 0, %s67
    %s69 = sphi 0, %s67
    %s70 = sphi 0, %s69
    %s84 = sphi 0, %s70
    %s88 = sphi 0, %s88
    %s90 = sphi 0, %s88
    %s91 = sphi 0, %s90
    %s105 = sphi 0, %s91
    %s111 = sphi 0, %s113
    %s114 = sphi 0, %s111
    %s115 = sphi 0, %s114
    %s131 = sphi 0, %s115
    %s137 = sphi 0, %s139
    %s140 = sphi 0, %s137
    %s141 = sphi 0, %s140
    %s157 = sphi 0, %s141
  $region4: #{bottleneck_downsampling.5} parent=0 // loop_header_branch
    %15 = sbr.rel (%p13) target = $region8
  $region5: #{bottleneck_downsampling.5} parent=0 // loop_body
    %s17 = ssub.s32 %s12, 1
    %s18 = ssub.s32 %s12, 2
    %s19 = sadd.s32 %s12, 1
    %s20 = ssub.s32 %s12, %s19
    %p21 = scmp.eq.s32.totalorder %s20, 0
    %s23 = sadd.s32 %s22, 1
    %s24 = scalar_select %p21, %s22, %s23
    %p27 = pneg %p21
    %p28 = scmp.eq.s32.totalorder %s12, 1
    %p29 = por %p27, %p28
    %p30 = scmp.ne.s32.totalorder %s22, %s25
    %p31 = scmp.eq.s32.totalorder %s12, 0
    %p32 = por %p30, %p31
    %p33 = scmp.ne.s32.totalorder %s22, %s25
    %p34 = scmp.eq.s32.totalorder %s17, 1
    %p35 = por %p33, %p34
    %p36 = scmp.ne.s32.totalorder %s25, %s26
    %p37 = scmp.eq.s32.totalorder %s17, 0
    %p38 = por %p36, %p37
    %p39 = scmp.ne.s32.totalorder %s25, %s26
    %p40 = scmp.eq.s32.totalorder %s18, 1
    %p41 = por %p39, %p40
    %p43 = scmp.ne.s32.totalorder %s26, %s42
    %p44 = scmp.eq.s32.totalorder %s18, 0
    %p45 = por %p43, %p44
    %s47 = sadd.s32 %s46, 1
    %p50 = scmp.eq.s32.totalorder %s12, 1
    %p51 = scmp.ne.s32.totalorder %s46, %s48
    %p52 = scmp.eq.s32.totalorder %s12, 0
    %p53 = por %p51, %p52
    %p54 = scmp.ne.s32.totalorder %s46, %s48
    %p55 = scmp.eq.s32.totalorder %s17, 1
    %p56 = por %p54, %p55
    %p57 = scmp.ne.s32.totalorder %s48, %s49
    %p58 = scmp.eq.s32.totalorder %s17, 0
    %p59 = por %p57, %p58
    %p60 = scmp.ne.s32.totalorder %s48, %s49
    %p61 = scmp.eq.s32.totalorder %s18, 1
    %p62 = por %p60, %p61
    %p64 = scmp.ne.s32.totalorder %s49, %s63
    %p65 = scmp.eq.s32.totalorder %s18, 0
    %p66 = por %p64, %p65
    %s68 = sadd.s32 %s67, 1
    %p71 = scmp.eq.s32.totalorder %s12, 1
    %p72 = scmp.ne.s32.totalorder %s67, %s69
    %p73 = scmp.eq.s32.totalorder %s12, 0
    %p74 = por %p72, %p73
    %p75 = scmp.ne.s32.totalorder %s67, %s69
    %p76 = scmp.eq.s32.totalorder %s17, 1
    %p77 = por %p75, %p76
    %p78 = scmp.ne.s32.totalorder %s69, %s70
    %p79 = scmp.eq.s32.totalorder %s17, 0
    %p80 = por %p78, %p79
    %p81 = scmp.ne.s32.totalorder %s69, %s70
    %p82 = scmp.eq.s32.totalorder %s18, 1
    %p83 = por %p81, %p82
    %p85 = scmp.ne.s32.totalorder %s70, %s84
    %p86 = scmp.eq.s32.totalorder %s18, 0
    %p87 = por %p85, %p86
    %s89 = sadd.s32 %s88, 1
    %p92 = scmp.eq.s32.totalorder %s12, 1
    %p93 = scmp.ne.s32.totalorder %s88, %s90
    %p94 = scmp.eq.s32.totalorder %s12, 0
    %p95 = por %p93, %p94
    %p96 = scmp.ne.s32.totalorder %s88, %s90
    %p97 = scmp.eq.s32.totalorder %s17, 1
    %p98 = por %p96, %p97
    %p99 = scmp.ne.s32.totalorder %s90, %s91
    %p100 = scmp.eq.s32.totalorder %s17, 0
    %p101 = por %p99, %p100
    %p102 = scmp.ne.s32.totalorder %s90, %s91
    %p103 = scmp.eq.s32.totalorder %s18, 1
    %p104 = por %p102, %p103
    %p106 = scmp.ne.s32.totalorder %s91, %s105
    %p107 = scmp.eq.s32.totalorder %s18, 0
    %p108 = por %p106, %p107
    %s109 = ssub.s32 %s12, %s19
    %p110 = scmp.eq.s32.totalorder %s109, 0
    %s112 = sadd.s32 %s111, 1
    %s113 = scalar_select %p110, %s111, %s112
    %p116 = pneg %p110
    %p117 = scmp.eq.s32.totalorder %s12, 1
    %p118 = por %p116, %p117
    %p119 = scmp.ne.s32.totalorder %s111, %s114
    %p120 = scmp.eq.s32.totalorder %s12, 0
    %p121 = por %p119, %p120
    %p122 = scmp.ne.s32.totalorder %s111, %s114
    %p123 = scmp.eq.s32.totalorder %s17, 1
    %p124 = por %p122, %p123
    %p125 = scmp.ne.s32.totalorder %s114, %s115
    %p126 = scmp.eq.s32.totalorder %s17, 0
    %p127 = por %p125, %p126
    %p128 = scmp.ne.s32.totalorder %s114, %s115
    %p129 = scmp.eq.s32.totalorder %s18, 1
    %p130 = por %p128, %p129
    %p132 = scmp.ne.s32.totalorder %s115, %s131
    %p133 = scmp.eq.s32.totalorder %s18, 0
    %p134 = por %p132, %p133
    %s135 = ssub.s32 %s12, %s19
    %p136 = scmp.eq.s32.totalorder %s135, 0
    %s138 = sadd.s32 %s137, 1
    %s139 = scalar_select %p136, %s137, %s138
    %p142 = pneg %p136
    %p143 = scmp.eq.s32.totalorder %s12, 1
    %p144 = por %p142, %p143
    %p145 = scmp.ne.s32.totalorder %s137, %s140
    %p146 = scmp.eq.s32.totalorder %s12, 0
    %p147 = por %p145, %p146
    %p148 = scmp.ne.s32.totalorder %s137, %s140
    %p149 = scmp.eq.s32.totalorder %s17, 1
    %p150 = por %p148, %p149
    %p151 = scmp.ne.s32.totalorder %s140, %s141
    %p152 = scmp.eq.s32.totalorder %s17, 0
    %p153 = por %p151, %p152
    %p154 = scmp.ne.s32.totalorder %s140, %s141
    %p155 = scmp.eq.s32.totalorder %s18, 1
    %p156 = por %p154, %p155
    %p158 = scmp.ne.s32.totalorder %s141, %s157
    %p159 = scmp.eq.s32.totalorder %s18, 0
    %p160 = por %p158, %p159
    %p161 = scmp.le.s32.totalorder 1, %s12
    %p162 = scmp.lt.s32.totalorder %s12, 3
    %p163 = pnand %p161, %p162
    %p164 = pneg %p163
    // Predicated region
    $region9: #{bottleneck_downsampling.5} parent=5 // pred_check
      _
    $region10: #{bottleneck_downsampling.5} parent=5 // pred_check_branch
      %166 = sbr.rel (%p163) target = $region12
    $region11: #{bottleneck_downsampling.5} parent=5 // pred_region
      %s167 = ssub.s32 %s12, 1
      // Predicated region
      $region13: #{bottleneck_downsampling.5} parent=11 // pred_check
        %p168 = pneg %p59
      $region14: #{bottleneck_downsampling.5} parent=11 // pred_check_branch
        %170 = sbr.rel (%p168) target = $region16
      $region15: #{bottleneck_downsampling.5} parent=11 // pred_region
        _
      $region16: #{bottleneck_downsampling.5} parent=11 // pred_fallthru
        _
      // Predicated region
      $region17: #{bottleneck_downsampling.5} parent=11 // pred_check
        %p171 = pneg %p80
      $region18: #{bottleneck_downsampling.5} parent=11 // pred_check_branch
        %173 = sbr.rel (%p171) target = $region20
      $region19: #{bottleneck_downsampling.5} parent=11 // pred_region
        _
      $region20: #{bottleneck_downsampling.5} parent=11 // pred_fallthru
        _
      // Predicated region
      $region21: #{bottleneck_downsampling.5} parent=11 // pred_check
        %p174 = pneg %p101
      $region22: #{bottleneck_downsampling.5} parent=11 // pred_check_branch
        %176 = sbr.rel (%p174) target = $region24
      $region23: #{bottleneck_downsampling.5} parent=11 // pred_region
        _
      $region24: #{bottleneck_downsampling.5} parent=11 // pred_fallthru
        _
    $region12: #{bottleneck_downsampling.5} parent=5 // pred_fallthru
      _
    %p177 = scmp.lt.s32.totalorder %s12, 2
    // Predicated region
    $region25: #{bottleneck_downsampling.5} parent=5 // pred_check
      %p178 = pneg %p177
    $region26: #{bottleneck_downsampling.5} parent=5 // pred_check_branch
      %180 = sbr.rel (%p178) target = $region28
    $region27: #{bottleneck_downsampling.5} parent=5 // pred_region
      // Predicated region
      $region29: #{bottleneck_downsampling.5} parent=27 // pred_check
        %p181 = pneg %p32
      $region30: #{bottleneck_downsampling.5} parent=27 // pred_check_branch
        %183 = sbr.rel (%p181) target = $region32
      $region31: #{bottleneck_downsampling.5} parent=27 // pred_region
        %p184 = scmp.lt.s32.totalorder %s12, 1
        %s185 = scalar_select %p184, %s12, 1
        %s186 = smul.addr %s185, 8
        %s187 = smul.addr %s186, 8
        %s188 = scalar_lea.vmem %s0, %s187
      $region32: #{bottleneck_downsampling.5} parent=27 // pred_fallthru
        _
    $region28: #{bottleneck_downsampling.5} parent=5 // pred_fallthru
      _
    %p189 = scmp.le.s32.totalorder 1, %s12
    %p190 = scmp.lt.s32.totalorder %s12, 3
    %p191 = pnand %p189, %p190
    %p192 = pneg %p191
    // Predicated region
    $region33: #{bottleneck_downsampling.5} parent=5 // pred_check
      _
    $region34: #{bottleneck_downsampling.5} parent=5 // pred_check_branch
      %194 = sbr.rel (%p191) target = $region36
    $region35: #{bottleneck_downsampling.5} parent=5 // pred_region
      %s195 = ssub.s32 %s12, 1
      %p196 = scmp.lt.s32.totalorder %s17, 1
      %s197 = scalar_select %p196, %s17, 1
      %s198 = smul.addr %s197, 8
      %s199 = smul.addr %s198, 8
      %s200 = scalar_lea.vmem %s0, %s199
      %p201 = pneg %p38
      %p202 = pneg %p35
      %p203 = pneg %p59
      %p204 = pneg %p56
      %p205 = pneg %p80
      %p206 = pneg %p77
      %p207 = pneg %p101
      %p208 = pneg %p98
      %p209 = pneg %p127
      %p210 = pneg %p124
      %p211 = scmp.lt.s32.totalorder %s17, 1
      %s212 = scalar_select %p211, %s17, 1
      %s213 = smul.addr %s212, 8
      %s214 = smul.addr %s213, 8
      %s215 = scalar_lea.vmem %s4, %s214
      %p216 = pneg %p153
      %p217 = pneg %p150
      %p218 = scmp.lt.s32.totalorder %s17, 1
      %s219 = scalar_select %p218, %s17, 1
      %s220 = smul.addr %s219, 8
      %s221 = scalar_lea.vmem %s5, %s220
      %p222 = scmp.lt.s32.totalorder %s17, 1
      %s223 = scalar_select %p222, %s17, 1
      %s224 = smul.addr %s223, 8
      %s225 = smul.addr %s224, 8
      %s226 = scalar_lea.vmem %s0, %s225
      %p227 = scmp.lt.s32.totalorder %s17, 1
      %s228 = scalar_select %p227, %s17, 1
      %s229 = smul.addr %s228, 8
      %s230 = smul.addr %s229, 8
      %s231 = scalar_lea.vmem %s4, %s230
      %p232 = scmp.lt.s32.totalorder %s17, 1
      %s233 = scalar_select %p232, %s17, 1
      %s234 = smul.addr %s233, 8
      %s235 = scalar_lea.vmem %s5, %s234
      %v236 = vld [vmem:[%s226] sm:$0xff]
      %v237 = vld [vmem:[%s226 + $0x8] sm:$0xff]
      %v238 = vld [vmem:[%s226 + $0x10] sm:$0xff]
      %v239 = vld [vmem:[%s226 + $0x18] sm:$0xff]
      %v240 = vld [vmem:[%s226 + $0x20] sm:$0xff]
      %v241 = vld [vmem:[%s226 + $0x28] sm:$0xff]
      %v242 = vld [vmem:[%s226 + $0x30] sm:$0xff]
      %v243 = vld [vmem:[%s226 + $0x38] sm:$0xff]
      %v244 = vld [vmem:[%s1] sm:$0x1]
      %v245 = vlaneseq
      %v246 = vshrl.u32 %v245, 7
      %v247 = vsub.s32 0, %v246
      %v248 = vrot.slane %v244, %v247
      %v249 = vmul.f32 %v236, %v248
      %v250 = vmul.f32 %v237, %v248
      %v251 = vmul.f32 %v238, %v248
      %v252 = vmul.f32 %v239, %v248
      %v253 = vmul.f32 %v240, %v248
      %v254 = vmul.f32 %v241, %v248
      %v255 = vmul.f32 %v242, %v248
      %v256 = vmul.f32 %v243, %v248
      %v257 = vld [vmem:[%s1 + $0x1] sm:$0x1]
      %v258 = vlaneseq
      %v259 = vshrl.u32 %v258, 7
      %v260 = vsub.s32 0, %v259
      %v261 = vrot.slane %v257, %v260
      %v262 = vadd.f32 %v249, %v261
      %v263 = vadd.f32 %v250, %v261
      %v264 = vadd.f32 %v251, %v261
      %v265 = vadd.f32 %v252, %v261
      %v266 = vadd.f32 %v253, %v261
      %v267 = vadd.f32 %v254, %v261
      %v268 = vadd.f32 %v255, %v261
      %v269 = vadd.f32 %v256, %v261
      %v278 = vrot.slane %v262, 7
      %v279 = vrot.slane %v263, 7
      %v280 = vrot.slane %v264, 7
      %v281 = vrot.slane %v265, 7
      %v282 = vrot.slane %v266, 7
      %v283 = vrot.slane %v267, 7
      %v284 = vrot.slane %v268, 7
      %v285 = vrot.slane %v269, 7
      %vm294 = vcmask 1040384
      %v295 = vsel %vm294, 0.0, %v278
      %v296 = vsel %vm294, 0.0, %v279
      %v297 = vsel %vm294, 0.0, %v280
      %v298 = vsel %vm294, 0.0, %v281
      %v299 = vsel %vm294, 0.0, %v282
      %v300 = vsel %vm294, 0.0, %v283
      %v301 = vsel %vm294, 0.0, %v284
      %v302 = vsel %vm294, 0.0, %v285
      %v303 = vsel %vm294, %v278, 0.0
      %v304 = vsel %vm294, %v279, 0.0
      %v305 = vsel %vm294, %v280, 0.0
      %v306 = vsel %vm294, %v281, 0.0
      %v307 = vsel %vm294, %v282, 0.0
      %v308 = vsel %vm294, %v283, 0.0
      %v309 = vsel %vm294, %v284, 0.0
      %v310 = vsel %vm294, %v285, 0.0
      %311 = vst [vmem:[#allocation2] sm:$0xff] 0.0
      %312 = vst [vmem:[#allocation2 + $0x8] sm:$0x3] 0.0
      %313 = vst [vmem:[#allocation2 + $0x5a] sm:$0xff] 0.0
      %314 = vst [vmem:[#allocation2 + $0x62] sm:$0xf] 0.0
      %v331 = vcombine.high %v295, %v295
      %v333 = vunpack.c.l.s4 1983009808
      %v334 = vunpack.c.0.s8 %v333
      %v335 = vlaneseq
      %v336 = vshrl.u32 %v335, 7
      %v337 = vsub.s32 %v334, %v336
      %v338 = vrot.slane %v295, %v337
      %v340 = vunpack.c.l.s4 1983009808
      %v341 = vunpack.c.0.s8 %v340
      %v342 = vlaneseq
      %v343 = vshrl.u32 %v342, 7
      %v344 = vsub.s32 %v341, %v343
      %v345 = vrot.slane %v331, %v344
      %v346 = vcombine.high %v338, %v338
      %v347 = vcombine.high %v345, %v345
      %v349 = vunpack.c.l.s4 1983009808
      %v350 = vunpack.c.0.s8 %v349
      %v351 = vlaneseq
      %v352 = vshrl.u32 %v351, 7
      %v353 = vsub.s32 %v350, %v352
      %v354 = vrot.slane %v303, %v353
      %v355 = vcombine.high %v296, %v296
      %v357 = vunpack.c.l.s4 1983009808
      %v358 = vunpack.c.0.s8 %v357
      %v359 = vlaneseq
      %v360 = vshrl.u32 %v359, 7
      %v361 = vsub.s32 %v358, %v360
      %v362 = vrot.slane %v296, %v361
      %v364 = vunpack.c.l.s4 1983009808
      %v365 = vunpack.c.0.s8 %v364
      %v366 = vlaneseq
      %v367 = vshrl.u32 %v366, 7
      %v368 = vsub.s32 %v365, %v367
      %v369 = vrot.slane %v355, %v368
      %v370 = vcombine.high %v362, %v362
      %v371 = vcombine.high %v369, %v369
      %v373 = vunpack.c.l.s4 1983009808
      %v374 = vunpack.c.0.s8 %v373
      %v375 = vlaneseq
      %v376 = vshrl.u32 %v375, 7
      %v377 = vsub.s32 %v374, %v376
      %v378 = vrot.slane %v304, %v377
      %v379 = vcombine.high %v297, %v297
      %v381 = vunpack.c.l.s4 1983009808
      %v382 = vunpack.c.0.s8 %v381
      %v383 = vlaneseq
      %v384 = vshrl.u32 %v383, 7
      %v385 = vsub.s32 %v382, %v384
      %v386 = vrot.slane %v297, %v385
      %v388 = vunpack.c.l.s4 1983009808
      %v389 = vunpack.c.0.s8 %v388
      %v390 = vlaneseq
      %v391 = vshrl.u32 %v390, 7
      %v392 = vsub.s32 %v389, %v391
      %v393 = vrot.slane %v379, %v392
      %v394 = vcombine.high %v386, %v386
      %v395 = vcombine.high %v393, %v393
      %v397 = vunpack.c.l.s4 1983009808
      %v398 = vunpack.c.0.s8 %v397
      %v399 = vlaneseq
      %v400 = vshrl.u32 %v399, 7
      %v401 = vsub.s32 %v398, %v400
      %v402 = vrot.slane %v305, %v401
      %v403 = vcombine.high %v298, %v298
      %v405 = vunpack.c.l.s4 1983009808
      %v406 = vunpack.c.0.s8 %v405
      %v407 = vlaneseq
      %v408 = vshrl.u32 %v407, 7
      %v409 = vsub.s32 %v406, %v408
      %v410 = vrot.slane %v298, %v409
      %v412 = vunpack.c.l.s4 1983009808
      %v413 = vunpack.c.0.s8 %v412
      %v414 = vlaneseq
      %v415 = vshrl.u32 %v414, 7
      %v416 = vsub.s32 %v413, %v415
      %v417 = vrot.slane %v403, %v416
      %v418 = vcombine.high %v410, %v410
      %v419 = vcombine.high %v417, %v417
      %v421 = vunpack.c.l.s4 1983009808
      %v422 = vunpack.c.0.s8 %v421
      %v423 = vlaneseq
      %v424 = vshrl.u32 %v423, 7
      %v425 = vsub.s32 %v422, %v424
      %v426 = vrot.slane %v306, %v425
      %v427 = vcombine.high %v299, %v299
      %v429 = vunpack.c.l.s4 1983009808
      %v430 = vunpack.c.0.s8 %v429
      %v431 = vlaneseq
      %v432 = vshrl.u32 %v431, 7
      %v433 = vsub.s32 %v430, %v432
      %v434 = vrot.slane %v299, %v433
      %v436 = vunpack.c.l.s4 1983009808
      %v437 = vunpack.c.0.s8 %v436
      %v438 = vlaneseq
      %v439 = vshrl.u32 %v438, 7
      %v440 = vsub.s32 %v437, %v439
      %v441 = vrot.slane %v427, %v440
      %v442 = vcombine.high %v434, %v434
      %v443 = vcombine.high %v441, %v441
      %v445 = vunpack.c.l.s4 1983009808
      %v446 = vunpack.c.0.s8 %v445
      %v447 = vlaneseq
      %v448 = vshrl.u32 %v447, 7
      %v449 = vsub.s32 %v446, %v448
      %v450 = vrot.slane %v307, %v449
      %v451 = vcombine.high %v300, %v300
      %v453 = vunpack.c.l.s4 1983009808
      %v454 = vunpack.c.0.s8 %v453
      %v455 = vlaneseq
      %v456 = vshrl.u32 %v455, 7
      %v457 = vsub.s32 %v454, %v456
      %v458 = vrot.slane %v300, %v457
      %v460 = vunpack.c.l.s4 1983009808
      %v461 = vunpack.c.0.s8 %v460
      %v462 = vlaneseq
      %v463 = vshrl.u32 %v462, 7
      %v464 = vsub.s32 %v461, %v463
      %v465 = vrot.slane %v451, %v464
      %v466 = vcombine.high %v458, %v458
      %v467 = vcombine.high %v465, %v465
      %v469 = vunpack.c.l.s4 1983009808
      %v470 = vunpack.c.0.s8 %v469
      %v471 = vlaneseq
      %v472 = vshrl.u32 %v471, 7
      %v473 = vsub.s32 %v470, %v472
      %v474 = vrot.slane %v308, %v473
      %v475 = vcombine.high %v301, %v301
      %v477 = vunpack.c.l.s4 1983009808
      %v478 = vunpack.c.0.s8 %v477
      %v479 = vlaneseq
      %v480 = vshrl.u32 %v479, 7
      %v481 = vsub.s32 %v478, %v480
      %v482 = vrot.slane %v301, %v481
      %v484 = vunpack.c.l.s4 1983009808
      %v485 = vunpack.c.0.s8 %v484
      %v486 = vlaneseq
      %v487 = vshrl.u32 %v486, 7
      %v488 = vsub.s32 %v485, %v487
      %v489 = vrot.slane %v475, %v488
      %v490 = vcombine.high %v482, %v482
      %v491 = vcombine.high %v489, %v489
      %v493 = vunpack.c.l.s4 1983009808
      %v494 = vunpack.c.0.s8 %v493
      %v495 = vlaneseq
      %v496 = vshrl.u32 %v495, 7
      %v497 = vsub.s32 %v494, %v496
      %v498 = vrot.slane %v309, %v497
      %v499 = vcombine.high %v302, %v302
      %v501 = vunpack.c.l.s4 1983009808
      %v502 = vunpack.c.0.s8 %v501
      %v503 = vlaneseq
      %v504 = vshrl.u32 %v503, 7
      %v505 = vsub.s32 %v502, %v504
      %v506 = vrot.slane %v302, %v505
      %v508 = vunpack.c.l.s4 1983009808
      %v509 = vunpack.c.0.s8 %v508
      %v510 = vlaneseq
      %v511 = vshrl.u32 %v510, 7
      %v512 = vsub.s32 %v509, %v511
      %v513 = vrot.slane %v499, %v512
      %v514 = vcombine.high %v506, %v506
      %v515 = vcombine.high %v513, %v513
      %v517 = vunpack.c.l.s4 1983009808
      %v518 = vunpack.c.0.s8 %v517
      %v519 = vlaneseq
      %v520 = vshrl.u32 %v519, 7
      %v521 = vsub.s32 %v518, %v520
      %v522 = vrot.slane %v310, %v521
      %v523 = vcombine.low %v338, %v346
      %v524 = vcombine.low %v345, %v347
      %v526 = vunpack.c.l.s4 1983009808
      %v527 = vunpack.c.0.s8 %v526
      %v528 = vlaneseq
      %v529 = vshrl.u32 %v528, 7
      %v530 = vsub.s32 %v527, %v529
      %v531 = vrot.slane %v523, %v530
      %v533 = vunpack.c.l.s4 1983009808
      %v534 = vunpack.c.0.s8 %v533
      %v535 = vlaneseq
      %v536 = vshrl.u32 %v535, 7
      %v537 = vsub.s32 %v534, %v536
      %v538 = vrot.slane %v524, %v537
      %v539 = vcombine.low %v531, %v538
      %v540 = vcombine.low %v354, %v362
      %v541 = vcombine.low %v370, %v369
      %v543 = vunpack.c.l.s4 1983009808
      %v544 = vunpack.c.0.s8 %v543
      %v545 = vlaneseq
      %v546 = vshrl.u32 %v545, 7
      %v547 = vsub.s32 %v544, %v546
      %v548 = vrot.slane %v540, %v547
      %v550 = vunpack.c.l.s4 1983009808
      %v551 = vunpack.c.0.s8 %v550
      %v552 = vlaneseq
      %v553 = vshrl.u32 %v552, 7
      %v554 = vsub.s32 %v551, %v553
      %v555 = vrot.slane %v541, %v554
      %v556 = vcombine.low %v548, %v555
      %v557 = vcombine.low %v371, %v378
      %v558 = vcombine.low %v386, %v394
      %v560 = vunpack.c.l.s4 1983009808
      %v561 = vunpack.c.0.s8 %v560
      %v562 = vlaneseq
      %v563 = vshrl.u32 %v562, 7
      %v564 = vsub.s32 %v561, %v563
      %v565 = vrot.slane %v557, %v564
      %v567 = vunpack.c.l.s4 1983009808
      %v568 = vunpack.c.0.s8 %v567
      %v569 = vlaneseq
      %v570 = vshrl.u32 %v569, 7
      %v571 = vsub.s32 %v568, %v570
      %v572 = vrot.slane %v558, %v571
      %v573 = vcombine.low %v565, %v572
      %v574 = vcombine.low %v393, %v395
      %v575 = vcombine.low %v402, %v410
      %v577 = vunpack.c.l.s4 1983009808
      %v578 = vunpack.c.0.s8 %v577
      %v579 = vlaneseq
      %v580 = vshrl.u32 %v579, 7
      %v581 = vsub.s32 %v578, %v580
      %v582 = vrot.slane %v574, %v581
      %v584 = vunpack.c.l.s4 1983009808
      %v585 = vunpack.c.0.s8 %v584
      %v586 = vlaneseq
      %v587 = vshrl.u32 %v586, 7
      %v588 = vsub.s32 %v585, %v587
      %v589 = vrot.slane %v575, %v588
      %v590 = vcombine.low %v582, %v589
      %v591 = vcombine.low %v418, %v417
      %v592 = vcombine.low %v419, %v426
      %v594 = vunpack.c.l.s4 1983009808
      %v595 = vunpack.c.0.s8 %v594
      %v596 = vlaneseq
      %v597 = vshrl.u32 %v596, 7
      %v598 = vsub.s32 %v595, %v597
      %v599 = vrot.slane %v591, %v598
      %v601 = vunpack.c.l.s4 1983009808
      %v602 = vunpack.c.0.s8 %v601
      %v603 = vlaneseq
      %v604 = vshrl.u32 %v603, 7
      %v605 = vsub.s32 %v602, %v604
      %v606 = vrot.slane %v592, %v605
      %v607 = vcombine.low %v599, %v606
      %v608 = vcombine.low %v434, %v442
      %v609 = vcombine.low %v441, %v443
      %v611 = vunpack.c.l.s4 1983009808
      %v612 = vunpack.c.0.s8 %v611
      %v613 = vlaneseq
      %v614 = vshrl.u32 %v613, 7
      %v615 = vsub.s32 %v612, %v614
      %v616 = vrot.slane %v608, %v615
      %v618 = vunpack.c.l.s4 1983009808
      %v619 = vunpack.c.0.s8 %v618
      %v620 = vlaneseq
      %v621 = vshrl.u32 %v620, 7
      %v622 = vsub.s32 %v619, %v621
      %v623 = vrot.slane %v609, %v622
      %v624 = vcombine.low %v616, %v623
      %v625 = vcombine.low %v450, %v458
      %v626 = vcombine.low %v466, %v465
      %v628 = vunpack.c.l.s4 1983009808
      %v629 = vunpack.c.0.s8 %v628
      %v630 = vlaneseq
      %v631 = vshrl.u32 %v630, 7
      %v632 = vsub.s32 %v629, %v631
      %v633 = vrot.slane %v625, %v632
      %v635 = vunpack.c.l.s4 1983009808
      %v636 = vunpack.c.0.s8 %v635
      %v637 = vlaneseq
      %v638 = vshrl.u32 %v637, 7
      %v639 = vsub.s32 %v636, %v638
      %v640 = vrot.slane %v626, %v639
      %v641 = vcombine.low %v633, %v640
      %v642 = vcombine.low %v467, %v474
      %v643 = vcombine.low %v482, %v490
      %v645 = vunpack.c.l.s4 1983009808
      %v646 = vunpack.c.0.s8 %v645
      %v647 = vlaneseq
      %v648 = vshrl.u32 %v647, 7
      %v649 = vsub.s32 %v646, %v648
      %v650 = vrot.slane %v642, %v649
      %v652 = vunpack.c.l.s4 1983009808
      %v653 = vunpack.c.0.s8 %v652
      %v654 = vlaneseq
      %v655 = vshrl.u32 %v654, 7
      %v656 = vsub.s32 %v653, %v655
      %v657 = vrot.slane %v643, %v656
      %v658 = vcombine.low %v650, %v657
      %v659 = vcombine.low %v489, %v491
      %v660 = vcombine.low %v498, %v506
      %v662 = vunpack.c.l.s4 1983009808
      %v663 = vunpack.c.0.s8 %v662
      %v664 = vlaneseq
      %v665 = vshrl.u32 %v664, 7
      %v666 = vsub.s32 %v663, %v665
      %v667 = vrot.slane %v659, %v666
      %v669 = vunpack.c.l.s4 1983009808
      %v670 = vunpack.c.0.s8 %v669
      %v671 = vlaneseq
      %v672 = vshrl.u32 %v671, 7
      %v673 = vsub.s32 %v670, %v672
      %v674 = vrot.slane %v660, %v673
      %v675 = vcombine.low %v667, %v674
      %v676 = vcombine.low %v514, %v513
      %v677 = vcombine.low %v515, %v522
      %v679 = vunpack.c.l.s4 1983009808
      %v680 = vunpack.c.0.s8 %v679
      %v681 = vlaneseq
      %v682 = vshrl.u32 %v681, 7
      %v683 = vsub.s32 %v680, %v682
      %v684 = vrot.slane %v676, %v683
      %v686 = vunpack.c.l.s4 1983009808
      %v687 = vunpack.c.0.s8 %v686
      %v688 = vlaneseq
      %v689 = vshrl.u32 %v688, 7
      %v690 = vsub.s32 %v687, %v689
      %v691 = vrot.slane %v677, %v690
      %v692 = vcombine.low %v684, %v691
      %703 = vst [vmem:[#allocation2 + $0xa] sm:$0xff] %v539
      %704 = vst [vmem:[#allocation2 + $0x12] sm:$0xff] %v556
      %705 = vst [vmem:[#allocation2 + $0x1a] sm:$0xff] %v573
      %706 = vst [vmem:[#allocation2 + $0x22] sm:$0xff] %v590
      %707 = vst [vmem:[#allocation2 + $0x2a] sm:$0xff] %v607
      %708 = vst [vmem:[#allocation2 + $0x32] sm:$0xff] %v624
      %709 = vst [vmem:[#allocation2 + $0x3a] sm:$0xff] %v641
      %710 = vst [vmem:[#allocation2 + $0x42] sm:$0xff] %v658
      %711 = vst [vmem:[#allocation2 + $0x4a] sm:$0xff] %v675
      %712 = vst [vmem:[#allocation2 + $0x52] sm:$0xff] %v692
      %v713 = vld [vmem:[#allocation2] sm:$0xff]
      %v714 = vld [vmem:[#allocation2 + $0x8] sm:$0xff]
      %v715 = vld [vmem:[#allocation2 + $0x10] sm:$0xff]
      %v716 = vld [vmem:[#allocation2 + $0x18] sm:$0xff]
      %v717 = vld [vmem:[#allocation2 + $0x20] sm:$0xff]
      %v718 = vld [vmem:[#allocation2 + $0x28] sm:$0xff]
      %v719 = vld [vmem:[#allocation2 + $0x30] sm:$0xff]
      %v720 = vld [vmem:[#allocation2 + $0x38] sm:$0xff]
      %v721 = vld [vmem:[#allocation2 + $0x40] sm:$0xff]
      %v722 = vld [vmem:[#allocation2 + $0x48] sm:$0xff]
      %v723 = vld [vmem:[%s2] sm:$0xff]
      %v724 = vld [vmem:[%s2 + $0x8] sm:$0xff]
      %v725 = vld [vmem:[%s2 + $0x10] sm:$0xff]
      %v726 = vld [vmem:[%s2 + $0x18] sm:$0xff]
      %v727 = vld [vmem:[%s2 + $0x20] sm:$0xff]
      %v728 = vld [vmem:[%s2 + $0x28] sm:$0xff]
      %v729 = vld [vmem:[%s2 + $0x30] sm:$0xff]
      %v730 = vld [vmem:[%s2 + $0x38] sm:$0xff]
      %v731 = vld [vmem:[%s2 + $0x40] sm:$0xff]
      %v732 = vld [vmem:[%s2 + $0x48] sm:$0xff]
      %v733 = vld [vmem:[%s2 + $0x50] sm:$0xff]
      %v734 = vld [vmem:[%s2 + $0x58] sm:$0xff]
      %v735 = vld [vmem:[%s2 + $0x60] sm:$0xff]
      %v736 = vld [vmem:[%s2 + $0x68] sm:$0xff]
      %v737 = vld [vmem:[%s2 + $0x70] sm:$0xff]
      %v738 = vld [vmem:[%s2 + $0x78] sm:$0xff]
      %v739 = vld [vmem:[#allocation2 + $0x1] sm:$0xff]
      %v740 = vld [vmem:[#allocation2 + $0x9] sm:$0xff]
      %v741 = vld [vmem:[#allocation2 + $0x11] sm:$0xff]
      %v742 = vld [vmem:[#allocation2 + $0x19] sm:$0xff]
      %v743 = vld [vmem:[#allocation2 + $0x21] sm:$0xff]
      %v744 = vld [vmem:[#allocation2 + $0x29] sm:$0xff]
      %v745 = vld [vmem:[#allocation2 + $0x31] sm:$0xff]
      %v746 = vld [vmem:[#allocation2 + $0x39] sm:$0xff]
      %v747 = vld [vmem:[#allocation2 + $0x41] sm:$0xff]
      %v748 = vld [vmem:[#allocation2 + $0x49] sm:$0xff]
      %s749 = scalar_lea.vmem %s2, 128
      %v750 = vld [vmem:[%s749] sm:$0xff]
      %v751 = vld [vmem:[%s749 + $0x8] sm:$0xff]
      %v752 = vld [vmem:[%s749 + $0x10] sm:$0xff]
      %v753 = vld [vmem:[%s749 + $0x18] sm:$0xff]
      %v754 = vld [vmem:[%s749 + $0x20] sm:$0xff]
      %v755 = vld [vmem:[%s749 + $0x28] sm:$0xff]
      %v756 = vld [vmem:[%s749 + $0x30] sm:$0xff]
      %v757 = vld [vmem:[%s749 + $0x38] sm:$0xff]
      %v758 = vld [vmem:[%s749 + $0x40] sm:$0xff]
      %v759 = vld [vmem:[%s749 + $0x48] sm:$0xff]
      %v760 = vld [vmem:[%s749 + $0x50] sm:$0xff]
      %v761 = vld [vmem:[%s749 + $0x58] sm:$0xff]
      %v762 = vld [vmem:[%s749 + $0x60] sm:$0xff]
      %v763 = vld [vmem:[%s749 + $0x68] sm:$0xff]
      %v764 = vld [vmem:[%s749 + $0x70] sm:$0xff]
      %v765 = vld [vmem:[%s749 + $0x78] sm:$0xff]
      %766 = vmatprep.subr.mxu0 0.0
      %767 = vmatpush1.msra.mxu0 %v765
      %768 = vmatprep.subr.mxu0 0.0
      %769 = vmatpush1.msra.mxu0 %v764
      %770 = vmatprep.subr.mxu0 0.0
      %771 = vmatpush1.msra.mxu0 %v763
      %772 = vmatprep.subr.mxu0 0.0
      %773 = vmatpush1.msra.mxu0 %v762
      %774 = vmatprep.subr.mxu0 0.0
      %775 = vmatpush1.msra.mxu0 %v761
      %776 = vmatprep.subr.mxu0 0.0
      %777 = vmatpush1.msra.mxu0 %v760
      %778 = vmatprep.subr.mxu0 0.0
      %779 = vmatpush1.msra.mxu0 %v759
      %780 = vmatprep.subr.mxu0 0.0
      %781 = vmatpush1.msra.mxu0 %v758
      %782 = vmatprep.subr.mxu0 0.0
      %783 = vmatpush1.msra.mxu0 %v757
      %784 = vmatprep.subr.mxu0 0.0
      %785 = vmatpush1.msra.mxu0 %v756
      %786 = vmatprep.subr.mxu0 0.0
      %787 = vmatpush1.msra.mxu0 %v755
      %788 = vmatprep.subr.mxu0 0.0
      %789 = vmatpush1.msra.mxu0 %v754
      %790 = vmatprep.subr.mxu0 0.0
      %791 = vmatpush1.msra.mxu0 %v753
      %792 = vmatprep.subr.mxu0 0.0
      %793 = vmatpush1.msra.mxu0 %v752
      %794 = vmatprep.subr.mxu0 0.0
      %795 = vmatpush1.msra.mxu0 %v751
      %796 = vmatprep.subr.mxu0 0.0
      %797 = vmatpush1.msra.mxu0 %v750
      %798 = vmatprep.subr.mxu0 0.0
      %799 = vmatpush2.msra.mxu0 0.0
      %800 = vmatprep.subr.mxu0 0.0
      %801 = vmatpush2.msra.mxu0 0.0
      %802 = vmatprep.subr.mxu0 0.0
      %803 = vmatpush2.msra.mxu0 0.0
      %804 = vmatprep.subr.mxu0 0.0
      %805 = vmatpush2.msra.mxu0 0.0
      %806 = vmatprep.subr.mxu0 0.0
      %807 = vmatpush2.msra.mxu0 0.0
      %808 = vmatprep.subr.mxu0 0.0
      %809 = vmatpush2.msra.mxu0 0.0
      %810 = vmatprep.subr.mxu0 0.0
      %811 = vmatpush2.msra.mxu0 0.0
      %812 = vmatprep.subr.mxu0 0.0
      %813 = vmatpush2.msra.mxu0 0.0
      %814 = vmatprep.subr.mxu0 0.0
      %815 = vmatpush2.msra.mxu0 0.0
      %816 = vmatprep.subr.mxu0 0.0
      %817 = vmatpush2.msra.mxu0 0.0
      %818 = vmatprep.subr.mxu0 0.0
      %819 = vmatpush2.msra.mxu0 0.0
      %820 = vmatprep.subr.mxu0 0.0
      %821 = vmatpush2.msra.mxu0 0.0
      %822 = vmatprep.subr.mxu0 0.0
      %823 = vmatpush2.msra.mxu0 0.0
      %824 = vmatprep.subr.mxu0 0.0
      %825 = vmatpush2.msra.mxu0 0.0
      %826 = vmatprep.subr.mxu0 0.0
      %827 = vmatpush2.msra.mxu0 0.0
      %828 = vmatprep.subr.mxu0 0.0
      %829 = vmatpush2.msra.mxu0 0.0
      %830 = vmatprep.mubr.f32.mxu0 0.0
      %831 = vmatmul.mubr.f32.gmra.mxu0 %v739
      %v832 = vpop.f32.mrf.mxu0
      %v833 = vadd.f32 0.0, %v832
      %v834 = vpop.f32.mrf.mxu0
      %835 = vmatprep.mubr.f32.mxu0 0.0
      %836 = vmatmul.mubr.f32.gmra.mxu0 %v740
      %v837 = vpop.f32.mrf.mxu0
      %v838 = vadd.f32 0.0, %v837
      %v839 = vpop.f32.mrf.mxu0
      %840 = vmatprep.mubr.f32.mxu0 0.0
      %841 = vmatmul.mubr.f32.gmra.mxu0 %v741
      %v842 = vpop.f32.mrf.mxu0
      %v843 = vadd.f32 0.0, %v842
      %v844 = vpop.f32.mrf.mxu0
      %845 = vmatprep.mubr.f32.mxu0 0.0
      %846 = vmatmul.mubr.f32.gmra.mxu0 %v742
      %v847 = vpop.f32.mrf.mxu0
      %v848 = vadd.f32 0.0, %v847
      %v849 = vpop.f32.mrf.mxu0
      %850 = vmatprep.mubr.f32.mxu0 0.0
      %851 = vmatmul.mubr.f32.gmra.mxu0 %v743
      %v852 = vpop.f32.mrf.mxu0
      %v853 = vadd.f32 0.0, %v852
      %v854 = vpop.f32.mrf.mxu0
      %855 = vmatprep.mubr.f32.mxu0 0.0
      %856 = vmatmul.mubr.f32.gmra.mxu0 %v744
      %v857 = vpop.f32.mrf.mxu0
      %v858 = vadd.f32 0.0, %v857
      %v859 = vpop.f32.mrf.mxu0
      %860 = vmatprep.mubr.f32.mxu0 0.0
      %861 = vmatmul.mubr.f32.gmra.mxu0 %v745
      %v862 = vpop.f32.mrf.mxu0
      %v863 = vadd.f32 0.0, %v862
      %v864 = vpop.f32.mrf.mxu0
      %865 = vmatprep.mubr.f32.mxu0 0.0
      %866 = vmatmul.mubr.f32.gmra.mxu0 %v746
      %v867 = vpop.f32.mrf.mxu0
      %v868 = vadd.f32 0.0, %v867
      %v869 = vpop.f32.mrf.mxu0
      %870 = vmatprep.mubr.f32.mxu0 0.0
      %871 = vmatmul.mubr.f32.gmra.mxu0 %v747
      %v872 = vpop.f32.mrf.mxu0
      %v873 = vadd.f32 0.0, %v872
      %v874 = vpop.f32.mrf.mxu0
      %875 = vmatprep.mubr.f32.mxu0 0.0
      %876 = vmatmul.mubr.f32.gmra.mxu0 %v748
      %v877 = vpop.f32.mrf.mxu0
      %v878 = vadd.f32 0.0, %v877
      %v879 = vpop.f32.mrf.mxu0
      %880 = vdwg.mxu0
      %881 = vmatprep.subr.mxu0 0.0
      %882 = vmatpush1.msra.mxu0 %v738
      %883 = vmatprep.subr.mxu0 0.0
      %884 = vmatpush1.msra.mxu0 %v737
      %885 = vmatprep.subr.mxu0 0.0
      %886 = vmatpush1.msra.mxu0 %v736
      %887 = vmatprep.subr.mxu0 0.0
      %888 = vmatpush1.msra.mxu0 %v735
      %889 = vmatprep.subr.mxu0 0.0
      %890 = vmatpush1.msra.mxu0 %v734
      %891 = vmatprep.subr.mxu0 0.0
      %892 = vmatpush1.msra.mxu0 %v733
      %893 = vmatprep.subr.mxu0 0.0
      %894 = vmatpush1.msra.mxu0 %v732
      %895 = vmatprep.subr.mxu0 0.0
      %896 = vmatpush1.msra.mxu0 %v731
      %897 = vmatprep.subr.mxu0 0.0
      %898 = vmatpush1.msra.mxu0 %v730
      %899 = vmatprep.subr.mxu0 0.0
      %900 = vmatpush1.msra.mxu0 %v729
      %901 = vmatprep.subr.mxu0 0.0
      %902 = vmatpush1.msra.mxu0 %v728
      %903 = vmatprep.subr.mxu0 0.0
      %904 = vmatpush1.msra.mxu0 %v727
      %905 = vmatprep.subr.mxu0 0.0
      %906 = vmatpush1.msra.mxu0 %v726
      %907 = vmatprep.subr.mxu0 0.0
      %908 = vmatpush1.msra.mxu0 %v725
      %909 = vmatprep.subr.mxu0 0.0
      %910 = vmatpush1.msra.mxu0 %v724
      %911 = vmatprep.subr.mxu0 0.0
      %912 = vmatpush1.msra.mxu0 %v723
      %913 = vmatprep.subr.mxu0 0.0
      %914 = vmatpush2.msra.mxu0 0.0
      %915 = vmatprep.subr.mxu0 0.0
      %916 = vmatpush2.msra.mxu0 0.0
      %917 = vmatprep.subr.mxu0 0.0
      %918 = vmatpush2.msra.mxu0 0.0
      %919 = vmatprep.subr.mxu0 0.0
      %920 = vmatpush2.msra.mxu0 0.0
      %921 = vmatprep.subr.mxu0 0.0
      %922 = vmatpush2.msra.mxu0 0.0
      %923 = vmatprep.subr.mxu0 0.0
      %924 = vmatpush2.msra.mxu0 0.0
      %925 = vmatprep.subr.mxu0 0.0
      %926 = vmatpush2.msra.mxu0 0.0
      %927 = vmatprep.subr.mxu0 0.0
      %928 = vmatpush2.msra.mxu0 0.0
      %929 = vmatprep.subr.mxu0 0.0
      %930 = vmatpush2.msra.mxu0 0.0
      %931 = vmatprep.subr.mxu0 0.0
      %932 = vmatpush2.msra.mxu0 0.0
      %933 = vmatprep.subr.mxu0 0.0
      %934 = vmatpush2.msra.mxu0 0.0
      %935 = vmatprep.subr.mxu0 0.0
      %936 = vmatpush2.msra.mxu0 0.0
      %937 = vmatprep.subr.mxu0 0.0
      %938 = vmatpush2.msra.mxu0 0.0
      %939 = vmatprep.subr.mxu0 0.0
      %940 = vmatpush2.msra.mxu0 0.0
      %941 = vmatprep.subr.mxu0 0.0
      %942 = vmatpush2.msra.mxu0 0.0
      %943 = vmatprep.subr.mxu0 0.0
      %944 = vmatpush2.msra.mxu0 0.0
      %945 = vmatprep.mubr.f32.mxu0 0.0
      %946 = vmatmul.mubr.f32.gmra.mxu0 %v713
      %v947 = vpop.f32.mrf.mxu0
      %v948 = vadd.f32 %v833, %v947
      %v949 = vpop.f32.mrf.mxu0
      %950 = vmatprep.mubr.f32.mxu0 0.0
      %951 = vmatmul.mubr.f32.gmra.mxu0 %v714
      %v952 = vpop.f32.mrf.mxu0
      %v953 = vadd.f32 %v838, %v952
      %v954 = vpop.f32.mrf.mxu0
      %955 = vmatprep.mubr.f32.mxu0 0.0
      %956 = vmatmul.mubr.f32.gmra.mxu0 %v715
      %v957 = vpop.f32.mrf.mxu0
      %v958 = vadd.f32 %v843, %v957
      %v959 = vpop.f32.mrf.mxu0
      %960 = vmatprep.mubr.f32.mxu0 0.0
      %961 = vmatmul.mubr.f32.gmra.mxu0 %v716
      %v962 = vpop.f32.mrf.mxu0
      %v963 = vadd.f32 %v848, %v962
      %v964 = vpop.f32.mrf.mxu0
      %965 = vmatprep.mubr.f32.mxu0 0.0
      %966 = vmatmul.mubr.f32.gmra.mxu0 %v717
      %v967 = vpop.f32.mrf.mxu0
      %v968 = vadd.f32 %v853, %v967
      %v969 = vpop.f32.mrf.mxu0
      %970 = vmatprep.mubr.f32.mxu0 0.0
      %971 = vmatmul.mubr.f32.gmra.mxu0 %v718
      %v972 = vpop.f32.mrf.mxu0
      %v973 = vadd.f32 %v858, %v972
      %v974 = vpop.f32.mrf.mxu0
      %975 = vmatprep.mubr.f32.mxu0 0.0
      %976 = vmatmul.mubr.f32.gmra.mxu0 %v719
      %v977 = vpop.f32.mrf.mxu0
      %v978 = vadd.f32 %v863, %v977
      %v979 = vpop.f32.mrf.mxu0
      %980 = vmatprep.mubr.f32.mxu0 0.0
      %981 = vmatmul.mubr.f32.gmra.mxu0 %v720
      %v982 = vpop.f32.mrf.mxu0
      %v983 = vadd.f32 %v868, %v982
      %v984 = vpop.f32.mrf.mxu0
      %985 = vmatprep.mubr.f32.mxu0 0.0
      %986 = vmatmul.mubr.f32.gmra.mxu0 %v721
      %v987 = vpop.f32.mrf.mxu0
      %v988 = vadd.f32 %v873, %v987
      %v989 = vpop.f32.mrf.mxu0
      %990 = vmatprep.mubr.f32.mxu0 0.0
      %991 = vmatmul.mubr.f32.gmra.mxu0 %v722
      %v992 = vpop.f32.mrf.mxu0
      %v993 = vadd.f32 %v878, %v992
      %v994 = vpop.f32.mrf.mxu0
      %995 = vdwg.mxu0
      %v996 = vld [vmem:[#allocation2 + $0x2] sm:$0xff]
      %v997 = vld [vmem:[#allocation2 + $0xa] sm:$0xff]
      %v998 = vld [vmem:[#allocation2 + $0x12] sm:$0xff]
      %v999 = vld [vmem:[#allocation2 + $0x1a] sm:$0xff]
      %v1000 = vld [vmem:[#allocation2 + $0x22] sm:$0xff]
      %v1001 = vld [vmem:[#allocation2 + $0x2a] sm:$0xff]
      %v1002 = vld [vmem:[#allocation2 + $0x32] sm:$0xff]
      %v1003 = vld [vmem:[#allocation2 + $0x3a] sm:$0xff]
      %v1004 = vld [vmem:[#allocation2 + $0x42] sm:$0xff]
      %v1005 = vld [vmem:[#allocation2 + $0x4a] sm:$0xff]
      %s1006 = scalar_lea.vmem %s2, 256
      %v1007 = vld [vmem:[%s1006] sm:$0xff]
      %v1008 = vld [vmem:[%s1006 + $0x8] sm:$0xff]
      %v1009 = vld [vmem:[%s1006 + $0x10] sm:$0xff]
      %v1010 = vld [vmem:[%s1006 + $0x18] sm:$0xff]
      %v1011 = vld [vmem:[%s1006 + $0x20] sm:$0xff]
      %v1012 = vld [vmem:[%s1006 + $0x28] sm:$0xff]
      %v1013 = vld [vmem:[%s1006 + $0x30] sm:$0xff]
      %v1014 = vld [vmem:[%s1006 + $0x38] sm:$0xff]
      %v1015 = vld [vmem:[%s1006 + $0x40] sm:$0xff]
      %v1016 = vld [vmem:[%s1006 + $0x48] sm:$0xff]
      %v1017 = vld [vmem:[%s1006 + $0x50] sm:$0xff]
      %v1018 = vld [vmem:[%s1006 + $0x58] sm:$0xff]
      %v1019 = vld [vmem:[%s1006 + $0x60] sm:$0xff]
      %v1020 = vld [vmem:[%s1006 + $0x68] sm:$0xff]
      %v1021 = vld [vmem:[%s1006 + $0x70] sm:$0xff]
      %v1022 = vld [vmem:[%s1006 + $0x78] sm:$0xff]
      %1023 = vmatprep.subr.mxu0 0.0
      %1024 = vmatpush1.msra.mxu0 %v1022
      %1025 = vmatprep.subr.mxu0 0.0
      %1026 = vmatpush1.msra.mxu0 %v1021
      %1027 = vmatprep.subr.mxu0 0.0
      %1028 = vmatpush1.msra.mxu0 %v1020
      %1029 = vmatprep.subr.mxu0 0.0
      %1030 = vmatpush1.msra.mxu0 %v1019
      %1031 = vmatprep.subr.mxu0 0.0
      %1032 = vmatpush1.msra.mxu0 %v1018
      %1033 = vmatprep.subr.mxu0 0.0
      %1034 = vmatpush1.msra.mxu0 %v1017
      %1035 = vmatprep.subr.mxu0 0.0
      %1036 = vmatpush1.msra.mxu0 %v1016
      %1037 = vmatprep.subr.mxu0 0.0
      %1038 = vmatpush1.msra.mxu0 %v1015
      %1039 = vmatprep.subr.mxu0 0.0
      %1040 = vmatpush1.msra.mxu0 %v1014
      %1041 = vmatprep.subr.mxu0 0.0
      %1042 = vmatpush1.msra.mxu0 %v1013
      %1043 = vmatprep.subr.mxu0 0.0
      %1044 = vmatpush1.msra.mxu0 %v1012
      %1045 = vmatprep.subr.mxu0 0.0
      %1046 = vmatpush1.msra.mxu0 %v1011
      %1047 = vmatprep.subr.mxu0 0.0
      %1048 = vmatpush1.msra.mxu0 %v1010
      %1049 = vmatprep.subr.mxu0 0.0
      %1050 = vmatpush1.msra.mxu0 %v1009
      %1051 = vmatprep.subr.mxu0 0.0
      %1052 = vmatpush1.msra.mxu0 %v1008
      %1053 = vmatprep.subr.mxu0 0.0
      %1054 = vmatpush1.msra.mxu0 %v1007
      %1055 = vmatprep.subr.mxu0 0.0
      %1056 = vmatpush2.msra.mxu0 0.0
      %1057 = vmatprep.subr.mxu0 0.0
      %1058 = vmatpush2.msra.mxu0 0.0
      %1059 = vmatprep.subr.mxu0 0.0
      %1060 = vmatpush2.msra.mxu0 0.0
      %1061 = vmatprep.subr.mxu0 0.0
      %1062 = vmatpush2.msra.mxu0 0.0
      %1063 = vmatprep.subr.mxu0 0.0
      %1064 = vmatpush2.msra.mxu0 0.0
      %1065 = vmatprep.subr.mxu0 0.0
      %1066 = vmatpush2.msra.mxu0 0.0
      %1067 = vmatprep.subr.mxu0 0.0
      %1068 = vmatpush2.msra.mxu0 0.0
      %1069 = vmatprep.subr.mxu0 0.0
      %1070 = vmatpush2.msra.mxu0 0.0
      %1071 = vmatprep.subr.mxu0 0.0
      %1072 = vmatpush2.msra.mxu0 0.0
      %1073 = vmatprep.subr.mxu0 0.0
      %1074 = vmatpush2.msra.mxu0 0.0
      %1075 = vmatprep.subr.mxu0 0.0
      %1076 = vmatpush2.msra.mxu0 0.0
      %1077 = vmatprep.subr.mxu0 0.0
      %1078 = vmatpush2.msra.mxu0 0.0
      %1079 = vmatprep.subr.mxu0 0.0
      %1080 = vmatpush2.msra.mxu0 0.0
      %1081 = vmatprep.subr.mxu0 0.0
      %1082 = vmatpush2.msra.mxu0 0.0
      %1083 = vmatprep.subr.mxu0 0.0
      %1084 = vmatpush2.msra.mxu0 0.0
      %1085 = vmatprep.subr.mxu0 0.0
      %1086 = vmatpush2.msra.mxu0 0.0
      %1087 = vmatprep.mubr.f32.mxu0 0.0
      %1088 = vmatmul.mubr.f32.gmra.mxu0 %v996
      %v1089 = vpop.f32.mrf.mxu0
      %v1090 = vadd.f32 0.0, %v1089
      %v1091 = vpop.f32.mrf.mxu0
      %1092 = vmatprep.mubr.f32.mxu0 0.0
      %1093 = vmatmul.mubr.f32.gmra.mxu0 %v997
      %v1094 = vpop.f32.mrf.mxu0
      %v1095 = vadd.f32 0.0, %v1094
      %v1096 = vpop.f32.mrf.mxu0
      %1097 = vmatprep.mubr.f32.mxu0 0.0
      %1098 = vmatmul.mubr.f32.gmra.mxu0 %v998
      %v1099 = vpop.f32.mrf.mxu0
      %v1100 = vadd.f32 0.0, %v1099
      %v1101 = vpop.f32.mrf.mxu0
      %1102 = vmatprep.mubr.f32.mxu0 0.0
      %1103 = vmatmul.mubr.f32.gmra.mxu0 %v999
      %v1104 = vpop.f32.mrf.mxu0
      %v1105 = vadd.f32 0.0, %v1104
      %v1106 = vpop.f32.mrf.mxu0
      %1107 = vmatprep.mubr.f32.mxu0 0.0
      %1108 = vmatmul.mubr.f32.gmra.mxu0 %v1000
      %v1109 = vpop.f32.mrf.mxu0
      %v1110 = vadd.f32 0.0, %v1109
      %v1111 = vpop.f32.mrf.mxu0
      %1112 = vmatprep.mubr.f32.mxu0 0.0
      %1113 = vmatmul.mubr.f32.gmra.mxu0 %v1001
      %v1114 = vpop.f32.mrf.mxu0
      %v1115 = vadd.f32 0.0, %v1114
      %v1116 = vpop.f32.mrf.mxu0
      %1117 = vmatprep.mubr.f32.mxu0 0.0
      %1118 = vmatmul.mubr.f32.gmra.mxu0 %v1002
      %v1119 = vpop.f32.mrf.mxu0
      %v1120 = vadd.f32 0.0, %v1119
      %v1121 = vpop.f32.mrf.mxu0
      %1122 = vmatprep.mubr.f32.mxu0 0.0
      %1123 = vmatmul.mubr.f32.gmra.mxu0 %v1003
      %v1124 = vpop.f32.mrf.mxu0
      %v1125 = vadd.f32 0.0, %v1124
      %v1126 = vpop.f32.mrf.mxu0
      %1127 = vmatprep.mubr.f32.mxu0 0.0
      %1128 = vmatmul.mubr.f32.gmra.mxu0 %v1004
      %v1129 = vpop.f32.mrf.mxu0
      %v1130 = vadd.f32 0.0, %v1129
      %v1131 = vpop.f32.mrf.mxu0
      %1132 = vmatprep.mubr.f32.mxu0 0.0
      %1133 = vmatmul.mubr.f32.gmra.mxu0 %v1005
      %v1134 = vpop.f32.mrf.mxu0
      %v1135 = vadd.f32 0.0, %v1134
      %v1136 = vpop.f32.mrf.mxu0
      %1137 = vdwg.mxu0
      %v1138 = vadd.f32 %v948, %v1090
      %v1139 = vadd.f32 %v953, %v1095
      %v1140 = vadd.f32 %v958, %v1100
      %v1141 = vadd.f32 %v963, %v1105
      %v1142 = vadd.f32 %v968, %v1110
      %v1143 = vadd.f32 %v973, %v1115
      %v1144 = vadd.f32 %v978, %v1120
      %v1145 = vadd.f32 %v983, %v1125
      %v1146 = vadd.f32 %v988, %v1130
      %v1147 = vadd.f32 %v993, %v1135
      %v1148 = vld [vmem:[#allocation2 + $0xa] sm:$0xff]
      %v1149 = vld [vmem:[#allocation2 + $0x12] sm:$0xff]
      %v1150 = vld [vmem:[#allocation2 + $0x1a] sm:$0xff]
      %v1151 = vld [vmem:[#allocation2 + $0x22] sm:$0xff]
      %v1152 = vld [vmem:[#allocation2 + $0x2a] sm:$0xff]
      %v1153 = vld [vmem:[#allocation2 + $0x32] sm:$0xff]
      %v1154 = vld [vmem:[#allocation2 + $0x3a] sm:$0xff]
      %v1155 = vld [vmem:[#allocation2 + $0x42] sm:$0xff]
      %v1156 = vld [vmem:[#allocation2 + $0x4a] sm:$0xff]
      %v1157 = vld [vmem:[#allocation2 + $0x52] sm:$0xff]
      %s1158 = scalar_lea.vmem %s2, 384
      %v1159 = vld [vmem:[%s1158] sm:$0xff]
      %v1160 = vld [vmem:[%s1158 + $0x8] sm:$0xff]
      %v1161 = vld [vmem:[%s1158 + $0x10] sm:$0xff]
      %v1162 = vld [vmem:[%s1158 + $0x18] sm:$0xff]
      %v1163 = vld [vmem:[%s1158 + $0x20] sm:$0xff]
      %v1164 = vld [vmem:[%s1158 + $0x28] sm:$0xff]
      %v1165 = vld [vmem:[%s1158 + $0x30] sm:$0xff]
      %v1166 = vld [vmem:[%s1158 + $0x38] sm:$0xff]
      %v1167 = vld [vmem:[%s1158 + $0x40] sm:$0xff]
      %v1168 = vld [vmem:[%s1158 + $0x48] sm:$0xff]
      %v1169 = vld [vmem:[%s1158 + $0x50] sm:$0xff]
      %v1170 = vld [vmem:[%s1158 + $0x58] sm:$0xff]
      %v1171 = vld [vmem:[%s1158 + $0x60] sm:$0xff]
      %v1172 = vld [vmem:[%s1158 + $0x68] sm:$0xff]
      %v1173 = vld [vmem:[%s1158 + $0x70] sm:$0xff]
      %v1174 = vld [vmem:[%s1158 + $0x78] sm:$0xff]
      %1175 = vmatprep.subr.mxu0 0.0
      %1176 = vmatpush1.msra.mxu0 %v1174
      %1177 = vmatprep.subr.mxu0 0.0
      %1178 = vmatpush1.msra.mxu0 %v1173
      %1179 = vmatprep.subr.mxu0 0.0
      %1180 = vmatpush1.msra.mxu0 %v1172
      %1181 = vmatprep.subr.mxu0 0.0
      %1182 = vmatpush1.msra.mxu0 %v1171
      %1183 = vmatprep.subr.mxu0 0.0
      %1184 = vmatpush1.msra.mxu0 %v1170
      %1185 = vmatprep.subr.mxu0 0.0
      %1186 = vmatpush1.msra.mxu0 %v1169
      %1187 = vmatprep.subr.mxu0 0.0
      %1188 = vmatpush1.msra.mxu0 %v1168
      %1189 = vmatprep.subr.mxu0 0.0
      %1190 = vmatpush1.msra.mxu0 %v1167
      %1191 = vmatprep.subr.mxu0 0.0
      %1192 = vmatpush1.msra.mxu0 %v1166
      %1193 = vmatprep.subr.mxu0 0.0
      %1194 = vmatpush1.msra.mxu0 %v1165
      %1195 = vmatprep.subr.mxu0 0.0
      %1196 = vmatpush1.msra.mxu0 %v1164
      %1197 = vmatprep.subr.mxu0 0.0
      %1198 = vmatpush1.msra.mxu0 %v1163
      %1199 = vmatprep.subr.mxu0 0.0
      %1200 = vmatpush1.msra.mxu0 %v1162
      %1201 = vmatprep.subr.mxu0 0.0
      %1202 = vmatpush1.msra.mxu0 %v1161
      %1203 = vmatprep.subr.mxu0 0.0
      %1204 = vmatpush1.msra.mxu0 %v1160
      %1205 = vmatprep.subr.mxu0 0.0
      %1206 = vmatpush1.msra.mxu0 %v1159
      %1207 = vmatprep.subr.mxu0 0.0
      %1208 = vmatpush2.msra.mxu0 0.0
      %1209 = vmatprep.subr.mxu0 0.0
      %1210 = vmatpush2.msra.mxu0 0.0
      %1211 = vmatprep.subr.mxu0 0.0
      %1212 = vmatpush2.msra.mxu0 0.0
      %1213 = vmatprep.subr.mxu0 0.0
      %1214 = vmatpush2.msra.mxu0 0.0
      %1215 = vmatprep.subr.mxu0 0.0
      %1216 = vmatpush2.msra.mxu0 0.0
      %1217 = vmatprep.subr.mxu0 0.0
      %1218 = vmatpush2.msra.mxu0 0.0
      %1219 = vmatprep.subr.mxu0 0.0
      %1220 = vmatpush2.msra.mxu0 0.0
      %1221 = vmatprep.subr.mxu0 0.0
      %1222 = vmatpush2.msra.mxu0 0.0
      %1223 = vmatprep.subr.mxu0 0.0
      %1224 = vmatpush2.msra.mxu0 0.0
      %1225 = vmatprep.subr.mxu0 0.0
      %1226 = vmatpush2.msra.mxu0 0.0
      %1227 = vmatprep.subr.mxu0 0.0
      %1228 = vmatpush2.msra.mxu0 0.0
      %1229 = vmatprep.subr.mxu0 0.0
      %1230 = vmatpush2.msra.mxu0 0.0
      %1231 = vmatprep.subr.mxu0 0.0
      %1232 = vmatpush2.msra.mxu0 0.0
      %1233 = vmatprep.subr.mxu0 0.0
      %1234 = vmatpush2.msra.mxu0 0.0
      %1235 = vmatprep.subr.mxu0 0.0
      %1236 = vmatpush2.msra.mxu0 0.0
      %1237 = vmatprep.subr.mxu0 0.0
      %1238 = vmatpush2.msra.mxu0 0.0
      %1239 = vmatprep.mubr.f32.mxu0 0.0
      %1240 = vmatmul.mubr.f32.gmra.mxu0 %v1148
      %v1241 = vpop.f32.mrf.mxu0
      %v1242 = vadd.f32 0.0, %v1241
      %v1243 = vpop.f32.mrf.mxu0
      %1244 = vmatprep.mubr.f32.mxu0 0.0
      %1245 = vmatmul.mubr.f32.gmra.mxu0 %v1149
      %v1246 = vpop.f32.mrf.mxu0
      %v1247 = vadd.f32 0.0, %v1246
      %v1248 = vpop.f32.mrf.mxu0
      %1249 = vmatprep.mubr.f32.mxu0 0.0
      %1250 = vmatmul.mubr.f32.gmra.mxu0 %v1150
      %v1251 = vpop.f32.mrf.mxu0
      %v1252 = vadd.f32 0.0, %v1251
      %v1253 = vpop.f32.mrf.mxu0
      %1254 = vmatprep.mubr.f32.mxu0 0.0
      %1255 = vmatmul.mubr.f32.gmra.mxu0 %v1151
      %v1256 = vpop.f32.mrf.mxu0
      %v1257 = vadd.f32 0.0, %v1256
      %v1258 = vpop.f32.mrf.mxu0
      %1259 = vmatprep.mubr.f32.mxu0 0.0
      %1260 = vmatmul.mubr.f32.gmra.mxu0 %v1152
      %v1261 = vpop.f32.mrf.mxu0
      %v1262 = vadd.f32 0.0, %v1261
      %v1263 = vpop.f32.mrf.mxu0
      %1264 = vmatprep.mubr.f32.mxu0 0.0
      %1265 = vmatmul.mubr.f32.gmra.mxu0 %v1153
      %v1266 = vpop.f32.mrf.mxu0
      %v1267 = vadd.f32 0.0, %v1266
      %v1268 = vpop.f32.mrf.mxu0
      %1269 = vmatprep.mubr.f32.mxu0 0.0
      %1270 = vmatmul.mubr.f32.gmra.mxu0 %v1154
      %v1271 = vpop.f32.mrf.mxu0
      %v1272 = vadd.f32 0.0, %v1271
      %v1273 = vpop.f32.mrf.mxu0
      %1274 = vmatprep.mubr.f32.mxu0 0.0
      %1275 = vmatmul.mubr.f32.gmra.mxu0 %v1155
      %v1276 = vpop.f32.mrf.mxu0
      %v1277 = vadd.f32 0.0, %v1276
      %v1278 = vpop.f32.mrf.mxu0
      %1279 = vmatprep.mubr.f32.mxu0 0.0
      %1280 = vmatmul.mubr.f32.gmra.mxu0 %v1156
      %v1281 = vpop.f32.mrf.mxu0
      %v1282 = vadd.f32 0.0, %v1281
      %v1283 = vpop.f32.mrf.mxu0
      %1284 = vmatprep.mubr.f32.mxu0 0.0
      %1285 = vmatmul.mubr.f32.gmra.mxu0 %v1157
      %v1286 = vpop.f32.mrf.mxu0
      %v1287 = vadd.f32 0.0, %v1286
      %v1288 = vpop.f32.mrf.mxu0
      %1289 = vdwg.mxu0
      %v1290 = vadd.f32 %v1138, %v1242
      %v1291 = vadd.f32 %v1139, %v1247
      %v1292 = vadd.f32 %v1140, %v1252
      %v1293 = vadd.f32 %v1141, %v1257
      %v1294 = vadd.f32 %v1142, %v1262
      %v1295 = vadd.f32 %v1143, %v1267
      %v1296 = vadd.f32 %v1144, %v1272
      %v1297 = vadd.f32 %v1145, %v1277
      %v1298 = vadd.f32 %v1146, %v1282
      %v1299 = vadd.f32 %v1147, %v1287
      %v1300 = vld [vmem:[#allocation2 + $0xb] sm:$0xff]
      %v1301 = vld [vmem:[#allocation2 + $0x13] sm:$0xff]
      %v1302 = vld [vmem:[#allocation2 + $0x1b] sm:$0xff]
      %v1303 = vld [vmem:[#allocation2 + $0x23] sm:$0xff]
      %v1304 = vld [vmem:[#allocation2 + $0x2b] sm:$0xff]
      %v1305 = vld [vmem:[#allocation2 + $0x33] sm:$0xff]
      %v1306 = vld [vmem:[#allocation2 + $0x3b] sm:$0xff]
      %v1307 = vld [vmem:[#allocation2 + $0x43] sm:$0xff]
      %v1308 = vld [vmem:[#allocation2 + $0x4b] sm:$0xff]
      %v1309 = vld [vmem:[#allocation2 + $0x53] sm:$0xff]
      %s1310 = scalar_lea.vmem %s2, 512
      %v1311 = vld [vmem:[%s1310] sm:$0xff]
      %v1312 = vld [vmem:[%s1310 + $0x8] sm:$0xff]
      %v1313 = vld [vmem:[%s1310 + $0x10] sm:$0xff]
      %v1314 = vld [vmem:[%s1310 + $0x18] sm:$0xff]
      %v1315 = vld [vmem:[%s1310 + $0x20] sm:$0xff]
      %v1316 = vld [vmem:[%s1310 + $0x28] sm:$0xff]
      %v1317 = vld [vmem:[%s1310 + $0x30] sm:$0xff]
      %v1318 = vld [vmem:[%s1310 + $0x38] sm:$0xff]
      %v1319 = vld [vmem:[%s1310 + $0x40] sm:$0xff]
      %v1320 = vld [vmem:[%s1310 + $0x48] sm:$0xff]
      %v1321 = vld [vmem:[%s1310 + $0x50] sm:$0xff]
      %v1322 = vld [vmem:[%s1310 + $0x58] sm:$0xff]
      %v1323 = vld [vmem:[%s1310 + $0x60] sm:$0xff]
      %v1324 = vld [vmem:[%s1310 + $0x68] sm:$0xff]
      %v1325 = vld [vmem:[%s1310 + $0x70] sm:$0xff]
      %v1326 = vld [vmem:[%s1310 + $0x78] sm:$0xff]
      %1327 = vmatprep.subr.mxu0 0.0
      %1328 = vmatpush1.msra.mxu0 %v1326
      %1329 = vmatprep.subr.mxu0 0.0
      %1330 = vmatpush1.msra.mxu0 %v1325
      %1331 = vmatprep.subr.mxu0 0.0
      %1332 = vmatpush1.msra.mxu0 %v1324
      %1333 = vmatprep.subr.mxu0 0.0
      %1334 = vmatpush1.msra.mxu0 %v1323
      %1335 = vmatprep.subr.mxu0 0.0
      %1336 = vmatpush1.msra.mxu0 %v1322
      %1337 = vmatprep.subr.mxu0 0.0
      %1338 = vmatpush1.msra.mxu0 %v1321
      %1339 = vmatprep.subr.mxu0 0.0
      %1340 = vmatpush1.msra.mxu0 %v1320
      %1341 = vmatprep.subr.mxu0 0.0
      %1342 = vmatpush1.msra.mxu0 %v1319
      %1343 = vmatprep.subr.mxu0 0.0
      %1344 = vmatpush1.msra.mxu0 %v1318
      %1345 = vmatprep.subr.mxu0 0.0
      %1346 = vmatpush1.msra.mxu0 %v1317
      %1347 = vmatprep.subr.mxu0 0.0
      %1348 = vmatpush1.msra.mxu0 %v1316
      %1349 = vmatprep.subr.mxu0 0.0
      %1350 = vmatpush1.msra.mxu0 %v1315
      %1351 = vmatprep.subr.mxu0 0.0
      %1352 = vmatpush1.msra.mxu0 %v1314
      %1353 = vmatprep.subr.mxu0 0.0
      %1354 = vmatpush1.msra.mxu0 %v1313
      %1355 = vmatprep.subr.mxu0 0.0
      %1356 = vmatpush1.msra.mxu0 %v1312
      %1357 = vmatprep.subr.mxu0 0.0
      %1358 = vmatpush1.msra.mxu0 %v1311
      %1359 = vmatprep.subr.mxu0 0.0
      %1360 = vmatpush2.msra.mxu0 0.0
      %1361 = vmatprep.subr.mxu0 0.0
      %1362 = vmatpush2.msra.mxu0 0.0
      %1363 = vmatprep.subr.mxu0 0.0
      %1364 = vmatpush2.msra.mxu0 0.0
      %1365 = vmatprep.subr.mxu0 0.0
      %1366 = vmatpush2.msra.mxu0 0.0
      %1367 = vmatprep.subr.mxu0 0.0
      %1368 = vmatpush2.msra.mxu0 0.0
      %1369 = vmatprep.subr.mxu0 0.0
      %1370 = vmatpush2.msra.mxu0 0.0
      %1371 = vmatprep.subr.mxu0 0.0
      %1372 = vmatpush2.msra.mxu0 0.0
      %1373 = vmatprep.subr.mxu0 0.0
      %1374 = vmatpush2.msra.mxu0 0.0
      %1375 = vmatprep.subr.mxu0 0.0
      %1376 = vmatpush2.msra.mxu0 0.0
      %1377 = vmatprep.subr.mxu0 0.0
      %1378 = vmatpush2.msra.mxu0 0.0
      %1379 = vmatprep.subr.mxu0 0.0
      %1380 = vmatpush2.msra.mxu0 0.0
      %1381 = vmatprep.subr.mxu0 0.0
      %1382 = vmatpush2.msra.mxu0 0.0
      %1383 = vmatprep.subr.mxu0 0.0
      %1384 = vmatpush2.msra.mxu0 0.0
      %1385 = vmatprep.subr.mxu0 0.0
      %1386 = vmatpush2.msra.mxu0 0.0
      %1387 = vmatprep.subr.mxu0 0.0
      %1388 = vmatpush2.msra.mxu0 0.0
      %1389 = vmatprep.subr.mxu0 0.0
      %1390 = vmatpush2.msra.mxu0 0.0
      %1391 = vmatprep.mubr.f32.mxu0 0.0
      %1392 = vmatmul.mubr.f32.gmra.mxu0 %v1300
      %v1393 = vpop.f32.mrf.mxu0
      %v1394 = vadd.f32 0.0, %v1393
      %v1395 = vpop.f32.mrf.mxu0
      %1396 = vmatprep.mubr.f32.mxu0 0.0
      %1397 = vmatmul.mubr.f32.gmra.mxu0 %v1301
      %v1398 = vpop.f32.mrf.mxu0
      %v1399 = vadd.f32 0.0, %v1398
      %v1400 = vpop.f32.mrf.mxu0
      %1401 = vmatprep.mubr.f32.mxu0 0.0
      %1402 = vmatmul.mubr.f32.gmra.mxu0 %v1302
      %v1403 = vpop.f32.mrf.mxu0
      %v1404 = vadd.f32 0.0, %v1403
      %v1405 = vpop.f32.mrf.mxu0
      %1406 = vmatprep.mubr.f32.mxu0 0.0
      %1407 = vmatmul.mubr.f32.gmra.mxu0 %v1303
      %v1408 = vpop.f32.mrf.mxu0
      %v1409 = vadd.f32 0.0, %v1408
      %v1410 = vpop.f32.mrf.mxu0
      %1411 = vmatprep.mubr.f32.mxu0 0.0
      %1412 = vmatmul.mubr.f32.gmra.mxu0 %v1304
      %v1413 = vpop.f32.mrf.mxu0
      %v1414 = vadd.f32 0.0, %v1413
      %v1415 = vpop.f32.mrf.mxu0
      %1416 = vmatprep.mubr.f32.mxu0 0.0
      %1417 = vmatmul.mubr.f32.gmra.mxu0 %v1305
      %v1418 = vpop.f32.mrf.mxu0
      %v1419 = vadd.f32 0.0, %v1418
      %v1420 = vpop.f32.mrf.mxu0
      %1421 = vmatprep.mubr.f32.mxu0 0.0
      %1422 = vmatmul.mubr.f32.gmra.mxu0 %v1306
      %v1423 = vpop.f32.mrf.mxu0
      %v1424 = vadd.f32 0.0, %v1423
      %v1425 = vpop.f32.mrf.mxu0
      %1426 = vmatprep.mubr.f32.mxu0 0.0
      %1427 = vmatmul.mubr.f32.gmra.mxu0 %v1307
      %v1428 = vpop.f32.mrf.mxu0
      %v1429 = vadd.f32 0.0, %v1428
      %v1430 = vpop.f32.mrf.mxu0
      %1431 = vmatprep.mubr.f32.mxu0 0.0
      %1432 = vmatmul.mubr.f32.gmra.mxu0 %v1308
      %v1433 = vpop.f32.mrf.mxu0
      %v1434 = vadd.f32 0.0, %v1433
      %v1435 = vpop.f32.mrf.mxu0
      %1436 = vmatprep.mubr.f32.mxu0 0.0
      %1437 = vmatmul.mubr.f32.gmra.mxu0 %v1309
      %v1438 = vpop.f32.mrf.mxu0
      %v1439 = vadd.f32 0.0, %v1438
      %v1440 = vpop.f32.mrf.mxu0
      %1441 = vdwg.mxu0
      %v1442 = vadd.f32 %v1290, %v1394
      %v1443 = vadd.f32 %v1291, %v1399
      %v1444 = vadd.f32 %v1292, %v1404
      %v1445 = vadd.f32 %v1293, %v1409
      %v1446 = vadd.f32 %v1294, %v1414
      %v1447 = vadd.f32 %v1295, %v1419
      %v1448 = vadd.f32 %v1296, %v1424
      %v1449 = vadd.f32 %v1297, %v1429
      %v1450 = vadd.f32 %v1298, %v1434
      %v1451 = vadd.f32 %v1299, %v1439
      %v1452 = vld [vmem:[#allocation2 + $0xc] sm:$0xff]
      %v1453 = vld [vmem:[#allocation2 + $0x14] sm:$0xff]
      %v1454 = vld [vmem:[#allocation2 + $0x1c] sm:$0xff]
      %v1455 = vld [vmem:[#allocation2 + $0x24] sm:$0xff]
      %v1456 = vld [vmem:[#allocation2 + $0x2c] sm:$0xff]
      %v1457 = vld [vmem:[#allocation2 + $0x34] sm:$0xff]
      %v1458 = vld [vmem:[#allocation2 + $0x3c] sm:$0xff]
      %v1459 = vld [vmem:[#allocation2 + $0x44] sm:$0xff]
      %v1460 = vld [vmem:[#allocation2 + $0x4c] sm:$0xff]
      %v1461 = vld [vmem:[#allocation2 + $0x54] sm:$0xff]
      %s1462 = scalar_lea.vmem %s2, 640
      %v1463 = vld [vmem:[%s1462] sm:$0xff]
      %v1464 = vld [vmem:[%s1462 + $0x8] sm:$0xff]
      %v1465 = vld [vmem:[%s1462 + $0x10] sm:$0xff]
      %v1466 = vld [vmem:[%s1462 + $0x18] sm:$0xff]
      %v1467 = vld [vmem:[%s1462 + $0x20] sm:$0xff]
      %v1468 = vld [vmem:[%s1462 + $0x28] sm:$0xff]
      %v1469 = vld [vmem:[%s1462 + $0x30] sm:$0xff]
      %v1470 = vld [vmem:[%s1462 + $0x38] sm:$0xff]
      %v1471 = vld [vmem:[%s1462 + $0x40] sm:$0xff]
      %v1472 = vld [vmem:[%s1462 + $0x48] sm:$0xff]
      %v1473 = vld [vmem:[%s1462 + $0x50] sm:$0xff]
      %v1474 = vld [vmem:[%s1462 + $0x58] sm:$0xff]
      %v1475 = vld [vmem:[%s1462 + $0x60] sm:$0xff]
      %v1476 = vld [vmem:[%s1462 + $0x68] sm:$0xff]
      %v1477 = vld [vmem:[%s1462 + $0x70] sm:$0xff]
      %v1478 = vld [vmem:[%s1462 + $0x78] sm:$0xff]
      %1479 = vmatprep.subr.mxu0 0.0
      %1480 = vmatpush1.msra.mxu0 %v1478
      %1481 = vmatprep.subr.mxu0 0.0
      %1482 = vmatpush1.msra.mxu0 %v1477
      %1483 = vmatprep.subr.mxu0 0.0
      %1484 = vmatpush1.msra.mxu0 %v1476
      %1485 = vmatprep.subr.mxu0 0.0
      %1486 = vmatpush1.msra.mxu0 %v1475
      %1487 = vmatprep.subr.mxu0 0.0
      %1488 = vmatpush1.msra.mxu0 %v1474
      %1489 = vmatprep.subr.mxu0 0.0
      %1490 = vmatpush1.msra.mxu0 %v1473
      %1491 = vmatprep.subr.mxu0 0.0
      %1492 = vmatpush1.msra.mxu0 %v1472
      %1493 = vmatprep.subr.mxu0 0.0
      %1494 = vmatpush1.msra.mxu0 %v1471
      %1495 = vmatprep.subr.mxu0 0.0
      %1496 = vmatpush1.msra.mxu0 %v1470
      %1497 = vmatprep.subr.mxu0 0.0
      %1498 = vmatpush1.msra.mxu0 %v1469
      %1499 = vmatprep.subr.mxu0 0.0
      %1500 = vmatpush1.msra.mxu0 %v1468
      %1501 = vmatprep.subr.mxu0 0.0
      %1502 = vmatpush1.msra.mxu0 %v1467
      %1503 = vmatprep.subr.mxu0 0.0
      %1504 = vmatpush1.msra.mxu0 %v1466
      %1505 = vmatprep.subr.mxu0 0.0
      %1506 = vmatpush1.msra.mxu0 %v1465
      %1507 = vmatprep.subr.mxu0 0.0
      %1508 = vmatpush1.msra.mxu0 %v1464
      %1509 = vmatprep.subr.mxu0 0.0
      %1510 = vmatpush1.msra.mxu0 %v1463
      %1511 = vmatprep.subr.mxu0 0.0
      %1512 = vmatpush2.msra.mxu0 0.0
      %1513 = vmatprep.subr.mxu0 0.0
      %1514 = vmatpush2.msra.mxu0 0.0
      %1515 = vmatprep.subr.mxu0 0.0
      %1516 = vmatpush2.msra.mxu0 0.0
      %1517 = vmatprep.subr.mxu0 0.0
      %1518 = vmatpush2.msra.mxu0 0.0
      %1519 = vmatprep.subr.mxu0 0.0
      %1520 = vmatpush2.msra.mxu0 0.0
      %1521 = vmatprep.subr.mxu0 0.0
      %1522 = vmatpush2.msra.mxu0 0.0
      %1523 = vmatprep.subr.mxu0 0.0
      %1524 = vmatpush2.msra.mxu0 0.0
      %1525 = vmatprep.subr.mxu0 0.0
      %1526 = vmatpush2.msra.mxu0 0.0
      %1527 = vmatprep.subr.mxu0 0.0
      %1528 = vmatpush2.msra.mxu0 0.0
      %1529 = vmatprep.subr.mxu0 0.0
      %1530 = vmatpush2.msra.mxu0 0.0
      %1531 = vmatprep.subr.mxu0 0.0
      %1532 = vmatpush2.msra.mxu0 0.0
      %1533 = vmatprep.subr.mxu0 0.0
      %1534 = vmatpush2.msra.mxu0 0.0
      %1535 = vmatprep.subr.mxu0 0.0
      %1536 = vmatpush2.msra.mxu0 0.0
      %1537 = vmatprep.subr.mxu0 0.0
      %1538 = vmatpush2.msra.mxu0 0.0
      %1539 = vmatprep.subr.mxu0 0.0
      %1540 = vmatpush2.msra.mxu0 0.0
      %1541 = vmatprep.subr.mxu0 0.0
      %1542 = vmatpush2.msra.mxu0 0.0
      %1543 = vmatprep.mubr.f32.mxu0 0.0
      %1544 = vmatmul.mubr.f32.gmra.mxu0 %v1452
      %v1545 = vpop.f32.mrf.mxu0
      %v1546 = vadd.f32 0.0, %v1545
      %v1547 = vpop.f32.mrf.mxu0
      %1548 = vmatprep.mubr.f32.mxu0 0.0
      %1549 = vmatmul.mubr.f32.gmra.mxu0 %v1453
      %v1550 = vpop.f32.mrf.mxu0
      %v1551 = vadd.f32 0.0, %v1550
      %v1552 = vpop.f32.mrf.mxu0
      %1553 = vmatprep.mubr.f32.mxu0 0.0
      %1554 = vmatmul.mubr.f32.gmra.mxu0 %v1454
      %v1555 = vpop.f32.mrf.mxu0
      %v1556 = vadd.f32 0.0, %v1555
      %v1557 = vpop.f32.mrf.mxu0
      %1558 = vmatprep.mubr.f32.mxu0 0.0
      %1559 = vmatmul.mubr.f32.gmra.mxu0 %v1455
      %v1560 = vpop.f32.mrf.mxu0
      %v1561 = vadd.f32 0.0, %v1560
      %v1562 = vpop.f32.mrf.mxu0
      %1563 = vmatprep.mubr.f32.mxu0 0.0
      %1564 = vmatmul.mubr.f32.gmra.mxu0 %v1456
      %v1565 = vpop.f32.mrf.mxu0
      %v1566 = vadd.f32 0.0, %v1565
      %v1567 = vpop.f32.mrf.mxu0
      %1568 = vmatprep.mubr.f32.mxu0 0.0
      %1569 = vmatmul.mubr.f32.gmra.mxu0 %v1457
      %v1570 = vpop.f32.mrf.mxu0
      %v1571 = vadd.f32 0.0, %v1570
      %v1572 = vpop.f32.mrf.mxu0
      %1573 = vmatprep.mubr.f32.mxu0 0.0
      %1574 = vmatmul.mubr.f32.gmra.mxu0 %v1458
      %v1575 = vpop.f32.mrf.mxu0
      %v1576 = vadd.f32 0.0, %v1575
      %v1577 = vpop.f32.mrf.mxu0
      %1578 = vmatprep.mubr.f32.mxu0 0.0
      %1579 = vmatmul.mubr.f32.gmra.mxu0 %v1459
      %v1580 = vpop.f32.mrf.mxu0
      %v1581 = vadd.f32 0.0, %v1580
      %v1582 = vpop.f32.mrf.mxu0
      %1583 = vmatprep.mubr.f32.mxu0 0.0
      %1584 = vmatmul.mubr.f32.gmra.mxu0 %v1460
      %v1585 = vpop.f32.mrf.mxu0
      %v1586 = vadd.f32 0.0, %v1585
      %v1587 = vpop.f32.mrf.mxu0
      %1588 = vmatprep.mubr.f32.mxu0 0.0
      %1589 = vmatmul.mubr.f32.gmra.mxu0 %v1461
      %v1590 = vpop.f32.mrf.mxu0
      %v1591 = vadd.f32 0.0, %v1590
      %v1592 = vpop.f32.mrf.mxu0
      %1593 = vdwg.mxu0
      %v1594 = vadd.f32 %v1442, %v1546
      %v1595 = vadd.f32 %v1443, %v1551
      %v1596 = vadd.f32 %v1444, %v1556
      %v1597 = vadd.f32 %v1445, %v1561
      %v1598 = vadd.f32 %v1446, %v1566
      %v1599 = vadd.f32 %v1447, %v1571
      %v1600 = vadd.f32 %v1448, %v1576
      %v1601 = vadd.f32 %v1449, %v1581
      %v1602 = vadd.f32 %v1450, %v1586
      %v1603 = vadd.f32 %v1451, %v1591
      %v1604 = vld [vmem:[#allocation2 + $0x14] sm:$0xff]
      %v1605 = vld [vmem:[#allocation2 + $0x1c] sm:$0xff]
      %v1606 = vld [vmem:[#allocation2 + $0x24] sm:$0xff]
      %v1607 = vld [vmem:[#allocation2 + $0x2c] sm:$0xff]
      %v1608 = vld [vmem:[#allocation2 + $0x34] sm:$0xff]
      %v1609 = vld [vmem:[#allocation2 + $0x3c] sm:$0xff]
      %v1610 = vld [vmem:[#allocation2 + $0x44] sm:$0xff]
      %v1611 = vld [vmem:[#allocation2 + $0x4c] sm:$0xff]
      %v1612 = vld [vmem:[#allocation2 + $0x54] sm:$0xff]
      %v1613 = vld [vmem:[#allocation2 + $0x5c] sm:$0xff]
      %s1614 = scalar_lea.vmem %s2, 768
      %v1615 = vld [vmem:[%s1614] sm:$0xff]
      %v1616 = vld [vmem:[%s1614 + $0x8] sm:$0xff]
      %v1617 = vld [vmem:[%s1614 + $0x10] sm:$0xff]
      %v1618 = vld [vmem:[%s1614 + $0x18] sm:$0xff]
      %v1619 = vld [vmem:[%s1614 + $0x20] sm:$0xff]
      %v1620 = vld [vmem:[%s1614 + $0x28] sm:$0xff]
      %v1621 = vld [vmem:[%s1614 + $0x30] sm:$0xff]
      %v1622 = vld [vmem:[%s1614 + $0x38] sm:$0xff]
      %v1623 = vld [vmem:[%s1614 + $0x40] sm:$0xff]
      %v1624 = vld [vmem:[%s1614 + $0x48] sm:$0xff]
      %v1625 = vld [vmem:[%s1614 + $0x50] sm:$0xff]
      %v1626 = vld [vmem:[%s1614 + $0x58] sm:$0xff]
      %v1627 = vld [vmem:[%s1614 + $0x60] sm:$0xff]
      %v1628 = vld [vmem:[%s1614 + $0x68] sm:$0xff]
      %v1629 = vld [vmem:[%s1614 + $0x70] sm:$0xff]
      %v1630 = vld [vmem:[%s1614 + $0x78] sm:$0xff]
      %1631 = vmatprep.subr.mxu0 0.0
      %1632 = vmatpush1.msra.mxu0 %v1630
      %1633 = vmatprep.subr.mxu0 0.0
      %1634 = vmatpush1.msra.mxu0 %v1629
      %1635 = vmatprep.subr.mxu0 0.0
      %1636 = vmatpush1.msra.mxu0 %v1628
      %1637 = vmatprep.subr.mxu0 0.0
      %1638 = vmatpush1.msra.mxu0 %v1627
      %1639 = vmatprep.subr.mxu0 0.0
      %1640 = vmatpush1.msra.mxu0 %v1626
      %1641 = vmatprep.subr.mxu0 0.0
      %1642 = vmatpush1.msra.mxu0 %v1625
      %1643 = vmatprep.subr.mxu0 0.0
      %1644 = vmatpush1.msra.mxu0 %v1624
      %1645 = vmatprep.subr.mxu0 0.0
      %1646 = vmatpush1.msra.mxu0 %v1623
      %1647 = vmatprep.subr.mxu0 0.0
      %1648 = vmatpush1.msra.mxu0 %v1622
      %1649 = vmatprep.subr.mxu0 0.0
      %1650 = vmatpush1.msra.mxu0 %v1621
      %1651 = vmatprep.subr.mxu0 0.0
      %1652 = vmatpush1.msra.mxu0 %v1620
      %1653 = vmatprep.subr.mxu0 0.0
      %1654 = vmatpush1.msra.mxu0 %v1619
      %1655 = vmatprep.subr.mxu0 0.0
      %1656 = vmatpush1.msra.mxu0 %v1618
      %1657 = vmatprep.subr.mxu0 0.0
      %1658 = vmatpush1.msra.mxu0 %v1617
      %1659 = vmatprep.subr.mxu0 0.0
      %1660 = vmatpush1.msra.mxu0 %v1616
      %1661 = vmatprep.subr.mxu0 0.0
      %1662 = vmatpush1.msra.mxu0 %v1615
      %1663 = vmatprep.subr.mxu0 0.0
      %1664 = vmatpush2.msra.mxu0 0.0
      %1665 = vmatprep.subr.mxu0 0.0
      %1666 = vmatpush2.msra.mxu0 0.0
      %1667 = vmatprep.subr.mxu0 0.0
      %1668 = vmatpush2.msra.mxu0 0.0
      %1669 = vmatprep.subr.mxu0 0.0
      %1670 = vmatpush2.msra.mxu0 0.0
      %1671 = vmatprep.subr.mxu0 0.0
      %1672 = vmatpush2.msra.mxu0 0.0
      %1673 = vmatprep.subr.mxu0 0.0
      %1674 = vmatpush2.msra.mxu0 0.0
      %1675 = vmatprep.subr.mxu0 0.0
      %1676 = vmatpush2.msra.mxu0 0.0
      %1677 = vmatprep.subr.mxu0 0.0
      %1678 = vmatpush2.msra.mxu0 0.0
      %1679 = vmatprep.subr.mxu0 0.0
      %1680 = vmatpush2.msra.mxu0 0.0
      %1681 = vmatprep.subr.mxu0 0.0
      %1682 = vmatpush2.msra.mxu0 0.0
      %1683 = vmatprep.subr.mxu0 0.0
      %1684 = vmatpush2.msra.mxu0 0.0
      %1685 = vmatprep.subr.mxu0 0.0
      %1686 = vmatpush2.msra.mxu0 0.0
      %1687 = vmatprep.subr.mxu0 0.0
      %1688 = vmatpush2.msra.mxu0 0.0
      %1689 = vmatprep.subr.mxu0 0.0
      %1690 = vmatpush2.msra.mxu0 0.0
      %1691 = vmatprep.subr.mxu0 0.0
      %1692 = vmatpush2.msra.mxu0 0.0
      %1693 = vmatprep.subr.mxu0 0.0
      %1694 = vmatpush2.msra.mxu0 0.0
      %1695 = vmatprep.mubr.f32.mxu0 0.0
      %1696 = vmatmul.mubr.f32.gmra.mxu0 %v1604
      %v1697 = vpop.f32.mrf.mxu0
      %v1698 = vadd.f32 0.0, %v1697
      %v1699 = vpop.f32.mrf.mxu0
      %1700 = vmatprep.mubr.f32.mxu0 0.0
      %1701 = vmatmul.mubr.f32.gmra.mxu0 %v1605
      %v1702 = vpop.f32.mrf.mxu0
      %v1703 = vadd.f32 0.0, %v1702
      %v1704 = vpop.f32.mrf.mxu0
      %1705 = vmatprep.mubr.f32.mxu0 0.0
      %1706 = vmatmul.mubr.f32.gmra.mxu0 %v1606
      %v1707 = vpop.f32.mrf.mxu0
      %v1708 = vadd.f32 0.0, %v1707
      %v1709 = vpop.f32.mrf.mxu0
      %1710 = vmatprep.mubr.f32.mxu0 0.0
      %1711 = vmatmul.mubr.f32.gmra.mxu0 %v1607
      %v1712 = vpop.f32.mrf.mxu0
      %v1713 = vadd.f32 0.0, %v1712
      %v1714 = vpop.f32.mrf.mxu0
      %1715 = vmatprep.mubr.f32.mxu0 0.0
      %1716 = vmatmul.mubr.f32.gmra.mxu0 %v1608
      %v1717 = vpop.f32.mrf.mxu0
      %v1718 = vadd.f32 0.0, %v1717
      %v1719 = vpop.f32.mrf.mxu0
      %1720 = vmatprep.mubr.f32.mxu0 0.0
      %1721 = vmatmul.mubr.f32.gmra.mxu0 %v1609
      %v1722 = vpop.f32.mrf.mxu0
      %v1723 = vadd.f32 0.0, %v1722
      %v1724 = vpop.f32.mrf.mxu0
      %1725 = vmatprep.mubr.f32.mxu0 0.0
      %1726 = vmatmul.mubr.f32.gmra.mxu0 %v1610
      %v1727 = vpop.f32.mrf.mxu0
      %v1728 = vadd.f32 0.0, %v1727
      %v1729 = vpop.f32.mrf.mxu0
      %1730 = vmatprep.mubr.f32.mxu0 0.0
      %1731 = vmatmul.mubr.f32.gmra.mxu0 %v1611
      %v1732 = vpop.f32.mrf.mxu0
      %v1733 = vadd.f32 0.0, %v1732
      %v1734 = vpop.f32.mrf.mxu0
      %1735 = vmatprep.mubr.f32.mxu0 0.0
      %1736 = vmatmul.mubr.f32.gmra.mxu0 %v1612
      %v1737 = vpop.f32.mrf.mxu0
      %v1738 = vadd.f32 0.0, %v1737
      %v1739 = vpop.f32.mrf.mxu0
      %1740 = vmatprep.mubr.f32.mxu0 0.0
      %1741 = vmatmul.mubr.f32.gmra.mxu0 %v1613
      %v1742 = vpop.f32.mrf.mxu0
      %v1743 = vadd.f32 0.0, %v1742
      %v1744 = vpop.f32.mrf.mxu0
      %1745 = vdwg.mxu0
      %v1746 = vadd.f32 %v1594, %v1698
      %v1747 = vadd.f32 %v1595, %v1703
      %v1748 = vadd.f32 %v1596, %v1708
      %v1749 = vadd.f32 %v1597, %v1713
      %v1750 = vadd.f32 %v1598, %v1718
      %v1751 = vadd.f32 %v1599, %v1723
      %v1752 = vadd.f32 %v1600, %v1728
      %v1753 = vadd.f32 %v1601, %v1733
      %v1754 = vadd.f32 %v1602, %v1738
      %v1755 = vadd.f32 %v1603, %v1743
      %v1756 = vld [vmem:[#allocation2 + $0x15] sm:$0xff]
      %v1757 = vld [vmem:[#allocation2 + $0x1d] sm:$0xff]
      %v1758 = vld [vmem:[#allocation2 + $0x25] sm:$0xff]
      %v1759 = vld [vmem:[#allocation2 + $0x2d] sm:$0xff]
      %v1760 = vld [vmem:[#allocation2 + $0x35] sm:$0xff]
      %v1761 = vld [vmem:[#allocation2 + $0x3d] sm:$0xff]
      %v1762 = vld [vmem:[#allocation2 + $0x45] sm:$0xff]
      %v1763 = vld [vmem:[#allocation2 + $0x4d] sm:$0xff]
      %v1764 = vld [vmem:[#allocation2 + $0x55] sm:$0xff]
      %v1765 = vld [vmem:[#allocation2 + $0x5d] sm:$0xff]
      %s1766 = scalar_lea.vmem %s2, 896
      %v1767 = vld [vmem:[%s1766] sm:$0xff]
      %v1768 = vld [vmem:[%s1766 + $0x8] sm:$0xff]
      %v1769 = vld [vmem:[%s1766 + $0x10] sm:$0xff]
      %v1770 = vld [vmem:[%s1766 + $0x18] sm:$0xff]
      %v1771 = vld [vmem:[%s1766 + $0x20] sm:$0xff]
      %v1772 = vld [vmem:[%s1766 + $0x28] sm:$0xff]
      %v1773 = vld [vmem:[%s1766 + $0x30] sm:$0xff]
      %v1774 = vld [vmem:[%s1766 + $0x38] sm:$0xff]
      %v1775 = vld [vmem:[%s1766 + $0x40] sm:$0xff]
      %v1776 = vld [vmem:[%s1766 + $0x48] sm:$0xff]
      %v1777 = vld [vmem:[%s1766 + $0x50] sm:$0xff]
      %v1778 = vld [vmem:[%s1766 + $0x58] sm:$0xff]
      %v1779 = vld [vmem:[%s1766 + $0x60] sm:$0xff]
      %v1780 = vld [vmem:[%s1766 + $0x68] sm:$0xff]
      %v1781 = vld [vmem:[%s1766 + $0x70] sm:$0xff]
      %v1782 = vld [vmem:[%s1766 + $0x78] sm:$0xff]
      %1783 = vmatprep.subr.mxu0 0.0
      %1784 = vmatpush1.msra.mxu0 %v1782
      %1785 = vmatprep.subr.mxu0 0.0
      %1786 = vmatpush1.msra.mxu0 %v1781
      %1787 = vmatprep.subr.mxu0 0.0
      %1788 = vmatpush1.msra.mxu0 %v1780
      %1789 = vmatprep.subr.mxu0 0.0
      %1790 = vmatpush1.msra.mxu0 %v1779
      %1791 = vmatprep.subr.mxu0 0.0
      %1792 = vmatpush1.msra.mxu0 %v1778
      %1793 = vmatprep.subr.mxu0 0.0
      %1794 = vmatpush1.msra.mxu0 %v1777
      %1795 = vmatprep.subr.mxu0 0.0
      %1796 = vmatpush1.msra.mxu0 %v1776
      %1797 = vmatprep.subr.mxu0 0.0
      %1798 = vmatpush1.msra.mxu0 %v1775
      %1799 = vmatprep.subr.mxu0 0.0
      %1800 = vmatpush1.msra.mxu0 %v1774
      %1801 = vmatprep.subr.mxu0 0.0
      %1802 = vmatpush1.msra.mxu0 %v1773
      %1803 = vmatprep.subr.mxu0 0.0
      %1804 = vmatpush1.msra.mxu0 %v1772
      %1805 = vmatprep.subr.mxu0 0.0
      %1806 = vmatpush1.msra.mxu0 %v1771
      %1807 = vmatprep.subr.mxu0 0.0
      %1808 = vmatpush1.msra.mxu0 %v1770
      %1809 = vmatprep.subr.mxu0 0.0
      %1810 = vmatpush1.msra.mxu0 %v1769
      %1811 = vmatprep.subr.mxu0 0.0
      %1812 = vmatpush1.msra.mxu0 %v1768
      %1813 = vmatprep.subr.mxu0 0.0
      %1814 = vmatpush1.msra.mxu0 %v1767
      %1815 = vmatprep.subr.mxu0 0.0
      %1816 = vmatpush2.msra.mxu0 0.0
      %1817 = vmatprep.subr.mxu0 0.0
      %1818 = vmatpush2.msra.mxu0 0.0
      %1819 = vmatprep.subr.mxu0 0.0
      %1820 = vmatpush2.msra.mxu0 0.0
      %1821 = vmatprep.subr.mxu0 0.0
      %1822 = vmatpush2.msra.mxu0 0.0
      %1823 = vmatprep.subr.mxu0 0.0
      %1824 = vmatpush2.msra.mxu0 0.0
      %1825 = vmatprep.subr.mxu0 0.0
      %1826 = vmatpush2.msra.mxu0 0.0
      %1827 = vmatprep.subr.mxu0 0.0
      %1828 = vmatpush2.msra.mxu0 0.0
      %1829 = vmatprep.subr.mxu0 0.0
      %1830 = vmatpush2.msra.mxu0 0.0
      %1831 = vmatprep.subr.mxu0 0.0
      %1832 = vmatpush2.msra.mxu0 0.0
      %1833 = vmatprep.subr.mxu0 0.0
      %1834 = vmatpush2.msra.mxu0 0.0
      %1835 = vmatprep.subr.mxu0 0.0
      %1836 = vmatpush2.msra.mxu0 0.0
      %1837 = vmatprep.subr.mxu0 0.0
      %1838 = vmatpush2.msra.mxu0 0.0
      %1839 = vmatprep.subr.mxu0 0.0
      %1840 = vmatpush2.msra.mxu0 0.0
      %1841 = vmatprep.subr.mxu0 0.0
      %1842 = vmatpush2.msra.mxu0 0.0
      %1843 = vmatprep.subr.mxu0 0.0
      %1844 = vmatpush2.msra.mxu0 0.0
      %1845 = vmatprep.subr.mxu0 0.0
      %1846 = vmatpush2.msra.mxu0 0.0
      %1847 = vmatprep.mubr.f32.mxu0 0.0
      %1848 = vmatmul.mubr.f32.gmra.mxu0 %v1756
      %v1849 = vpop.f32.mrf.mxu0
      %v1850 = vadd.f32 0.0, %v1849
      %v1851 = vpop.f32.mrf.mxu0
      %1852 = vmatprep.mubr.f32.mxu0 0.0
      %1853 = vmatmul.mubr.f32.gmra.mxu0 %v1757
      %v1854 = vpop.f32.mrf.mxu0
      %v1855 = vadd.f32 0.0, %v1854
      %v1856 = vpop.f32.mrf.mxu0
      %1857 = vmatprep.mubr.f32.mxu0 0.0
      %1858 = vmatmul.mubr.f32.gmra.mxu0 %v1758
      %v1859 = vpop.f32.mrf.mxu0
      %v1860 = vadd.f32 0.0, %v1859
      %v1861 = vpop.f32.mrf.mxu0
      %1862 = vmatprep.mubr.f32.mxu0 0.0
      %1863 = vmatmul.mubr.f32.gmra.mxu0 %v1759
      %v1864 = vpop.f32.mrf.mxu0
      %v1865 = vadd.f32 0.0, %v1864
      %v1866 = vpop.f32.mrf.mxu0
      %1867 = vmatprep.mubr.f32.mxu0 0.0
      %1868 = vmatmul.mubr.f32.gmra.mxu0 %v1760
      %v1869 = vpop.f32.mrf.mxu0
      %v1870 = vadd.f32 0.0, %v1869
      %v1871 = vpop.f32.mrf.mxu0
      %1872 = vmatprep.mubr.f32.mxu0 0.0
      %1873 = vmatmul.mubr.f32.gmra.mxu0 %v1761
      %v1874 = vpop.f32.mrf.mxu0
      %v1875 = vadd.f32 0.0, %v1874
      %v1876 = vpop.f32.mrf.mxu0
      %1877 = vmatprep.mubr.f32.mxu0 0.0
      %1878 = vmatmul.mubr.f32.gmra.mxu0 %v1762
      %v1879 = vpop.f32.mrf.mxu0
      %v1880 = vadd.f32 0.0, %v1879
      %v1881 = vpop.f32.mrf.mxu0
      %1882 = vmatprep.mubr.f32.mxu0 0.0
      %1883 = vmatmul.mubr.f32.gmra.mxu0 %v1763
      %v1884 = vpop.f32.mrf.mxu0
      %v1885 = vadd.f32 0.0, %v1884
      %v1886 = vpop.f32.mrf.mxu0
      %1887 = vmatprep.mubr.f32.mxu0 0.0
      %1888 = vmatmul.mubr.f32.gmra.mxu0 %v1764
      %v1889 = vpop.f32.mrf.mxu0
      %v1890 = vadd.f32 0.0, %v1889
      %v1891 = vpop.f32.mrf.mxu0
      %1892 = vmatprep.mubr.f32.mxu0 0.0
      %1893 = vmatmul.mubr.f32.gmra.mxu0 %v1765
      %v1894 = vpop.f32.mrf.mxu0
      %v1895 = vadd.f32 0.0, %v1894
      %v1896 = vpop.f32.mrf.mxu0
      %1897 = vdwg.mxu0
      %v1898 = vadd.f32 %v1746, %v1850
      %v1899 = vadd.f32 %v1747, %v1855
      %v1900 = vadd.f32 %v1748, %v1860
      %v1901 = vadd.f32 %v1749, %v1865
      %v1902 = vadd.f32 %v1750, %v1870
      %v1903 = vadd.f32 %v1751, %v1875
      %v1904 = vadd.f32 %v1752, %v1880
      %v1905 = vadd.f32 %v1753, %v1885
      %v1906 = vadd.f32 %v1754, %v1890
      %v1907 = vadd.f32 %v1755, %v1895
      %v1908 = vld [vmem:[#allocation2 + $0x16] sm:$0xff]
      %v1909 = vld [vmem:[#allocation2 + $0x1e] sm:$0xff]
      %v1910 = vld [vmem:[#allocation2 + $0x26] sm:$0xff]
      %v1911 = vld [vmem:[#allocation2 + $0x2e] sm:$0xff]
      %v1912 = vld [vmem:[#allocation2 + $0x36] sm:$0xff]
      %v1913 = vld [vmem:[#allocation2 + $0x3e] sm:$0xff]
      %v1914 = vld [vmem:[#allocation2 + $0x46] sm:$0xff]
      %v1915 = vld [vmem:[#allocation2 + $0x4e] sm:$0xff]
      %v1916 = vld [vmem:[#allocation2 + $0x56] sm:$0xff]
      %v1917 = vld [vmem:[#allocation2 + $0x5e] sm:$0xff]
      %s1918 = scalar_lea.vmem %s2, 1024
      %v1919 = vld [vmem:[%s1918] sm:$0xff]
      %v1920 = vld [vmem:[%s1918 + $0x8] sm:$0xff]
      %v1921 = vld [vmem:[%s1918 + $0x10] sm:$0xff]
      %v1922 = vld [vmem:[%s1918 + $0x18] sm:$0xff]
      %v1923 = vld [vmem:[%s1918 + $0x20] sm:$0xff]
      %v1924 = vld [vmem:[%s1918 + $0x28] sm:$0xff]
      %v1925 = vld [vmem:[%s1918 + $0x30] sm:$0xff]
      %v1926 = vld [vmem:[%s1918 + $0x38] sm:$0xff]
      %v1927 = vld [vmem:[%s1918 + $0x40] sm:$0xff]
      %v1928 = vld [vmem:[%s1918 + $0x48] sm:$0xff]
      %v1929 = vld [vmem:[%s1918 + $0x50] sm:$0xff]
      %v1930 = vld [vmem:[%s1918 + $0x58] sm:$0xff]
      %v1931 = vld [vmem:[%s1918 + $0x60] sm:$0xff]
      %v1932 = vld [vmem:[%s1918 + $0x68] sm:$0xff]
      %v1933 = vld [vmem:[%s1918 + $0x70] sm:$0xff]
      %v1934 = vld [vmem:[%s1918 + $0x78] sm:$0xff]
      %1935 = vmatprep.subr.mxu0 0.0
      %1936 = vmatpush1.msra.mxu0 %v1934
      %1937 = vmatprep.subr.mxu0 0.0
      %1938 = vmatpush1.msra.mxu0 %v1933
      %1939 = vmatprep.subr.mxu0 0.0
      %1940 = vmatpush1.msra.mxu0 %v1932
      %1941 = vmatprep.subr.mxu0 0.0
      %1942 = vmatpush1.msra.mxu0 %v1931
      %1943 = vmatprep.subr.mxu0 0.0
      %1944 = vmatpush1.msra.mxu0 %v1930
      %1945 = vmatprep.subr.mxu0 0.0
      %1946 = vmatpush1.msra.mxu0 %v1929
      %1947 = vmatprep.subr.mxu0 0.0
      %1948 = vmatpush1.msra.mxu0 %v1928
      %1949 = vmatprep.subr.mxu0 0.0
      %1950 = vmatpush1.msra.mxu0 %v1927
      %1951 = vmatprep.subr.mxu0 0.0
      %1952 = vmatpush1.msra.mxu0 %v1926
      %1953 = vmatprep.subr.mxu0 0.0
      %1954 = vmatpush1.msra.mxu0 %v1925
      %1955 = vmatprep.subr.mxu0 0.0
      %1956 = vmatpush1.msra.mxu0 %v1924
      %1957 = vmatprep.subr.mxu0 0.0
      %1958 = vmatpush1.msra.mxu0 %v1923
      %1959 = vmatprep.subr.mxu0 0.0
      %1960 = vmatpush1.msra.mxu0 %v1922
      %1961 = vmatprep.subr.mxu0 0.0
      %1962 = vmatpush1.msra.mxu0 %v1921
      %1963 = vmatprep.subr.mxu0 0.0
      %1964 = vmatpush1.msra.mxu0 %v1920
      %1965 = vmatprep.subr.mxu0 0.0
      %1966 = vmatpush1.msra.mxu0 %v1919
      %1967 = vmatprep.subr.mxu0 0.0
      %1968 = vmatpush2.msra.mxu0 0.0
      %1969 = vmatprep.subr.mxu0 0.0
      %1970 = vmatpush2.msra.mxu0 0.0
      %1971 = vmatprep.subr.mxu0 0.0
      %1972 = vmatpush2.msra.mxu0 0.0
      %1973 = vmatprep.subr.mxu0 0.0
      %1974 = vmatpush2.msra.mxu0 0.0
      %1975 = vmatprep.subr.mxu0 0.0
      %1976 = vmatpush2.msra.mxu0 0.0
      %1977 = vmatprep.subr.mxu0 0.0
      %1978 = vmatpush2.msra.mxu0 0.0
      %1979 = vmatprep.subr.mxu0 0.0
      %1980 = vmatpush2.msra.mxu0 0.0
      %1981 = vmatprep.subr.mxu0 0.0
      %1982 = vmatpush2.msra.mxu0 0.0
      %1983 = vmatprep.subr.mxu0 0.0
      %1984 = vmatpush2.msra.mxu0 0.0
      %1985 = vmatprep.subr.mxu0 0.0
      %1986 = vmatpush2.msra.mxu0 0.0
      %1987 = vmatprep.subr.mxu0 0.0
      %1988 = vmatpush2.msra.mxu0 0.0
      %1989 = vmatprep.subr.mxu0 0.0
      %1990 = vmatpush2.msra.mxu0 0.0
      %1991 = vmatprep.subr.mxu0 0.0
      %1992 = vmatpush2.msra.mxu0 0.0
      %1993 = vmatprep.subr.mxu0 0.0
      %1994 = vmatpush2.msra.mxu0 0.0
      %1995 = vmatprep.subr.mxu0 0.0
      %1996 = vmatpush2.msra.mxu0 0.0
      %1997 = vmatprep.subr.mxu0 0.0
      %1998 = vmatpush2.msra.mxu0 0.0
      %1999 = vmatprep.mubr.f32.mxu0 0.0
      %2000 = vmatmul.mubr.f32.gmra.mxu0 %v1908
      %v2001 = vpop.f32.mrf.mxu0
      %v2002 = vadd.f32 0.0, %v2001
      %v2003 = vpop.f32.mrf.mxu0
      %2004 = vmatprep.mubr.f32.mxu0 0.0
      %2005 = vmatmul.mubr.f32.gmra.mxu0 %v1909
      %v2006 = vpop.f32.mrf.mxu0
      %v2007 = vadd.f32 0.0, %v2006
      %v2008 = vpop.f32.mrf.mxu0
      %2009 = vmatprep.mubr.f32.mxu0 0.0
      %2010 = vmatmul.mubr.f32.gmra.mxu0 %v1910
      %v2011 = vpop.f32.mrf.mxu0
      %v2012 = vadd.f32 0.0, %v2011
      %v2013 = vpop.f32.mrf.mxu0
      %2014 = vmatprep.mubr.f32.mxu0 0.0
      %2015 = vmatmul.mubr.f32.gmra.mxu0 %v1911
      %v2016 = vpop.f32.mrf.mxu0
      %v2017 = vadd.f32 0.0, %v2016
      %v2018 = vpop.f32.mrf.mxu0
      %2019 = vmatprep.mubr.f32.mxu0 0.0
      %2020 = vmatmul.mubr.f32.gmra.mxu0 %v1912
      %v2021 = vpop.f32.mrf.mxu0
      %v2022 = vadd.f32 0.0, %v2021
      %v2023 = vpop.f32.mrf.mxu0
      %2024 = vmatprep.mubr.f32.mxu0 0.0
      %2025 = vmatmul.mubr.f32.gmra.mxu0 %v1913
      %v2026 = vpop.f32.mrf.mxu0
      %v2027 = vadd.f32 0.0, %v2026
      %v2028 = vpop.f32.mrf.mxu0
      %2029 = vmatprep.mubr.f32.mxu0 0.0
      %2030 = vmatmul.mubr.f32.gmra.mxu0 %v1914
      %v2031 = vpop.f32.mrf.mxu0
      %v2032 = vadd.f32 0.0, %v2031
      %v2033 = vpop.f32.mrf.mxu0
      %2034 = vmatprep.mubr.f32.mxu0 0.0
      %2035 = vmatmul.mubr.f32.gmra.mxu0 %v1915
      %v2036 = vpop.f32.mrf.mxu0
      %v2037 = vadd.f32 0.0, %v2036
      %v2038 = vpop.f32.mrf.mxu0
      %2039 = vmatprep.mubr.f32.mxu0 0.0
      %2040 = vmatmul.mubr.f32.gmra.mxu0 %v1916
      %v2041 = vpop.f32.mrf.mxu0
      %v2042 = vadd.f32 0.0, %v2041
      %v2043 = vpop.f32.mrf.mxu0
      %2044 = vmatprep.mubr.f32.mxu0 0.0
      %2045 = vmatmul.mubr.f32.gmra.mxu0 %v1917
      %v2046 = vpop.f32.mrf.mxu0
      %v2047 = vadd.f32 0.0, %v2046
      %v2048 = vpop.f32.mrf.mxu0
      %2049 = vdwg.mxu0
      %v2050 = vadd.f32 %v1898, %v2002
      %v2051 = vadd.f32 %v1899, %v2007
      %v2052 = vadd.f32 %v1900, %v2012
      %v2053 = vadd.f32 %v1901, %v2017
      %v2054 = vadd.f32 %v1902, %v2022
      %v2055 = vadd.f32 %v1903, %v2027
      %v2056 = vadd.f32 %v1904, %v2032
      %v2057 = vadd.f32 %v1905, %v2037
      %v2058 = vadd.f32 %v1906, %v2042
      %v2059 = vadd.f32 %v1907, %v2047
      %v2060 = vld [vmem:[%s3] sm:$0x1]
      %v2061 = vlaneseq
      %v2062 = vshrl.u32 %v2061, 7
      %v2063 = vsub.s32 0, %v2062
      %v2064 = vrot.slane %v2060, %v2063
      %v2065 = vadd.f32 %v2050, %v2064
      %v2066 = vadd.f32 %v2051, %v2064
      %v2067 = vadd.f32 %v2052, %v2064
      %v2068 = vadd.f32 %v2053, %v2064
      %v2069 = vadd.f32 %v2054, %v2064
      %v2070 = vadd.f32 %v2055, %v2064
      %v2071 = vadd.f32 %v2056, %v2064
      %v2072 = vadd.f32 %v2057, %v2064
      %v2073 = vadd.f32 %v2058, %v2064
      %v2074 = vadd.f32 %v2059, %v2064
      %vm2075 = vcmp.ge.f32.partialorder %v2065, 0.0
      %vm2076 = vcmp.ge.f32.partialorder %v2066, 0.0
      %vm2077 = vcmp.ge.f32.partialorder %v2067, 0.0
      %vm2078 = vcmp.ge.f32.partialorder %v2068, 0.0
      %vm2079 = vcmp.ge.f32.partialorder %v2069, 0.0
      %vm2080 = vcmp.ge.f32.partialorder %v2070, 0.0
      %vm2081 = vcmp.ge.f32.partialorder %v2071, 0.0
      %vm2082 = vcmp.ge.f32.partialorder %v2072, 0.0
      %vm2083 = vcmp.ge.f32.partialorder %v2073, 0.0
      %vm2084 = vcmp.ge.f32.partialorder %v2074, 0.0
      %v2085 = vld [vmem:[%s3 + $0x1] sm:$0x1]
      %v2086 = vlaneseq
      %v2087 = vshrl.u32 %v2086, 7
      %v2088 = vsub.s32 0, %v2087
      %v2089 = vrot.slane %v2085, %v2088
      %v2090 = vmul.f32 %v2089, %v2065
      %v2091 = vmul.f32 %v2089, %v2066
      %v2092 = vmul.f32 %v2089, %v2067
      %v2093 = vmul.f32 %v2089, %v2068
      %v2094 = vmul.f32 %v2089, %v2069
      %v2095 = vmul.f32 %v2089, %v2070
      %v2096 = vmul.f32 %v2089, %v2071
      %v2097 = vmul.f32 %v2089, %v2072
      %v2098 = vmul.f32 %v2089, %v2073
      %v2099 = vmul.f32 %v2089, %v2074
      %v2100 = vsel %vm2075, %v2065, %v2090
      %v2101 = vsel %vm2076, %v2066, %v2091
      %v2102 = vsel %vm2077, %v2067, %v2092
      %v2103 = vsel %vm2078, %v2068, %v2093
      %v2104 = vsel %vm2079, %v2069, %v2094
      %v2105 = vsel %vm2080, %v2070, %v2095
      %v2106 = vsel %vm2081, %v2071, %v2096
      %v2107 = vsel %vm2082, %v2072, %v2097
      %v2108 = vsel %vm2083, %v2073, %v2098
      %v2109 = vsel %vm2084, %v2074, %v2099
      %v2120 = vcombine.high %v2100, %v2100
      %v2122 = vunpack.c.l.s4 1983009808
      %v2123 = vunpack.c.0.s8 %v2122
      %v2124 = vlaneseq
      %v2125 = vshrl.u32 %v2124, 7
      %v2126 = vsub.s32 %v2123, %v2125
      %v2127 = vrot.slane %v2100, %v2126
      %v2129 = vunpack.c.l.s4 1983009808
      %v2130 = vunpack.c.0.s8 %v2129
      %v2131 = vlaneseq
      %v2132 = vshrl.u32 %v2131, 7
      %v2133 = vsub.s32 %v2130, %v2132
      %v2134 = vrot.slane %v2120, %v2133
      %v2135 = vcombine.high %v2127, %v2127
      %v2136 = vcombine.high %v2134, %v2134
      %v2137 = vcombine.high %v2101, %v2101
      %v2139 = vunpack.c.l.s4 1983009808
      %v2140 = vunpack.c.0.s8 %v2139
      %v2141 = vlaneseq
      %v2142 = vshrl.u32 %v2141, 7
      %v2143 = vsub.s32 %v2140, %v2142
      %v2144 = vrot.slane %v2101, %v2143
      %v2146 = vunpack.c.l.s4 1983009808
      %v2147 = vunpack.c.0.s8 %v2146
      %v2148 = vlaneseq
      %v2149 = vshrl.u32 %v2148, 7
      %v2150 = vsub.s32 %v2147, %v2149
      %v2151 = vrot.slane %v2137, %v2150
      %v2152 = vcombine.high %v2144, %v2144
      %v2153 = vcombine.high %v2151, %v2151
      %v2154 = vcombine.high %v2102, %v2102
      %v2156 = vunpack.c.l.s4 1983009808
      %v2157 = vunpack.c.0.s8 %v2156
      %v2158 = vlaneseq
      %v2159 = vshrl.u32 %v2158, 7
      %v2160 = vsub.s32 %v2157, %v2159
      %v2161 = vrot.slane %v2102, %v2160
      %v2163 = vunpack.c.l.s4 1983009808
      %v2164 = vunpack.c.0.s8 %v2163
      %v2165 = vlaneseq
      %v2166 = vshrl.u32 %v2165, 7
      %v2167 = vsub.s32 %v2164, %v2166
      %v2168 = vrot.slane %v2154, %v2167
      %v2169 = vcombine.high %v2168, %v2168
      %v2170 = vcombine.high %v2103, %v2103
      %v2172 = vunpack.c.l.s4 1983009808
      %v2173 = vunpack.c.0.s8 %v2172
      %v2174 = vlaneseq
      %v2175 = vshrl.u32 %v2174, 7
      %v2176 = vsub.s32 %v2173, %v2175
      %v2177 = vrot.slane %v2103, %v2176
      %v2179 = vunpack.c.l.s4 1983009808
      %v2180 = vunpack.c.0.s8 %v2179
      %v2181 = vlaneseq
      %v2182 = vshrl.u32 %v2181, 7
      %v2183 = vsub.s32 %v2180, %v2182
      %v2184 = vrot.slane %v2170, %v2183
      %v2185 = vcombine.high %v2177, %v2177
      %v2186 = vcombine.high %v2184, %v2184
      %v2187 = vcombine.high %v2104, %v2104
      %v2189 = vunpack.c.l.s4 1983009808
      %v2190 = vunpack.c.0.s8 %v2189
      %v2191 = vlaneseq
      %v2192 = vshrl.u32 %v2191, 7
      %v2193 = vsub.s32 %v2190, %v2192
      %v2194 = vrot.slane %v2104, %v2193
      %v2196 = vunpack.c.l.s4 1983009808
      %v2197 = vunpack.c.0.s8 %v2196
      %v2198 = vlaneseq
      %v2199 = vshrl.u32 %v2198, 7
      %v2200 = vsub.s32 %v2197, %v2199
      %v2201 = vrot.slane %v2187, %v2200
      %v2202 = vcombine.high %v2194, %v2194
      %v2203 = vcombine.high %v2105, %v2105
      %v2205 = vunpack.c.l.s4 1983009808
      %v2206 = vunpack.c.0.s8 %v2205
      %v2207 = vlaneseq
      %v2208 = vshrl.u32 %v2207, 7
      %v2209 = vsub.s32 %v2206, %v2208
      %v2210 = vrot.slane %v2105, %v2209
      %v2212 = vunpack.c.l.s4 1983009808
      %v2213 = vunpack.c.0.s8 %v2212
      %v2214 = vlaneseq
      %v2215 = vshrl.u32 %v2214, 7
      %v2216 = vsub.s32 %v2213, %v2215
      %v2217 = vrot.slane %v2203, %v2216
      %v2218 = vcombine.high %v2210, %v2210
      %v2219 = vcombine.high %v2217, %v2217
      %v2220 = vcombine.high %v2106, %v2106
      %v2222 = vunpack.c.l.s4 1983009808
      %v2223 = vunpack.c.0.s8 %v2222
      %v2224 = vlaneseq
      %v2225 = vshrl.u32 %v2224, 7
      %v2226 = vsub.s32 %v2223, %v2225
      %v2227 = vrot.slane %v2106, %v2226
      %v2229 = vunpack.c.l.s4 1983009808
      %v2230 = vunpack.c.0.s8 %v2229
      %v2231 = vlaneseq
      %v2232 = vshrl.u32 %v2231, 7
      %v2233 = vsub.s32 %v2230, %v2232
      %v2234 = vrot.slane %v2220, %v2233
      %v2235 = vcombine.high %v2227, %v2227
      %v2236 = vcombine.high %v2234, %v2234
      %v2237 = vcombine.high %v2107, %v2107
      %v2239 = vunpack.c.l.s4 1983009808
      %v2240 = vunpack.c.0.s8 %v2239
      %v2241 = vlaneseq
      %v2242 = vshrl.u32 %v2241, 7
      %v2243 = vsub.s32 %v2240, %v2242
      %v2244 = vrot.slane %v2107, %v2243
      %v2246 = vunpack.c.l.s4 1983009808
      %v2247 = vunpack.c.0.s8 %v2246
      %v2248 = vlaneseq
      %v2249 = vshrl.u32 %v2248, 7
      %v2250 = vsub.s32 %v2247, %v2249
      %v2251 = vrot.slane %v2237, %v2250
      %v2252 = vcombine.high %v2251, %v2251
      %v2253 = vcombine.high %v2108, %v2108
      %v2255 = vunpack.c.l.s4 1983009808
      %v2256 = vunpack.c.0.s8 %v2255
      %v2257 = vlaneseq
      %v2258 = vshrl.u32 %v2257, 7
      %v2259 = vsub.s32 %v2256, %v2258
      %v2260 = vrot.slane %v2108, %v2259
      %v2262 = vunpack.c.l.s4 1983009808
      %v2263 = vunpack.c.0.s8 %v2262
      %v2264 = vlaneseq
      %v2265 = vshrl.u32 %v2264, 7
      %v2266 = vsub.s32 %v2263, %v2265
      %v2267 = vrot.slane %v2253, %v2266
      %v2268 = vcombine.high %v2260, %v2260
      %v2269 = vcombine.high %v2267, %v2267
      %v2270 = vcombine.high %v2109, %v2109
      %v2272 = vunpack.c.l.s4 1983009808
      %v2273 = vunpack.c.0.s8 %v2272
      %v2274 = vlaneseq
      %v2275 = vshrl.u32 %v2274, 7
      %v2276 = vsub.s32 %v2273, %v2275
      %v2277 = vrot.slane %v2109, %v2276
      %v2279 = vunpack.c.l.s4 1983009808
      %v2280 = vunpack.c.0.s8 %v2279
      %v2281 = vlaneseq
      %v2282 = vshrl.u32 %v2281, 7
      %v2283 = vsub.s32 %v2280, %v2282
      %v2284 = vrot.slane %v2270, %v2283
      %v2285 = vcombine.high %v2277, %v2277
      %v2318 = vcombine.low %v2127, %v2135
      %v2319 = vcombine.low %v2134, %v2136
      %v2321 = vunpack.c.l.s4 1983009808
      %v2322 = vunpack.c.0.s8 %v2321
      %v2323 = vlaneseq
      %v2324 = vshrl.u32 %v2323, 7
      %v2325 = vsub.s32 %v2322, %v2324
      %v2326 = vrot.slane %v2318, %v2325
      %v2328 = vunpack.c.l.s4 1983009808
      %v2329 = vunpack.c.0.s8 %v2328
      %v2330 = vlaneseq
      %v2331 = vshrl.u32 %v2330, 7
      %v2332 = vsub.s32 %v2329, %v2331
      %v2333 = vrot.slane %v2319, %v2332
      %v2334 = vcombine.low %v2326, %v2333
      %v2335 = vcombine.low %v2152, %v2151
      %v2336 = vcombine.low %v2153, %v2161
      %v2338 = vunpack.c.l.s4 1983009808
      %v2339 = vunpack.c.0.s8 %v2338
      %v2340 = vlaneseq
      %v2341 = vshrl.u32 %v2340, 7
      %v2342 = vsub.s32 %v2339, %v2341
      %v2343 = vrot.slane %v2335, %v2342
      %v2345 = vunpack.c.l.s4 1983009808
      %v2346 = vunpack.c.0.s8 %v2345
      %v2347 = vlaneseq
      %v2348 = vshrl.u32 %v2347, 7
      %v2349 = vsub.s32 %v2346, %v2348
      %v2350 = vrot.slane %v2336, %v2349
      %v2351 = vcombine.low %v2343, %v2350
      %v2352 = vcombine.low %v2168, %v2169
      %v2353 = vcombine.low %v2177, %v2185
      %v2355 = vunpack.c.l.s4 1983009808
      %v2356 = vunpack.c.0.s8 %v2355
      %v2357 = vlaneseq
      %v2358 = vshrl.u32 %v2357, 7
      %v2359 = vsub.s32 %v2356, %v2358
      %v2360 = vrot.slane %v2352, %v2359
      %v2362 = vunpack.c.l.s4 1983009808
      %v2363 = vunpack.c.0.s8 %v2362
      %v2364 = vlaneseq
      %v2365 = vshrl.u32 %v2364, 7
      %v2366 = vsub.s32 %v2363, %v2365
      %v2367 = vrot.slane %v2353, %v2366
      %v2368 = vcombine.low %v2360, %v2367
      %v2369 = vcombine.low %v2186, %v2194
      %v2370 = vcombine.low %v2202, %v2201
      %v2372 = vunpack.c.l.s4 1983009808
      %v2373 = vunpack.c.0.s8 %v2372
      %v2374 = vlaneseq
      %v2375 = vshrl.u32 %v2374, 7
      %v2376 = vsub.s32 %v2373, %v2375
      %v2377 = vrot.slane %v2369, %v2376
      %v2379 = vunpack.c.l.s4 1983009808
      %v2380 = vunpack.c.0.s8 %v2379
      %v2381 = vlaneseq
      %v2382 = vshrl.u32 %v2381, 7
      %v2383 = vsub.s32 %v2380, %v2382
      %v2384 = vrot.slane %v2370, %v2383
      %v2385 = vcombine.low %v2377, %v2384
      %v2386 = vcombine.low %v2210, %v2218
      %v2387 = vcombine.low %v2217, %v2219
      %v2389 = vunpack.c.l.s4 1983009808
      %v2390 = vunpack.c.0.s8 %v2389
      %v2391 = vlaneseq
      %v2392 = vshrl.u32 %v2391, 7
      %v2393 = vsub.s32 %v2390, %v2392
      %v2394 = vrot.slane %v2386, %v2393
      %v2396 = vunpack.c.l.s4 1983009808
      %v2397 = vunpack.c.0.s8 %v2396
      %v2398 = vlaneseq
      %v2399 = vshrl.u32 %v2398, 7
      %v2400 = vsub.s32 %v2397, %v2399
      %v2401 = vrot.slane %v2387, %v2400
      %v2402 = vcombine.low %v2394, %v2401
      %v2403 = vcombine.low %v2235, %v2234
      %v2404 = vcombine.low %v2236, %v2244
      %v2406 = vunpack.c.l.s4 1983009808
      %v2407 = vunpack.c.0.s8 %v2406
      %v2408 = vlaneseq
      %v2409 = vshrl.u32 %v2408, 7
      %v2410 = vsub.s32 %v2407, %v2409
      %v2411 = vrot.slane %v2403, %v2410
      %v2413 = vunpack.c.l.s4 1983009808
      %v2414 = vunpack.c.0.s8 %v2413
      %v2415 = vlaneseq
      %v2416 = vshrl.u32 %v2415, 7
      %v2417 = vsub.s32 %v2414, %v2416
      %v2418 = vrot.slane %v2404, %v2417
      %v2419 = vcombine.low %v2411, %v2418
      %v2420 = vcombine.low %v2251, %v2252
      %v2421 = vcombine.low %v2260, %v2268
      %v2423 = vunpack.c.l.s4 1983009808
      %v2424 = vunpack.c.0.s8 %v2423
      %v2425 = vlaneseq
      %v2426 = vshrl.u32 %v2425, 7
      %v2427 = vsub.s32 %v2424, %v2426
      %v2428 = vrot.slane %v2420, %v2427
      %v2430 = vunpack.c.l.s4 1983009808
      %v2431 = vunpack.c.0.s8 %v2430
      %v2432 = vlaneseq
      %v2433 = vshrl.u32 %v2432, 7
      %v2434 = vsub.s32 %v2431, %v2433
      %v2435 = vrot.slane %v2421, %v2434
      %v2436 = vcombine.low %v2428, %v2435
      %v2437 = vcombine.low %v2269, %v2277
      %v2438 = vcombine.low %v2285, %v2284
      %v2440 = vunpack.c.l.s4 1983009808
      %v2441 = vunpack.c.0.s8 %v2440
      %v2442 = vlaneseq
      %v2443 = vshrl.u32 %v2442, 7
      %v2444 = vsub.s32 %v2441, %v2443
      %v2445 = vrot.slane %v2437, %v2444
      %v2447 = vunpack.c.l.s4 1983009808
      %v2448 = vunpack.c.0.s8 %v2447
      %v2449 = vlaneseq
      %v2450 = vshrl.u32 %v2449, 7
      %v2451 = vsub.s32 %v2448, %v2450
      %v2452 = vrot.slane %v2438, %v2451
      %v2453 = vcombine.low %v2445, %v2452
      %2462 = vst [vmem:[%s231] sm:$0xff] %v2334
      %2463 = vst [vmem:[%s231 + $0x8] sm:$0xff] %v2351
      %2464 = vst [vmem:[%s231 + $0x10] sm:$0xff] %v2368
      %2465 = vst [vmem:[%s231 + $0x18] sm:$0xff] %v2385
      %2466 = vst [vmem:[%s231 + $0x20] sm:$0xff] %v2402
      %2467 = vst [vmem:[%s231 + $0x28] sm:$0xff] %v2419
      %2468 = vst [vmem:[%s231 + $0x30] sm:$0xff] %v2436
      %2469 = vst [vmem:[%s231 + $0x38] sm:$0xff] %v2453
      %v2470 = vadd.f32 %v2334, %v2351
      %v2471 = vadd.f32 %v2470, %v2368
      %v2472 = vadd.f32 %v2471, %v2385
      %v2473 = vadd.f32 %v2472, %v2402
      %v2474 = vadd.f32 %v2473, %v2419
      %v2475 = vadd.f32 %v2474, %v2436
      %v2476 = vadd.f32 %v2475, %v2453
      %v2477 = vrot.slane %v2476, 4
      %v2478 = vadd.f32 %v2476, %v2477
      %v2479 = vrot.slane %v2478, 2
      %v2480 = vadd.f32 %v2478, %v2479
      %v2481 = vrot.slane %v2480, 1
      %v2482 = vadd.f32 %v2480, %v2481
      %v2483 = vmul.f32 %v2127, %v2127
      %v2484 = vmul.f32 %v2135, %v2135
      %v2485 = vmul.f32 %v2134, %v2134
      %v2486 = vmul.f32 %v2136, %v2136
      %v2487 = vmul.f32 %v2152, %v2152
      %v2488 = vmul.f32 %v2151, %v2151
      %v2489 = vmul.f32 %v2153, %v2153
      %v2490 = vmul.f32 %v2161, %v2161
      %v2491 = vmul.f32 %v2168, %v2168
      %v2492 = vmul.f32 %v2169, %v2169
      %v2493 = vmul.f32 %v2177, %v2177
      %v2494 = vmul.f32 %v2185, %v2185
      %v2495 = vmul.f32 %v2186, %v2186
      %v2496 = vmul.f32 %v2194, %v2194
      %v2497 = vmul.f32 %v2202, %v2202
      %v2498 = vmul.f32 %v2201, %v2201
      %v2499 = vmul.f32 %v2210, %v2210
      %v2500 = vmul.f32 %v2218, %v2218
      %v2501 = vmul.f32 %v2217, %v2217
      %v2502 = vmul.f32 %v2219, %v2219
      %v2503 = vmul.f32 %v2235, %v2235
      %v2504 = vmul.f32 %v2234, %v2234
      %v2505 = vmul.f32 %v2236, %v2236
      %v2506 = vmul.f32 %v2244, %v2244
      %v2507 = vmul.f32 %v2251, %v2251
      %v2508 = vmul.f32 %v2252, %v2252
      %v2509 = vmul.f32 %v2260, %v2260
      %v2510 = vmul.f32 %v2268, %v2268
      %v2511 = vmul.f32 %v2269, %v2269
      %v2512 = vmul.f32 %v2277, %v2277
      %v2513 = vmul.f32 %v2285, %v2285
      %v2514 = vmul.f32 %v2284, %v2284
      %v2547 = vcombine.low %v2483, %v2484
      %v2548 = vcombine.low %v2485, %v2486
      %v2550 = vunpack.c.l.s4 1983009808
      %v2551 = vunpack.c.0.s8 %v2550
      %v2552 = vlaneseq
      %v2553 = vshrl.u32 %v2552, 7
      %v2554 = vsub.s32 %v2551, %v2553
      %v2555 = vrot.slane %v2547, %v2554
      %v2557 = vunpack.c.l.s4 1983009808
      %v2558 = vunpack.c.0.s8 %v2557
      %v2559 = vlaneseq
      %v2560 = vshrl.u32 %v2559, 7
      %v2561 = vsub.s32 %v2558, %v2560
      %v2562 = vrot.slane %v2548, %v2561
      %v2563 = vcombine.low %v2555, %v2562
      %v2564 = vcombine.low %v2487, %v2488
      %v2565 = vcombine.low %v2489, %v2490
      %v2567 = vunpack.c.l.s4 1983009808
      %v2568 = vunpack.c.0.s8 %v2567
      %v2569 = vlaneseq
      %v2570 = vshrl.u32 %v2569, 7
      %v2571 = vsub.s32 %v2568, %v2570
      %v2572 = vrot.slane %v2564, %v2571
      %v2574 = vunpack.c.l.s4 1983009808
      %v2575 = vunpack.c.0.s8 %v2574
      %v2576 = vlaneseq
      %v2577 = vshrl.u32 %v2576, 7
      %v2578 = vsub.s32 %v2575, %v2577
      %v2579 = vrot.slane %v2565, %v2578
      %v2580 = vcombine.low %v2572, %v2579
      %v2581 = vcombine.low %v2491, %v2492
      %v2582 = vcombine.low %v2493, %v2494
      %v2584 = vunpack.c.l.s4 1983009808
      %v2585 = vunpack.c.0.s8 %v2584
      %v2586 = vlaneseq
      %v2587 = vshrl.u32 %v2586, 7
      %v2588 = vsub.s32 %v2585, %v2587
      %v2589 = vrot.slane %v2581, %v2588
      %v2591 = vunpack.c.l.s4 1983009808
      %v2592 = vunpack.c.0.s8 %v2591
      %v2593 = vlaneseq
      %v2594 = vshrl.u32 %v2593, 7
      %v2595 = vsub.s32 %v2592, %v2594
      %v2596 = vrot.slane %v2582, %v2595
      %v2597 = vcombine.low %v2589, %v2596
      %v2598 = vcombine.low %v2495, %v2496
      %v2599 = vcombine.low %v2497, %v2498
      %v2601 = vunpack.c.l.s4 1983009808
      %v2602 = vunpack.c.0.s8 %v2601
      %v2603 = vlaneseq
      %v2604 = vshrl.u32 %v2603, 7
      %v2605 = vsub.s32 %v2602, %v2604
      %v2606 = vrot.slane %v2598, %v2605
      %v2608 = vunpack.c.l.s4 1983009808
      %v2609 = vunpack.c.0.s8 %v2608
      %v2610 = vlaneseq
      %v2611 = vshrl.u32 %v2610, 7
      %v2612 = vsub.s32 %v2609, %v2611
      %v2613 = vrot.slane %v2599, %v2612
      %v2614 = vcombine.low %v2606, %v2613
      %v2615 = vcombine.low %v2499, %v2500
      %v2616 = vcombine.low %v2501, %v2502
      %v2618 = vunpack.c.l.s4 1983009808
      %v2619 = vunpack.c.0.s8 %v2618
      %v2620 = vlaneseq
      %v2621 = vshrl.u32 %v2620, 7
      %v2622 = vsub.s32 %v2619, %v2621
      %v2623 = vrot.slane %v2615, %v2622
      %v2625 = vunpack.c.l.s4 1983009808
      %v2626 = vunpack.c.0.s8 %v2625
      %v2627 = vlaneseq
      %v2628 = vshrl.u32 %v2627, 7
      %v2629 = vsub.s32 %v2626, %v2628
      %v2630 = vrot.slane %v2616, %v2629
      %v2631 = vcombine.low %v2623, %v2630
      %v2632 = vcombine.low %v2503, %v2504
      %v2633 = vcombine.low %v2505, %v2506
      %v2635 = vunpack.c.l.s4 1983009808
      %v2636 = vunpack.c.0.s8 %v2635
      %v2637 = vlaneseq
      %v2638 = vshrl.u32 %v2637, 7
      %v2639 = vsub.s32 %v2636, %v2638
      %v2640 = vrot.slane %v2632, %v2639
      %v2642 = vunpack.c.l.s4 1983009808
      %v2643 = vunpack.c.0.s8 %v2642
      %v2644 = vlaneseq
      %v2645 = vshrl.u32 %v2644, 7
      %v2646 = vsub.s32 %v2643, %v2645
      %v2647 = vrot.slane %v2633, %v2646
      %v2648 = vcombine.low %v2640, %v2647
      %v2649 = vcombine.low %v2507, %v2508
      %v2650 = vcombine.low %v2509, %v2510
      %v2652 = vunpack.c.l.s4 1983009808
      %v2653 = vunpack.c.0.s8 %v2652
      %v2654 = vlaneseq
      %v2655 = vshrl.u32 %v2654, 7
      %v2656 = vsub.s32 %v2653, %v2655
      %v2657 = vrot.slane %v2649, %v2656
      %v2659 = vunpack.c.l.s4 1983009808
      %v2660 = vunpack.c.0.s8 %v2659
      %v2661 = vlaneseq
      %v2662 = vshrl.u32 %v2661, 7
      %v2663 = vsub.s32 %v2660, %v2662
      %v2664 = vrot.slane %v2650, %v2663
      %v2665 = vcombine.low %v2657, %v2664
      %v2666 = vcombine.low %v2511, %v2512
      %v2667 = vcombine.low %v2513, %v2514
      %v2669 = vunpack.c.l.s4 1983009808
      %v2670 = vunpack.c.0.s8 %v2669
      %v2671 = vlaneseq
      %v2672 = vshrl.u32 %v2671, 7
      %v2673 = vsub.s32 %v2670, %v2672
      %v2674 = vrot.slane %v2666, %v2673
      %v2676 = vunpack.c.l.s4 1983009808
      %v2677 = vunpack.c.0.s8 %v2676
      %v2678 = vlaneseq
      %v2679 = vshrl.u32 %v2678, 7
      %v2680 = vsub.s32 %v2677, %v2679
      %v2681 = vrot.slane %v2667, %v2680
      %v2682 = vcombine.low %v2674, %v2681
      %v2691 = vadd.f32 %v2563, %v2580
      %v2692 = vadd.f32 %v2691, %v2597
      %v2693 = vadd.f32 %v2692, %v2614
      %v2694 = vadd.f32 %v2693, %v2631
      %v2695 = vadd.f32 %v2694, %v2648
      %v2696 = vadd.f32 %v2695, %v2665
      %v2697 = vadd.f32 %v2696, %v2682
      %v2698 = vrot.slane %v2697, 4
      %v2699 = vadd.f32 %v2697, %v2698
      %v2700 = vrot.slane %v2699, 2
      %v2701 = vadd.f32 %v2699, %v2700
      %v2702 = vrot.slane %v2701, 1
      %v2703 = vadd.f32 %v2701, %v2702
      %v2704 = vsel %vm294, %v2482, %v2703
      %vm2705 = vcmask 1041408
      %v2706 = vsel %vm2705, %v2704, 0.0
      %2707 = vst [vmem:[%s235] sm:$0xff] %v2706
      %p2708 = scmp.lt.s32.totalorder %s17, 1
      %s2709 = scalar_select %p2708, %s17, 1
      %s2710 = smul.addr %s2709, 8
      %s2711 = smul.addr %s2710, 8
      %s2712 = scalar_lea.vmem %s4, %s2711
      %p2713 = scmp.lt.s32.totalorder %s17, 1
      %s2714 = scalar_select %p2713, %s17, 1
      %s2715 = smul.addr %s2714, 8
      %s2716 = scalar_lea.vmem %s5, %s2715
      // Predicated region
      $region37: #{bottleneck_downsampling.5} parent=35 // pred_check
        %p2717 = pneg %p124
      $region38: #{bottleneck_downsampling.5} parent=35 // pred_check_branch
        %2719 = sbr.rel (%p2717) target = $region40
      $region39: #{bottleneck_downsampling.5} parent=35 // pred_region
        _
      $region40: #{bottleneck_downsampling.5} parent=35 // pred_fallthru
        _
      // Predicated region
      $region41: #{bottleneck_downsampling.5} parent=35 // pred_check
        %p2720 = pneg %p150
      $region42: #{bottleneck_downsampling.5} parent=35 // pred_check_branch
        %2722 = sbr.rel (%p2720) target = $region44
      $region43: #{bottleneck_downsampling.5} parent=35 // pred_region
        _
      $region44: #{bottleneck_downsampling.5} parent=35 // pred_fallthru
        _
    $region36: #{bottleneck_downsampling.5} parent=5 // pred_fallthru
      _
    %p2723 = scmp.le.s32.totalorder 2, %s12
    // Predicated region
    $region45: #{bottleneck_downsampling.5} parent=5 // pred_check
      %p2724 = pneg %p2723
    $region46: #{bottleneck_downsampling.5} parent=5 // pred_check_branch
      %2726 = sbr.rel (%p2724) target = $region48
    $region47: #{bottleneck_downsampling.5} parent=5 // pred_region
      %s2727 = ssub.s32 %s12, 2
      // Predicated region
      $region49: #{bottleneck_downsampling.5} parent=47 // pred_check
        %p2728 = pneg %p130
      $region50: #{bottleneck_downsampling.5} parent=47 // pred_check_branch
        %2730 = sbr.rel (%p2728) target = $region52
      $region51: #{bottleneck_downsampling.5} parent=47 // pred_region
        %p2731 = scmp.lt.s32.totalorder %s18, 1
        %s2732 = scalar_select %p2731, %s18, 1
        %s2733 = smul.addr %s2732, 8
        %s2734 = smul.addr %s2733, 8
        %s2735 = scalar_lea.vmem %s4, %s2734
      $region52: #{bottleneck_downsampling.5} parent=47 // pred_fallthru
        _
      // Predicated region
      $region53: #{bottleneck_downsampling.5} parent=47 // pred_check
        %p2736 = pneg %p156
      $region54: #{bottleneck_downsampling.5} parent=47 // pred_check_branch
        %2738 = sbr.rel (%p2736) target = $region56
      $region55: #{bottleneck_downsampling.5} parent=47 // pred_region
        %p2739 = scmp.lt.s32.totalorder %s18, 1
        %s2740 = scalar_select %p2739, %s18, 1
        %s2741 = smul.addr %s2740, 8
        %s2742 = scalar_lea.vmem %s5, %s2741
      $region56: #{bottleneck_downsampling.5} parent=47 // pred_fallthru
        _
    $region48: #{bottleneck_downsampling.5} parent=5 // pred_fallthru
      _
  $region6: #{bottleneck_downsampling.5} parent=0 // loop_footer
    %s16 = sadd.s32 1, %s12
  $region7: #{bottleneck_downsampling.5} parent=0 // loop_footer_branch
    %11 = sbr.rel target = $region3
  $region8: #{bottleneck_downsampling.5} parent=0 // loop_exit
    _

</llo_original>
